<compile_context>
chip_gen: v5e
topology: v5e:2x2
jax: 0.10.0
libtpu: 0.0.40
codegen_flags: <defaults>
</compile_context>

<pallas_src>
import functools

import numpy as np
import jax
import jax.numpy as jnp
from jax.experimental import pallas as pl
from jax.experimental.pallas import tpu as pltpu


# -----------------------------------------------------------------------------
# in-kernel helpers (no captured array constants — only traced values / scalars)
# -----------------------------------------------------------------------------
def _layer_norm(x, g, b, eps=1e-5):
    mu = jnp.mean(x, axis=-1, keepdims=True)
    var = jnp.mean(jnp.square(x - mu), axis=-1, keepdims=True)
    return (x - mu) * jax.lax.rsqrt(var + eps) * g + b


def _grouped_softmax(x, n_groups, group_size):
    """Softmax over contiguous lane groups with a *per-group* max (NaN safe)."""
    n = x.shape[0]
    x3 = x.reshape(n, n_groups, group_size)
    m = jnp.max(x3, axis=-1, keepdims=True)
    e = jnp.exp(x3 - m)
    d = jnp.sum(e, axis=-1, keepdims=True)
    return (e / d).reshape(n, n_groups * group_size)


# -----------------------------------------------------------------------------
# Fused encoder kernel: grid = (batch,).  All layers run in an in-kernel loop
# with every per-layer weight resident in VMEM.
# -----------------------------------------------------------------------------
def _fused_encoder_kernel(
    # per-sample activations (batch dim squeezed by BlockSpec)
    v_src_ref, a_src_ref, v_pos_ref, a_pos_ref, v_rp_ref, a_rp_ref,
    # constants passed as inputs (full blocks)
    rpspread_ref, sp_scale_ref, sp_one_ref, j_all_ref, p_sum_ref, blkmask_ref,
    # stacked per-layer weights (full (num_layers, ...) blocks, VMEM resident)
    wbig_ref, bbig_ref, wv_ref, bv_ref, wout_ref, bout_ref,
    g1_ref, b1_ref, wf1_ref, bf1_ref, wf2_ref, bf2_ref, g2_ref, b2_ref,
    # outputs
    vout_ref, slab_ref,
    *, n_heads, n_levels, n_points, num_layers,
):
    f32 = jnp.float32
    H, L, P = n_heads, n_levels, n_points
    HLP = H * L * P

    v_src = v_src_ref[...].astype(f32)          # (N, C)
    a_src = a_src_ref[...].astype(f32)
    v_pos = v_pos_ref[...].astype(f32)
    a_pos = a_pos_ref[...].astype(f32)

    # layer-invariant per-sample work, hoisted out of the layer loop:
    # reference-point contribution to both branches' sampling-location columns.
    rp_cat = jnp.concatenate(
        [v_rp_ref[...].astype(f32), a_rp_ref[...].astype(f32)], axis=-1)   # (N, 2L)
    rp_add = jnp.dot(rp_cat, rpspread_ref[...], preferred_element_type=f32)  # (N, 2*HLP)

    sp_scale = sp_scale_ref[...]                 # (HLP, P*H*sumL)   values = Ll
    sp_one = sp_one_ref[...]                     # (HLP, P*H*sumL)   values = 1
    j_all = j_all_ref[...]                       # (1,   P*H*sumL)   local token index
    p_sum = p_sum_ref[...]                       # (P*H*sumL, H*sumL) sum over points
    blkmask = blkmask_ref[...]                   # (H*sumL, C)       head block-diag

    def layer_step(l, v_pre, a_pre):
        # ----- fused offset/attention projection (both branches, one matmul) -----
        # column order of proj: [v_loc | a_loc | v_attn | a_attn]  (4*HLP lanes)
        q_cat = jnp.concatenate([v_pre + v_pos, a_pre + a_pos], axis=-1)        # (N, 2C)
        proj = jnp.dot(q_cat, wbig_ref[l], preferred_element_type=f32) + bbig_ref[l]
        loc_all = proj[:, :2 * HLP] + rp_add                                    # (N, 2HLP)
        attn_all = _grouped_softmax(proj[:, 2 * HLP:], 2 * H, L * P)            # (N, 2HLP)
        # one lane-dense (4*HLP-wide) store of the per-layer observables
        slab_ref[l] = jnp.concatenate([loc_all, attn_all], axis=-1).astype(slab_ref.dtype)

        loc_v, attn_v = loc_all[:, :HLP], attn_all[:, :HLP]

        # ----- video branch: lane-dense triangle interpolation over (p, h, token) -
        x_all = jnp.dot(loc_v, sp_scale, preferred_element_type=f32) - 0.5      # (N, P*H*sumL)
        a_all = jnp.dot(attn_v, sp_one, preferred_element_type=f32)
        w_all = jnp.maximum(0.0, 1.0 - jnp.abs(x_all - j_all))
        m = jnp.dot(a_all * w_all, p_sum, preferred_element_type=f32)           # (N, H*sumL)

        # ----- block-diagonal value contraction: ONE matmul for all heads/levels --
        value = jnp.dot(a_pre, wv_ref[l], preferred_element_type=f32) + bv_ref[l]   # (N, C)
        v_blk = jnp.concatenate([value] * H, axis=0) * blkmask                   # (H*sumL, C)
        head_out = jnp.dot(m, v_blk, preferred_element_type=f32)                 # (N, C)
        attn_out = jnp.dot(head_out, wout_ref[l], preferred_element_type=f32) + bout_ref[l]

        # ----- residual + LN, FFN (ReLU), residual + LN (eval mode, dropout = 0) --
        x1 = _layer_norm(v_pre + attn_out, g1_ref[l], b1_ref[l])
        hdn = jnp.maximum(
            jnp.dot(x1, wf1_ref[l], preferred_element_type=f32) + bf1_ref[l], 0.0)
        x2 = _layer_norm(
            x1 + jnp.dot(hdn, wf2_ref[l], preferred_element_type=f32) + bf2_ref[l],
            g2_ref[l], b2_ref[l])
        return x2

    # Audio branch compute (value proj / interpolation / FFN / LN) is skipped:
    # the reference dense path assigns audio_output = audio_attended_visual, so
    # only the audio sampling locations / attention weights (in the slab) are live.

    # layer 0 peeled: only at layer 0 are the audio-side activations the audio src
    # tokens; afterwards the dense path carries the video output on both modalities.
    v_carry = layer_step(0, v_src, a_src)
    v_carry = jax.lax.fori_loop(
        1, num_layers, lambda l, v: layer_step(l, v, v), v_carry, unroll=True)

    vout_ref[...] = v_carry.astype(vout_ref.dtype)


# -----------------------------------------------------------------------------
# Constant builders (numpy, passed to the kernel as inputs — never captured).
# -----------------------------------------------------------------------------
def _inv_cols(shapes, n_heads, n_points):
    L, P = len(shapes), n_points
    LP, HLP = L * P, n_heads * L * P
    inv = np.zeros((1, HLP), np.float32)
    for h in range(n_heads):
        for l, Ll in enumerate(shapes):
            c0 = h * LP + l * P
            inv[0, c0:c0 + P] = 1.0 / float(Ll)
    return jnp.asarray(inv)


def _build_constants(video_shapes, audio_shapes, n_heads, n_points, d_model):
    H, P = n_heads, n_points
    L = len(audio_shapes)
    LP, HLP = L * P, n_heads * L * P
    sumL = int(sum(int(s) for s in audio_shapes))   # video branch samples the audio levels
    dh = d_model // H
    W = P * H * sumL

    # reference-point spread: rows [video levels | audio levels] -> loc columns
    rpspread = np.zeros((2 * L, 2 * HLP), np.float32)
    for h in range(H):
        for l in range(L):
            for p in range(P):
                rpspread[l, h * LP + l * P + p] = 1.0                 # video loc block
                rpspread[L + l, HLP + h * LP + l * P + p] = 1.0       # audio loc block

    # interpolation spreads over columns c = p*(H*sumL) + h*sumL + s
    sp_scale = np.zeros((HLP, W), np.float32)
    sp_one = np.zeros((HLP, W), np.float32)
    j_all = np.zeros((1, W), np.float32)
    p_sum = np.zeros((W, H * sumL), np.float32)
    start = 0
    level_start = []
    for Ll in audio_shapes:
        level_start.append(start)
        start += int(Ll)
    for p in range(P):
        for h in range(H):
            for l, Ll in enumerate(audio_shapes):
                src = h * LP + l * P + p
                for j in range(int(Ll)):
                    s = level_start[l] + j
                    c = p * (H * sumL) + h * sumL + s
                    sp_scale[src, c] = float(Ll)
                    sp_one[src, c] = 1.0
                    j_all[0, c] = float(j)
                    p_sum[c, h * sumL + s] = 1.0

    blkmask = np.zeros((H * sumL, d_model), np.float32)
    for h in range(H):
        blkmask[h * sumL:(h + 1) * sumL, h * dh:(h + 1) * dh] = 1.0

    return {
        'rpspread': jnp.asarray(rpspread),
        'sp_scale': jnp.asarray(sp_scale),
        'sp_one': jnp.asarray(sp_one),
        'j_all': jnp.asarray(j_all),
        'p_sum': jnp.asarray(p_sum),
        'blkmask': jnp.asarray(blkmask),
    }


def _stack_layer_params(layer_params, video_shapes, audio_shapes,
                        n_heads, n_points, d_model):
    """Stack per-layer weights; fuse Woff/Wattn of both branches (with 1/Ll folded)
    into one block-diagonal projection producing the slab lane order."""
    nl = len(layer_params)
    HLP = n_heads * len(audio_shapes) * n_points

    inv_v = _inv_cols(audio_shapes, n_heads, n_points)   # video samples audio levels
    inv_a = _inv_cols(video_shapes, n_heads, n_points)   # audio samples video levels

    Z = jnp.zeros((d_model, HLP), jnp.float32)
    w_big, b_big = [], []
    for i in range(nl):
        pv, pa = layer_params[i]['video'], layer_params[i]['audio']
        top = jnp.concatenate([pv['Woff'] * inv_v, Z, pv['Wattn'], Z], axis=1)
        bot = jnp.concatenate([Z, pa['Woff'] * inv_a, Z, pa['Wattn']], axis=1)
        w_big.append(jnp.concatenate([top, bot], axis=0))                 # (2C, 4HLP)
        b_big.append(jnp.concatenate([pv['boff'] * inv_v, pa['boff'] * inv_a,
                                      pv['battn'], pa['battn']], axis=1))  # (1, 4HLP)

    stacked = {'W_big': jnp.stack(w_big), 'b_big': jnp.stack(b_big)}
    for name in ('Wv', 'bv', 'Wout', 'bout', 'g1', 'b1',
                 'Wf1', 'bf1', 'Wf2', 'bf2', 'g2', 'b2'):
        stacked[name] = jnp.stack(
            [layer_params[i]['video'][name] for i in range(nl)], axis=0)
    return stacked


# -----------------------------------------------------------------------------
# Wrapper: one fused pallas_call for the whole encoder.
# -----------------------------------------------------------------------------
_CONST_ORDER = ('rpspread', 'sp_scale', 'sp_one', 'j_all', 'p_sum', 'blkmask')
_WEIGHT_ORDER = ('W_big', 'b_big', 'Wv', 'bv', 'Wout', 'bout',
                 'g1', 'b1', 'Wf1', 'bf1', 'Wf2', 'bf2', 'g2', 'b2')


@functools.partial(jax.jit, static_argnames=('video_shapes', 'audio_shapes',
                                             'n_heads', 'n_points'))
def _encoder_forward_fused(video_src, audio_src, video_pos, audio_pos,
                           video_rp, audio_rp, consts, stacked, *,
                           video_shapes, audio_shapes, n_heads, n_points):
    B, N, C = video_src.shape
    L = len(audio_shapes)
    HLP = n_heads * L * n_points
    nl = stacked['Wv'].shape[0]

    assert audio_src.shape[1] == N               # reference dense-path quirk requires it
    assert len(video_shapes) == L
    assert sum(int(s) for s in audio_shapes) == N
    assert sum(int(s) for s in video_shapes) == N

    const_args = [consts[k] for k in _CONST_ORDER]
    weight_args = [stacked[k] for k in _WEIGHT_ORDER]

    def act_spec(x):                             # per-sample block, batch dim squeezed
        return pl.BlockSpec((None,) + tuple(x.shape[1:]),
                            lambda b: (b,) + (0,) * (x.ndim - 1))

    def full_spec(x):                            # full array resident, fetched once
        return pl.BlockSpec(tuple(x.shape), lambda b, _n=x.ndim: (0,) * _n)

    kernel = functools.partial(
        _fused_encoder_kernel,
        n_heads=n_heads, n_levels=L, n_points=n_points, num_layers=int(nl))

    in_specs = ([act_spec(x) for x in (video_src, audio_src, video_pos,
                                       audio_pos, video_rp, audio_rp)]
                + [full_spec(x) for x in const_args + weight_args])
    out_specs = [
        pl.BlockSpec((None, N, C), lambda b: (b, 0, 0)),
        pl.BlockSpec((None, nl, N, 4 * HLP), lambda b: (b, 0, 0, 0)),
    ]
    out_shape = (
        jax.ShapeDtypeStruct((B, N, C), jnp.float32),
        jax.ShapeDtypeStruct((B, nl, N, 4 * HLP), jnp.float32),
    )

    vout, slab = pl.pallas_call(
        kernel,
        out_shape=out_shape,
        grid_spec=pltpu.PrefetchScalarGridSpec(
            num_scalar_prefetch=0,
            grid=(B,),
            in_specs=in_specs,
            out_specs=out_specs),
        compiler_params=pltpu.CompilerParams(
            dimension_semantics=("parallel",)),
    )(video_src, audio_src, video_pos, audio_pos, video_rp, audio_rp,
      *const_args, *weight_args)

    def split(i):
        return slab[..., i * HLP:(i + 1) * HLP].reshape(B, nl, N, n_heads, L, n_points)

    # slab lane order: [v_loc | a_loc | v_attn | a_attn]
    return vout, split(0), split(2), split(1), split(3)


# -----------------------------------------------------------------------------
# Encoder wrapper (mirrors the PyTorch module's forward, dense path).
# -----------------------------------------------------------------------------
class MultimodalSparseDeformableTransformerEncoder:

    def __init__(self, layer_params, num_layers, d_model, n_heads, n_points):
        self.layer_params = layer_params
        self.num_layers = num_layers
        self.d_model = d_model
        self.n_heads = n_heads
        self.n_points = n_points
        self.aux_heads = False
        self._cache = {}

    def _prepare(self, video_shapes, audio_shapes):
        key = (video_shapes, audio_shapes)
        if key not in self._cache:
            stacked = _stack_layer_params(self.layer_params, video_shapes, audio_shapes,
                                          self.n_heads, self.n_points, self.d_model)
            consts = _build_constants(video_shapes, audio_shapes, self.n_heads,
                                      self.n_points, self.d_model)
            self._cache[key] = (stacked, consts)
        return self._cache[key]

    @staticmethod
    def get_reference_points(temporal_shapes, valid_ratios):
        # identical math to the torch staticmethod (device arg dropped)
        reference_points_list = []
        for lvl, L_ in enumerate(temporal_shapes):
            ref = jnp.linspace(0.5, L_ - 0.5, L_, dtype=jnp.float32)
            ref = ref.reshape(-1)[None] / (valid_ratios[:, None, lvl] * L_)
            reference_points_list.append(ref)
        reference_points = jnp.concatenate(reference_points_list, axis=1)
        reference_points = reference_points[:, :, None] * valid_ratios[:, None]
        reference_points = reference_points[:, :, :, None]
        return reference_points

    def forward(self, video_input, audio_input):
        assert (video_input['backbone_output_proposals'] is None
                and audio_input['backbone_output_proposals'] is None)

        video_sparsified_keys = video_input['backbone_topk_proposals'] is not None
        audio_sparsified_keys = audio_input['backbone_topk_proposals'] is not None
        # TODO(synk): sparse-key gather/scatter path (backbone_topk_proposals,
        # sparse_token_nums) and aux_heads are not implemented; only the dense
        # configuration (topk proposals = None) of the reference forward is supported.
        assert not video_sparsified_keys and not audio_sparsified_keys

        assert (audio_input['src_flatten'].shape[1]
                == video_input['src_flatten'].shape[1]), \
            "dense multi-layer path requires equal token counts (reference quirk)"
        assert (len(video_input['temporal_shapes'])
                == len(audio_input['temporal_shapes']))

        video_input['reference_points'] = self.get_reference_points(
            video_input['temporal_shapes'], video_input['valid_ratios'])
        audio_input['reference_points'] = self.get_reference_points(
            audio_input['temporal_shapes'], audio_input['valid_ratios'])

        video_ref = video_input['reference_points'][..., 0]   # (B, Nv, L)
        audio_ref = audio_input['reference_points'][..., 0]   # (B, Na, L)

        video_shapes = tuple(int(s) for s in video_input['temporal_shapes'])
        audio_shapes = tuple(int(s) for s in audio_input['temporal_shapes'])
        stacked, consts = self._prepare(video_shapes, audio_shapes)

        video_output, v_loc_enc, v_w_enc, a_loc_enc, a_w_enc = _encoder_forward_fused(
            video_input['src_flatten'], audio_input['src_flatten'],
            video_input['lvl_pos_embed_flatten'], audio_input['lvl_pos_embed_flatten'],
            video_ref, audio_ref, consts, stacked,
            video_shapes=video_shapes, audio_shapes=audio_shapes,
            n_heads=self.n_heads, n_points=self.n_points)

        # dense (non-sparsified) path of the reference forward — its else-branch
        # assigns `audio_output = audio_attended_visual` (NOT visual_attended_audio),
        # so both modalities carry the video-branch output.
        audio_output = video_output

        return (video_output, v_loc_enc, v_w_enc,
                audio_output, a_loc_enc, a_w_enc,
                None, None, None, None)


# -----------------------------------------------------------------------------
# Deterministic parameter init (synthetic; no checkpoint loading).
# -----------------------------------------------------------------------------
def init_branch_params(key, d_model, n_heads, n_levels, n_points, d_ffn):
    HLP = n_heads * n_levels * n_points
    ks = jax.random.split(key, 8)

    def w(k, shape, scale=0.05):
        return jax.random.normal(k, shape, jnp.float32) * scale

    return dict(
        Wv=w(ks[0], (d_model, d_model)), bv=jnp.zeros((1, d_model), jnp.float32),
        Woff=w(ks[1], (d_model, HLP)), boff=w(ks[2], (1, HLP), 0.1),
        Wattn=w(ks[3], (d_model, HLP)), battn=jnp.zeros((1, HLP), jnp.float32),
        Wout=w(ks[4], (d_model, d_model)), bout=jnp.zeros((1, d_model), jnp.float32),
        g1=jnp.ones((1, d_model), jnp.float32), b1=jnp.zeros((1, d_model), jnp.float32),
        Wf1=w(ks[5], (d_model, d_ffn)), bf1=jnp.zeros((1, d_ffn), jnp.float32),
        Wf2=w(ks[6], (d_ffn, d_model)), bf2=jnp.zeros((1, d_model), jnp.float32),
        g2=jnp.ones((1, d_model), jnp.float32), b2=jnp.zeros((1, d_model), jnp.float32),
    )


if __name__ == "__main__":
    key = jax.random.PRNGKey(0)

    B = 2
    d_model = 32
    n_heads = 4
    n_points = 4
    d_ffn = 64
    num_layers = 2
    video_shapes = (16, 8)     # temporal shapes per feature level
    audio_shapes = (16, 8)
    n_levels = len(video_shapes)
    Nv = sum(video_shapes)
    Na = sum(audio_shapes)

    ks = jax.random.split(key, 8)

    def level_start_index(shapes):
        idx, s = [], 0
        for L_ in shapes:
            idx.append(s)
            s += L_
        return tuple(idx)

    video_input = {
        'src_flatten': jax.random.normal(ks[0], (B, Nv, d_model), jnp.float32),
        'lvl_pos_embed_flatten': 0.1 * jax.random.normal(ks[1], (B, Nv, d_model), jnp.float32),
        'temporal_shapes': video_shapes,
        'level_start_index': level_start_index(video_shapes),
        'valid_ratios': jax.random.uniform(ks[2], (B, n_levels), jnp.float32, 0.7, 1.0),
        'padding_mask': None,
        'backbone_topk_proposals': None,
        'backbone_output_proposals': None,
        'sparse_token_nums': None,
    }
    audio_input = {
        'src_flatten': jax.random.normal(ks[3], (B, Na, d_model), jnp.float32),
        'lvl_pos_embed_flatten': 0.1 * jax.random.normal(ks[4], (B, Na, d_model), jnp.float32),
        'temporal_shapes': audio_shapes,
        'level_start_index': level_start_index(audio_shapes),
        'valid_ratios': jax.random.uniform(ks[5], (B, n_levels), jnp.float32, 0.7, 1.0),
        'padding_mask': None,
        'backbone_topk_proposals': None,
        'backbone_output_proposals': None,
        'sparse_token_nums': None,
    }

    layer_keys = jax.random.split(ks[6], num_layers * 2)
    layer_params = [
        {'video': init_branch_params(layer_keys[2 * l], d_model, n_heads, n_levels, n_points, d_ffn),
         'audio': init_branch_params(layer_keys[2 * l + 1], d_model, n_heads, n_levels, n_points, d_ffn)}
        for l in range(num_layers)
    ]

    encoder = MultimodalSparseDeformableTransformerEncoder(
        layer_params, num_layers, d_model, n_heads, n_points)

    outs = encoder.forward(video_input, audio_input)
    outs = jax.block_until_ready(outs)

    (video_output, v_loc_enc, v_w_enc,
     audio_output, a_loc_enc, a_w_enc, *rest) = outs

    assert video_output.shape == (B, Nv, d_model)
    assert audio_output.shape == (B, Nv, d_model)  # reference else-branch assigns audio_attended_visual
    assert v_loc_enc.shape == (B, num_layers, Nv, n_heads, n_levels, n_points)
    assert v_w_enc.shape == (B, num_layers, Nv, n_heads, n_levels, n_points)
    assert a_loc_enc.shape == (B, num_layers, Na, n_heads, n_levels, n_points)
    assert a_w_enc.shape == (B, num_layers, Na, n_heads, n_levels, n_points)
    assert rest == [None, None, None, None]
    assert bool(jnp.all(jnp.isfinite(video_output)))
    assert bool(jnp.all(jnp.isfinite(audio_output)))
    # attention weights per (head, query) are a softmax over levels*points
    assert bool(jnp.allclose(jnp.sum(v_w_enc, axis=(-1, -2)), 1.0, atol=1e-4))
    assert bool(jnp.allclose(jnp.sum(a_w_enc, axis=(-1, -2)), 1.0, atol=1e-4))

    print("KERNEL_OK")
</pallas_src>

<mosaic_0001>
module attributes {stable_mosaic.version = 11 : i64} {
  func.func @_fused_encoder_kernel(%arg0: i32, %arg1: memref<1x24x32xf32, #tpu.memory_space<vmem>>, %arg2: memref<1x24x32xf32, #tpu.memory_space<vmem>>, %arg3: memref<1x24x32xf32, #tpu.memory_space<vmem>>, %arg4: memref<1x24x32xf32, #tpu.memory_space<vmem>>, %arg5: memref<1x24x2xf32, #tpu.memory_space<vmem>>, %arg6: memref<1x24x2xf32, #tpu.memory_space<vmem>>, %arg7: memref<4x64xf32, #tpu.memory_space<vmem>>, %arg8: memref<32x384xf32, #tpu.memory_space<vmem>>, %arg9: memref<32x384xf32, #tpu.memory_space<vmem>>, %arg10: memref<1x384xf32, #tpu.memory_space<vmem>>, %arg11: memref<384x96xf32, #tpu.memory_space<vmem>>, %arg12: memref<96x32xf32, #tpu.memory_space<vmem>>, %arg13: memref<2x64x128xf32, #tpu.memory_space<vmem>>, %arg14: memref<2x1x128xf32, #tpu.memory_space<vmem>>, %arg15: memref<2x32x32xf32, #tpu.memory_space<vmem>>, %arg16: memref<2x1x32xf32, #tpu.memory_space<vmem>>, %arg17: memref<2x32x32xf32, #tpu.memory_space<vmem>>, %arg18: memref<2x1x32xf32, #tpu.memory_space<vmem>>, %arg19: memref<2x1x32xf32, #tpu.memory_space<vmem>>, %arg20: memref<2x1x32xf32, #tpu.memory_space<vmem>>, %arg21: memref<2x32x64xf32, #tpu.memory_space<vmem>>, %arg22: memref<2x1x64xf32, #tpu.memory_space<vmem>>, %arg23: memref<2x64x32xf32, #tpu.memory_space<vmem>>, %arg24: memref<2x1x32xf32, #tpu.memory_space<vmem>>, %arg25: memref<2x1x32xf32, #tpu.memory_space<vmem>>, %arg26: memref<2x1x32xf32, #tpu.memory_space<vmem>>, %arg27: memref<1x24x32xf32, #tpu.memory_space<vmem>>, %arg28: memref<1x2x24x128xf32, #tpu.memory_space<vmem>>) attributes {dimension_semantics = [#tpu.dimension_semantics<parallel>], iteration_bounds = array<i64: 2>, scalar_prefetch = 0 : i64, scratch_operands = 0 : i64, tpu.core_type = #tpu.core_type<tc>, window_params = [{transform_indices = @transform_0, window_bounds = array<i64: 1, 24, 32>}, {transform_indices = @transform_1, window_bounds = array<i64: 1, 24, 32>}, {transform_indices = @transform_2, window_bounds = array<i64: 1, 24, 32>}, {transform_indices = @transform_3, window_bounds = array<i64: 1, 24, 32>}, {transform_indices = @transform_4, window_bounds = array<i64: 1, 24, 2>}, {transform_indices = @transform_5, window_bounds = array<i64: 1, 24, 2>}, {pipeline_mode = #tpu.pipeline_mode<synchronous>, transform_indices = @transform_6, window_bounds = array<i64: 4, 64>}, {pipeline_mode = #tpu.pipeline_mode<synchronous>, transform_indices = @transform_7, window_bounds = array<i64: 32, 384>}, {pipeline_mode = #tpu.pipeline_mode<synchronous>, transform_indices = @transform_8, window_bounds = array<i64: 32, 384>}, {pipeline_mode = #tpu.pipeline_mode<synchronous>, transform_indices = @transform_9, window_bounds = array<i64: 1, 384>}, {pipeline_mode = #tpu.pipeline_mode<synchronous>, transform_indices = @transform_10, window_bounds = array<i64: 384, 96>}, {pipeline_mode = #tpu.pipeline_mode<synchronous>, transform_indices = @transform_11, window_bounds = array<i64: 96, 32>}, {pipeline_mode = #tpu.pipeline_mode<synchronous>, transform_indices = @transform_12, window_bounds = array<i64: 2, 64, 128>}, {pipeline_mode = #tpu.pipeline_mode<synchronous>, transform_indices = @transform_13, window_bounds = array<i64: 2, 1, 128>}, {pipeline_mode = #tpu.pipeline_mode<synchronous>, transform_indices = @transform_14, window_bounds = array<i64: 2, 32, 32>}, {pipeline_mode = #tpu.pipeline_mode<synchronous>, transform_indices = @transform_15, window_bounds = array<i64: 2, 1, 32>}, {pipeline_mode = #tpu.pipeline_mode<synchronous>, transform_indices = @transform_16, window_bounds = array<i64: 2, 32, 32>}, {pipeline_mode = #tpu.pipeline_mode<synchronous>, transform_indices = @transform_17, window_bounds = array<i64: 2, 1, 32>}, {pipeline_mode = #tpu.pipeline_mode<synchronous>, transform_indices = @transform_18, window_bounds = array<i64: 2, 1, 32>}, {pipeline_mode = #tpu.pipeline_mode<synchronous>, transform_indices = @transform_19, window_bounds = array<i64: 2, 1, 32>}, {pipeline_mode = #tpu.pipeline_mode<synchronous>, transform_indices = @transform_20, window_bounds = array<i64: 2, 32, 64>}, {pipeline_mode = #tpu.pipeline_mode<synchronous>, transform_indices = @transform_21, window_bounds = array<i64: 2, 1, 64>}, {pipeline_mode = #tpu.pipeline_mode<synchronous>, transform_indices = @transform_22, window_bounds = array<i64: 2, 64, 32>}, {pipeline_mode = #tpu.pipeline_mode<synchronous>, transform_indices = @transform_23, window_bounds = array<i64: 2, 1, 32>}, {pipeline_mode = #tpu.pipeline_mode<synchronous>, transform_indices = @transform_24, window_bounds = array<i64: 2, 1, 32>}, {pipeline_mode = #tpu.pipeline_mode<synchronous>, transform_indices = @transform_25, window_bounds = array<i64: 2, 1, 32>}, {transform_indices = @transform_26, window_bounds = array<i64: 1, 24, 32>}, {transform_indices = @transform_27, window_bounds = array<i64: 1, 2, 24, 128>}]} {
    %c0 = arith.constant 0 : index
    %c0_0 = arith.constant 0 : index
    %c0_1 = arith.constant 0 : index
    %0 = vector.load %arg1[%c0, %c0_0, %c0_1] : memref<1x24x32xf32, #tpu.memory_space<vmem>>, vector<1x24x32xf32>
    %1 = vector.shape_cast %0 : vector<1x24x32xf32> to vector<24x32xf32>
    %c0_2 = arith.constant 0 : index
    %c0_3 = arith.constant 0 : index
    %c0_4 = arith.constant 0 : index
    %2 = vector.load %arg2[%c0_2, %c0_3, %c0_4] : memref<1x24x32xf32, #tpu.memory_space<vmem>>, vector<1x24x32xf32>
    %3 = vector.shape_cast %2 : vector<1x24x32xf32> to vector<24x32xf32>
    %c0_5 = arith.constant 0 : index
    %c0_6 = arith.constant 0 : index
    %c0_7 = arith.constant 0 : index
    %4 = vector.load %arg3[%c0_5, %c0_6, %c0_7] : memref<1x24x32xf32, #tpu.memory_space<vmem>>, vector<1x24x32xf32>
    %5 = vector.shape_cast %4 : vector<1x24x32xf32> to vector<24x32xf32>
    %c0_8 = arith.constant 0 : index
    %c0_9 = arith.constant 0 : index
    %c0_10 = arith.constant 0 : index
    %6 = vector.load %arg4[%c0_8, %c0_9, %c0_10] : memref<1x24x32xf32, #tpu.memory_space<vmem>>, vector<1x24x32xf32>
    %7 = vector.shape_cast %6 : vector<1x24x32xf32> to vector<24x32xf32>
    %c0_11 = arith.constant 0 : index
    %c0_12 = arith.constant 0 : index
    %c0_13 = arith.constant 0 : index
    %8 = vector.load %arg5[%c0_11, %c0_12, %c0_13] : memref<1x24x2xf32, #tpu.memory_space<vmem>>, vector<1x24x2xf32>
    %9 = vector.shape_cast %8 : vector<1x24x2xf32> to vector<24x2xf32>
    %c0_14 = arith.constant 0 : index
    %c0_15 = arith.constant 0 : index
    %c0_16 = arith.constant 0 : index
    %10 = vector.load %arg6[%c0_14, %c0_15, %c0_16] : memref<1x24x2xf32, #tpu.memory_space<vmem>>, vector<1x24x2xf32>
    %11 = vector.shape_cast %10 : vector<1x24x2xf32> to vector<24x2xf32>
    %12 = tpu.concatenate %9, %11 in 1 : vector<24x2xf32>, vector<24x2xf32> -> vector<24x4xf32>
    %c0_17 = arith.constant 0 : index
    %c0_18 = arith.constant 0 : index
    %13 = vector.load %arg7[%c0_17, %c0_18] : memref<4x64xf32, #tpu.memory_space<vmem>>, vector<4x64xf32>
    %cst = arith.constant dense<0.000000e+00> : vector<24x64xf32>
    %14 = tpu.matmul %12, %13, %cst {dimension_numbers = #tpu.dot_dimension_numbers<[1], [0], [0], [1], [0, 0, 1, 1], [], []>} : vector<24x4xf32>, vector<4x64xf32>, vector<24x64xf32> -> vector<24x64xf32>
    %c0_19 = arith.constant 0 : index
    %c0_20 = arith.constant 0 : index
    %15 = vector.load %arg8[%c0_19, %c0_20] : memref<32x384xf32, #tpu.memory_space<vmem>>, vector<32x384xf32>
    %c0_21 = arith.constant 0 : index
    %c0_22 = arith.constant 0 : index
    %16 = vector.load %arg9[%c0_21, %c0_22] : memref<32x384xf32, #tpu.memory_space<vmem>>, vector<32x384xf32>
    %c0_23 = arith.constant 0 : index
    %c0_24 = arith.constant 0 : index
    %17 = vector.load %arg10[%c0_23, %c0_24] : memref<1x384xf32, #tpu.memory_space<vmem>>, vector<1x384xf32>
    %c0_25 = arith.constant 0 : index
    %c0_26 = arith.constant 0 : index
    %18 = vector.load %arg11[%c0_25, %c0_26] : memref<384x96xf32, #tpu.memory_space<vmem>>, vector<384x96xf32>
    %c0_27 = arith.constant 0 : index
    %c0_28 = arith.constant 0 : index
    %19 = vector.load %arg12[%c0_27, %c0_28] : memref<96x32xf32, #tpu.memory_space<vmem>>, vector<96x32xf32>
    %20 = arith.addf %1, %5 : vector<24x32xf32>
    %21 = arith.addf %3, %7 : vector<24x32xf32>
    %22 = tpu.concatenate %20, %21 in 1 : vector<24x32xf32>, vector<24x32xf32> -> vector<24x64xf32>
    %c0_29 = arith.constant 0 : index
    %c0_30 = arith.constant 0 : index
    %c0_31 = arith.constant 0 : index
    %23 = vector.load %arg13[%c0_29, %c0_30, %c0_31] : memref<2x64x128xf32, #tpu.memory_space<vmem>>, vector<1x64x128xf32>
    %24 = vector.shape_cast %23 : vector<1x64x128xf32> to vector<64x128xf32>
    %cst_32 = arith.constant dense<0.000000e+00> : vector<24x128xf32>
    %25 = tpu.matmul %22, %24, %cst_32 {dimension_numbers = #tpu.dot_dimension_numbers<[1], [0], [0], [1], [0, 0, 1, 1], [], []>} : vector<24x64xf32>, vector<64x128xf32>, vector<24x128xf32> -> vector<24x128xf32>
    %c0_33 = arith.constant 0 : index
    %c0_34 = arith.constant 0 : index
    %c0_35 = arith.constant 0 : index
    %26 = vector.load %arg14[%c0_33, %c0_34, %c0_35] : memref<2x1x128xf32, #tpu.memory_space<vmem>>, vector<1x1x128xf32>
    %27 = vector.shape_cast %26 : vector<1x1x128xf32> to vector<1x128xf32>
    %28 = vector.broadcast %27 : vector<1x128xf32> to vector<24x128xf32>
    %29 = arith.addf %25, %28 : vector<24x128xf32>
    %30 = vector.extract_strided_slice %29 {offsets = [0, 0], sizes = [24, 64], strides = [1, 1]} : vector<24x128xf32> to vector<24x64xf32>
    %31 = arith.addf %30, %14 : vector<24x64xf32>
    %32 = vector.extract_strided_slice %29 {offsets = [0, 64], sizes = [24, 64], strides = [1, 1]} : vector<24x128xf32> to vector<24x64xf32>
    %33 = vector.shape_cast %32 : vector<24x64xf32> to vector<24x8x8xf32>
    %cst_36 = arith.constant dense<0xFF800000> : vector<24x8xf32>
    %34 = vector.multi_reduction <maximumf>, %33, %cst_36 [2] : vector<24x8x8xf32> to vector<24x8xf32>
    %35 = vector.shape_cast %34 : vector<24x8xf32> to vector<24x8x1xf32>
    %36 = vector.broadcast %35 : vector<24x8x1xf32> to vector<24x8x8xf32>
    %37 = arith.subf %33, %36 : vector<24x8x8xf32>
    %38 = math.exp %37 : vector<24x8x8xf32>
    %cst_37 = arith.constant dense<0.000000e+00> : vector<24x8xf32>
    %39 = vector.multi_reduction <add>, %38, %cst_37 [2] : vector<24x8x8xf32> to vector<24x8xf32>
    %40 = vector.shape_cast %39 : vector<24x8xf32> to vector<24x8x1xf32>
    %41 = vector.broadcast %40 : vector<24x8x1xf32> to vector<24x8x8xf32>
    %42 = arith.divf %38, %41 : vector<24x8x8xf32>
    %43 = vector.shape_cast %42 : vector<24x8x8xf32> to vector<24x64xf32>
    %44 = tpu.concatenate %31, %43 in 1 : vector<24x64xf32>, vector<24x64xf32> -> vector<24x128xf32>
    %c0_38 = arith.constant 0 : index
    %c0_39 = arith.constant 0 : index
    %c0_40 = arith.constant 0 : index
    %c0_41 = arith.constant 0 : index
    %45 = vector.load %arg28[%c0_38, %c0_39, %c0_40, %c0_41] : memref<1x2x24x128xf32, #tpu.memory_space<vmem>>, vector<1x1x24x128xf32>
    %46 = vector.shape_cast %45 : vector<1x1x24x128xf32> to vector<24x128xf32>
    %47 = vector.shape_cast %44 : vector<24x128xf32> to vector<1x1x24x128xf32>
    tpu.vector_store %arg28[%c0_38, %c0_39, %c0_40, %c0_41], %47 {strides = array<i32>} : memref<1x2x24x128xf32, #tpu.memory_space<vmem>>, vector<1x1x24x128xf32>,
    %48 = vector.extract_strided_slice %31 {offsets = [0, 0], sizes = [24, 32], strides = [1, 1]} : vector<24x64xf32> to vector<24x32xf32>
    %49 = vector.extract_strided_slice %43 {offsets = [0, 0], sizes = [24, 32], strides = [1, 1]} : vector<24x64xf32> to vector<24x32xf32>
    %cst_42 = arith.constant dense<0.000000e+00> : vector<24x384xf32>
    %50 = tpu.matmul %48, %15, %cst_42 {dimension_numbers = #tpu.dot_dimension_numbers<[1], [0], [0], [1], [0, 0, 1, 1], [], []>} : vector<24x32xf32>, vector<32x384xf32>, vector<24x384xf32> -> vector<24x384xf32>
    %cst_43 = arith.constant 5.000000e-01 : f32
    %51 = vector.broadcast %cst_43 : f32 to vector<24x384xf32>
    %52 = arith.subf %50, %51 : vector<24x384xf32>
    %cst_44 = arith.constant dense<0.000000e+00> : vector<24x384xf32>
    %53 = tpu.matmul %49, %16, %cst_44 {dimension_numbers = #tpu.dot_dimension_numbers<[1], [0], [0], [1], [0, 0, 1, 1], [], []>} : vector<24x32xf32>, vector<32x384xf32>, vector<24x384xf32> -> vector<24x384xf32>
    %54 = vector.broadcast %17 : vector<1x384xf32> to vector<24x384xf32>
    %55 = arith.subf %52, %54 : vector<24x384xf32>
    %56 = math.absf %55 : vector<24x384xf32>
    %cst_45 = arith.constant 1.000000e+00 : f32
    %57 = vector.broadcast %cst_45 : f32 to vector<24x384xf32>
    %58 = arith.subf %57, %56 : vector<24x384xf32>
    %cst_46 = arith.constant 0.000000e+00 : f32
    %59 = vector.broadcast %cst_46 : f32 to vector<24x384xf32>
    %60 = arith.maximumf %59, %58 : vector<24x384xf32>
    %61 = arith.mulf %53, %60 : vector<24x384xf32>
    %cst_47 = arith.constant dense<0.000000e+00> : vector<24x96xf32>
    %62 = tpu.matmul %61, %18, %cst_47 {dimension_numbers = #tpu.dot_dimension_numbers<[1], [0], [0], [1], [0, 0, 1, 1], [], []>} : vector<24x384xf32>, vector<384x96xf32>, vector<24x96xf32> -> vector<24x96xf32>
    %c0_48 = arith.constant 0 : index
    %c0_49 = arith.constant 0 : index
    %c0_50 = arith.constant 0 : index
    %63 = vector.load %arg15[%c0_48, %c0_49, %c0_50] : memref<2x32x32xf32, #tpu.memory_space<vmem>>, vector<1x32x32xf32>
    %64 = vector.shape_cast %63 : vector<1x32x32xf32> to vector<32x32xf32>
    %cst_51 = arith.constant dense<0.000000e+00> : vector<24x32xf32>
    %65 = tpu.matmul %3, %64, %cst_51 {dimension_numbers = #tpu.dot_dimension_numbers<[1], [0], [0], [1], [0, 0, 1, 1], [], []>} : vector<24x32xf32>, vector<32x32xf32>, vector<24x32xf32> -> vector<24x32xf32>
    %c0_52 = arith.constant 0 : index
    %c0_53 = arith.constant 0 : index
    %c0_54 = arith.constant 0 : index
    %66 = vector.load %arg16[%c0_52, %c0_53, %c0_54] : memref<2x1x32xf32, #tpu.memory_space<vmem>>, vector<1x1x32xf32>
    %67 = vector.shape_cast %66 : vector<1x1x32xf32> to vector<1x32xf32>
    %68 = vector.broadcast %67 : vector<1x32xf32> to vector<24x32xf32>
    %69 = arith.addf %65, %68 : vector<24x32xf32>
    %70 = tpu.concatenate %69, %69, %69, %69 in 0 : vector<24x32xf32>, vector<24x32xf32>, vector<24x32xf32>, vector<24x32xf32> -> vector<96x32xf32>
    %71 = arith.mulf %70, %19 : vector<96x32xf32>
    %cst_55 = arith.constant dense<0.000000e+00> : vector<24x32xf32>
    %72 = tpu.matmul %62, %71, %cst_55 {dimension_numbers = #tpu.dot_dimension_numbers<[1], [0], [0], [1], [0, 0, 1, 1], [], []>} : vector<24x96xf32>, vector<96x32xf32>, vector<24x32xf32> -> vector<24x32xf32>
    %c0_56 = arith.constant 0 : index
    %c0_57 = arith.constant 0 : index
    %c0_58 = arith.constant 0 : index
    %73 = vector.load %arg17[%c0_56, %c0_57, %c0_58] : memref<2x32x32xf32, #tpu.memory_space<vmem>>, vector<1x32x32xf32>
    %74 = vector.shape_cast %73 : vector<1x32x32xf32> to vector<32x32xf32>
    %cst_59 = arith.constant dense<0.000000e+00> : vector<24x32xf32>
    %75 = tpu.matmul %72, %74, %cst_59 {dimension_numbers = #tpu.dot_dimension_numbers<[1], [0], [0], [1], [0, 0, 1, 1], [], []>} : vector<24x32xf32>, vector<32x32xf32>, vector<24x32xf32> -> vector<24x32xf32>
    %c0_60 = arith.constant 0 : index
    %c0_61 = arith.constant 0 : index
    %c0_62 = arith.constant 0 : index
    %76 = vector.load %arg18[%c0_60, %c0_61, %c0_62] : memref<2x1x32xf32, #tpu.memory_space<vmem>>, vector<1x1x32xf32>
    %77 = vector.shape_cast %76 : vector<1x1x32xf32> to vector<1x32xf32>
    %78 = vector.broadcast %77 : vector<1x32xf32> to vector<24x32xf32>
    %79 = arith.addf %75, %78 : vector<24x32xf32>
    %80 = arith.addf %1, %79 : vector<24x32xf32>
    %c0_63 = arith.constant 0 : index
    %c0_64 = arith.constant 0 : index
    %c0_65 = arith.constant 0 : index
    %81 = vector.load %arg19[%c0_63, %c0_64, %c0_65] : memref<2x1x32xf32, #tpu.memory_space<vmem>>, vector<1x1x32xf32>
    %82 = vector.shape_cast %81 : vector<1x1x32xf32> to vector<1x32xf32>
    %c0_66 = arith.constant 0 : index
    %c0_67 = arith.constant 0 : index
    %c0_68 = arith.constant 0 : index
    %83 = vector.load %arg20[%c0_66, %c0_67, %c0_68] : memref<2x1x32xf32, #tpu.memory_space<vmem>>, vector<1x1x32xf32>
    %84 = vector.shape_cast %83 : vector<1x1x32xf32> to vector<1x32xf32>
    %cst_69 = arith.constant dense<0.000000e+00> : vector<24xf32>
    %85 = vector.multi_reduction <add>, %80, %cst_69 [1] : vector<24x32xf32> to vector<24xf32>
    %86 = vector.shape_cast %85 : vector<24xf32> to vector<24x1xf32>
    %cst_70 = arith.constant 3.200000e+01 : f32
    %87 = vector.broadcast %cst_70 : f32 to vector<24x1xf32>
    %88 = arith.divf %86, %87 : vector<24x1xf32>
    %89 = vector.broadcast %88 : vector<24x1xf32> to vector<24x32xf32>
    %90 = arith.subf %80, %89 : vector<24x32xf32>
    %91 = arith.mulf %90, %90 : vector<24x32xf32>
    %cst_71 = arith.constant dense<0.000000e+00> : vector<24xf32>
    %92 = vector.multi_reduction <add>, %91, %cst_71 [1] : vector<24x32xf32> to vector<24xf32>
    %93 = vector.shape_cast %92 : vector<24xf32> to vector<24x1xf32>
    %cst_72 = arith.constant 3.200000e+01 : f32
    %94 = vector.broadcast %cst_72 : f32 to vector<24x1xf32>
    %95 = arith.divf %93, %94 : vector<24x1xf32>
    %96 = vector.broadcast %88 : vector<24x1xf32> to vector<24x32xf32>
    %97 = arith.subf %80, %96 : vector<24x32xf32>
    %cst_73 = arith.constant 9.99999974E-6 : f32
    %98 = vector.broadcast %cst_73 : f32 to vector<24x1xf32>
    %99 = arith.addf %95, %98 : vector<24x1xf32>
    %100 = math.rsqrt %99 : vector<24x1xf32>
    %101 = vector.broadcast %100 : vector<24x1xf32> to vector<24x32xf32>
    %102 = arith.mulf %97, %101 : vector<24x32xf32>
    %103 = vector.broadcast %82 : vector<1x32xf32> to vector<24x32xf32>
    %104 = arith.mulf %102, %103 : vector<24x32xf32>
    %105 = vector.broadcast %84 : vector<1x32xf32> to vector<24x32xf32>
    %106 = arith.addf %104, %105 : vector<24x32xf32>
    %c0_74 = arith.constant 0 : index
    %c0_75 = arith.constant 0 : index
    %c0_76 = arith.constant 0 : index
    %107 = vector.load %arg21[%c0_74, %c0_75, %c0_76] : memref<2x32x64xf32, #tpu.memory_space<vmem>>, vector<1x32x64xf32>
    %108 = vector.shape_cast %107 : vector<1x32x64xf32> to vector<32x64xf32>
    %cst_77 = arith.constant dense<0.000000e+00> : vector<24x64xf32>
    %109 = tpu.matmul %106, %108, %cst_77 {dimension_numbers = #tpu.dot_dimension_numbers<[1], [0], [0], [1], [0, 0, 1, 1], [], []>} : vector<24x32xf32>, vector<32x64xf32>, vector<24x64xf32> -> vector<24x64xf32>
    %c0_78 = arith.constant 0 : index
    %c0_79 = arith.constant 0 : index
    %c0_80 = arith.constant 0 : index
    %110 = vector.load %arg22[%c0_78, %c0_79, %c0_80] : memref<2x1x64xf32, #tpu.memory_space<vmem>>, vector<1x1x64xf32>
    %111 = vector.shape_cast %110 : vector<1x1x64xf32> to vector<1x64xf32>
    %112 = vector.broadcast %111 : vector<1x64xf32> to vector<24x64xf32>
    %113 = arith.addf %109, %112 : vector<24x64xf32>
    %cst_81 = arith.constant 0.000000e+00 : f32
    %114 = vector.broadcast %cst_81 : f32 to vector<24x64xf32>
    %115 = arith.maximumf %113, %114 : vector<24x64xf32>
    %c0_82 = arith.constant 0 : index
    %c0_83 = arith.constant 0 : index
    %c0_84 = arith.constant 0 : index
    %116 = vector.load %arg23[%c0_82, %c0_83, %c0_84] : memref<2x64x32xf32, #tpu.memory_space<vmem>>, vector<1x64x32xf32>
    %117 = vector.shape_cast %116 : vector<1x64x32xf32> to vector<64x32xf32>
    %cst_85 = arith.constant dense<0.000000e+00> : vector<24x32xf32>
    %118 = tpu.matmul %115, %117, %cst_85 {dimension_numbers = #tpu.dot_dimension_numbers<[1], [0], [0], [1], [0, 0, 1, 1], [], []>} : vector<24x64xf32>, vector<64x32xf32>, vector<24x32xf32> -> vector<24x32xf32>
    %119 = arith.addf %106, %118 : vector<24x32xf32>
    %c0_86 = arith.constant 0 : index
    %c0_87 = arith.constant 0 : index
    %c0_88 = arith.constant 0 : index
    %120 = vector.load %arg24[%c0_86, %c0_87, %c0_88] : memref<2x1x32xf32, #tpu.memory_space<vmem>>, vector<1x1x32xf32>
    %121 = vector.shape_cast %120 : vector<1x1x32xf32> to vector<1x32xf32>
    %122 = vector.broadcast %121 : vector<1x32xf32> to vector<24x32xf32>
    %123 = arith.addf %119, %122 : vector<24x32xf32>
    %c0_89 = arith.constant 0 : index
    %c0_90 = arith.constant 0 : index
    %c0_91 = arith.constant 0 : index
    %124 = vector.load %arg25[%c0_89, %c0_90, %c0_91] : memref<2x1x32xf32, #tpu.memory_space<vmem>>, vector<1x1x32xf32>
    %125 = vector.shape_cast %124 : vector<1x1x32xf32> to vector<1x32xf32>
    %c0_92 = arith.constant 0 : index
    %c0_93 = arith.constant 0 : index
    %c0_94 = arith.constant 0 : index
    %126 = vector.load %arg26[%c0_92, %c0_93, %c0_94] : memref<2x1x32xf32, #tpu.memory_space<vmem>>, vector<1x1x32xf32>
    %127 = vector.shape_cast %126 : vector<1x1x32xf32> to vector<1x32xf32>
    %cst_95 = arith.constant dense<0.000000e+00> : vector<24xf32>
    %128 = vector.multi_reduction <add>, %123, %cst_95 [1] : vector<24x32xf32> to vector<24xf32>
    %129 = vector.shape_cast %128 : vector<24xf32> to vector<24x1xf32>
    %cst_96 = arith.constant 3.200000e+01 : f32
    %130 = vector.broadcast %cst_96 : f32 to vector<24x1xf32>
    %131 = arith.divf %129, %130 : vector<24x1xf32>
    %132 = vector.broadcast %131 : vector<24x1xf32> to vector<24x32xf32>
    %133 = arith.subf %123, %132 : vector<24x32xf32>
    %134 = arith.mulf %133, %133 : vector<24x32xf32>
    %cst_97 = arith.constant dense<0.000000e+00> : vector<24xf32>
    %135 = vector.multi_reduction <add>, %134, %cst_97 [1] : vector<24x32xf32> to vector<24xf32>
    %136 = vector.shape_cast %135 : vector<24xf32> to vector<24x1xf32>
    %cst_98 = arith.constant 3.200000e+01 : f32
    %137 = vector.broadcast %cst_98 : f32 to vector<24x1xf32>
    %138 = arith.divf %136, %137 : vector<24x1xf32>
    %139 = vector.broadcast %131 : vector<24x1xf32> to vector<24x32xf32>
    %140 = arith.subf %123, %139 : vector<24x32xf32>
    %cst_99 = arith.constant 9.99999974E-6 : f32
    %141 = vector.broadcast %cst_99 : f32 to vector<24x1xf32>
    %142 = arith.addf %138, %141 : vector<24x1xf32>
    %143 = math.rsqrt %142 : vector<24x1xf32>
    %144 = vector.broadcast %143 : vector<24x1xf32> to vector<24x32xf32>
    %145 = arith.mulf %140, %144 : vector<24x32xf32>
    %146 = vector.broadcast %125 : vector<1x32xf32> to vector<24x32xf32>
    %147 = arith.mulf %145, %146 : vector<24x32xf32>
    %148 = vector.broadcast %127 : vector<1x32xf32> to vector<24x32xf32>
    %149 = arith.addf %147, %148 : vector<24x32xf32>
    %c1_i32 = arith.constant 1 : i32
    %150 = arith.addf %149, %5 : vector<24x32xf32>
    %151 = arith.addf %149, %7 : vector<24x32xf32>
    %152 = tpu.concatenate %150, %151 in 1 : vector<24x32xf32>, vector<24x32xf32> -> vector<24x64xf32>
    %153 = arith.index_cast %c1_i32 : i32 to index
    %c0_100 = arith.constant 0 : index
    %c0_101 = arith.constant 0 : index
    %154 = vector.load %arg13[%153, %c0_100, %c0_101] : memref<2x64x128xf32, #tpu.memory_space<vmem>>, vector<1x64x128xf32>
    %155 = vector.shape_cast %154 : vector<1x64x128xf32> to vector<64x128xf32>
    %cst_102 = arith.constant dense<0.000000e+00> : vector<24x128xf32>
    %156 = tpu.matmul %152, %155, %cst_102 {dimension_numbers = #tpu.dot_dimension_numbers<[1], [0], [0], [1], [0, 0, 1, 1], [], []>} : vector<24x64xf32>, vector<64x128xf32>, vector<24x128xf32> -> vector<24x128xf32>
    %157 = arith.index_cast %c1_i32 : i32 to index
    %c0_103 = arith.constant 0 : index
    %c0_104 = arith.constant 0 : index
    %158 = vector.load %arg14[%157, %c0_103, %c0_104] : memref<2x1x128xf32, #tpu.memory_space<vmem>>, vector<1x1x128xf32>
    %159 = vector.shape_cast %158 : vector<1x1x128xf32> to vector<1x128xf32>
    %160 = vector.broadcast %159 : vector<1x128xf32> to vector<24x128xf32>
    %161 = arith.addf %156, %160 : vector<24x128xf32>
    %162 = vector.extract_strided_slice %161 {offsets = [0, 0], sizes = [24, 64], strides = [1, 1]} : vector<24x128xf32> to vector<24x64xf32>
    %163 = arith.addf %162, %14 : vector<24x64xf32>
    %164 = vector.extract_strided_slice %161 {offsets = [0, 64], sizes = [24, 64], strides = [1, 1]} : vector<24x128xf32> to vector<24x64xf32>
    %165 = vector.shape_cast %164 : vector<24x64xf32> to vector<24x8x8xf32>
    %cst_105 = arith.constant dense<0xFF800000> : vector<24x8xf32>
    %166 = vector.multi_reduction <maximumf>, %165, %cst_105 [2] : vector<24x8x8xf32> to vector<24x8xf32>
    %167 = vector.shape_cast %166 : vector<24x8xf32> to vector<24x8x1xf32>
    %168 = vector.broadcast %167 : vector<24x8x1xf32> to vector<24x8x8xf32>
    %169 = arith.subf %165, %168 : vector<24x8x8xf32>
    %170 = math.exp %169 : vector<24x8x8xf32>
    %cst_106 = arith.constant dense<0.000000e+00> : vector<24x8xf32>
    %171 = vector.multi_reduction <add>, %170, %cst_106 [2] : vector<24x8x8xf32> to vector<24x8xf32>
    %172 = vector.shape_cast %171 : vector<24x8xf32> to vector<24x8x1xf32>
    %173 = vector.broadcast %172 : vector<24x8x1xf32> to vector<24x8x8xf32>
    %174 = arith.divf %170, %173 : vector<24x8x8xf32>
    %175 = vector.shape_cast %174 : vector<24x8x8xf32> to vector<24x64xf32>
    %176 = tpu.concatenate %163, %175 in 1 : vector<24x64xf32>, vector<24x64xf32> -> vector<24x128xf32>
    %c0_107 = arith.constant 0 : index
    %177 = arith.index_cast %c1_i32 : i32 to index
    %c0_108 = arith.constant 0 : index
    %c0_109 = arith.constant 0 : index
    %178 = vector.load %arg28[%c0_107, %177, %c0_108, %c0_109] : memref<1x2x24x128xf32, #tpu.memory_space<vmem>>, vector<1x1x24x128xf32>
    %179 = vector.shape_cast %178 : vector<1x1x24x128xf32> to vector<24x128xf32>
    %180 = vector.shape_cast %176 : vector<24x128xf32> to vector<1x1x24x128xf32>
    tpu.vector_store %arg28[%c0_107, %177, %c0_108, %c0_109], %180 {strides = array<i32>} : memref<1x2x24x128xf32, #tpu.memory_space<vmem>>, vector<1x1x24x128xf32>,
    %181 = vector.extract_strided_slice %163 {offsets = [0, 0], sizes = [24, 32], strides = [1, 1]} : vector<24x64xf32> to vector<24x32xf32>
    %182 = vector.extract_strided_slice %175 {offsets = [0, 0], sizes = [24, 32], strides = [1, 1]} : vector<24x64xf32> to vector<24x32xf32>
    %cst_110 = arith.constant dense<0.000000e+00> : vector<24x384xf32>
    %183 = tpu.matmul %181, %15, %cst_110 {dimension_numbers = #tpu.dot_dimension_numbers<[1], [0], [0], [1], [0, 0, 1, 1], [], []>} : vector<24x32xf32>, vector<32x384xf32>, vector<24x384xf32> -> vector<24x384xf32>
    %cst_111 = arith.constant 5.000000e-01 : f32
    %184 = vector.broadcast %cst_111 : f32 to vector<24x384xf32>
    %185 = arith.subf %183, %184 : vector<24x384xf32>
    %cst_112 = arith.constant dense<0.000000e+00> : vector<24x384xf32>
    %186 = tpu.matmul %182, %16, %cst_112 {dimension_numbers = #tpu.dot_dimension_numbers<[1], [0], [0], [1], [0, 0, 1, 1], [], []>} : vector<24x32xf32>, vector<32x384xf32>, vector<24x384xf32> -> vector<24x384xf32>
    %187 = vector.broadcast %17 : vector<1x384xf32> to vector<24x384xf32>
    %188 = arith.subf %185, %187 : vector<24x384xf32>
    %189 = math.absf %188 : vector<24x384xf32>
    %cst_113 = arith.constant 1.000000e+00 : f32
    %190 = vector.broadcast %cst_113 : f32 to vector<24x384xf32>
    %191 = arith.subf %190, %189 : vector<24x384xf32>
    %cst_114 = arith.constant 0.000000e+00 : f32
    %192 = vector.broadcast %cst_114 : f32 to vector<24x384xf32>
    %193 = arith.maximumf %192, %191 : vector<24x384xf32>
    %194 = arith.mulf %186, %193 : vector<24x384xf32>
    %cst_115 = arith.constant dense<0.000000e+00> : vector<24x96xf32>
    %195 = tpu.matmul %194, %18, %cst_115 {dimension_numbers = #tpu.dot_dimension_numbers<[1], [0], [0], [1], [0, 0, 1, 1], [], []>} : vector<24x384xf32>, vector<384x96xf32>, vector<24x96xf32> -> vector<24x96xf32>
    %196 = arith.index_cast %c1_i32 : i32 to index
    %c0_116 = arith.constant 0 : index
    %c0_117 = arith.constant 0 : index
    %197 = vector.load %arg15[%196, %c0_116, %c0_117] : memref<2x32x32xf32, #tpu.memory_space<vmem>>, vector<1x32x32xf32>
    %198 = vector.shape_cast %197 : vector<1x32x32xf32> to vector<32x32xf32>
    %cst_118 = arith.constant dense<0.000000e+00> : vector<24x32xf32>
    %199 = tpu.matmul %149, %198, %cst_118 {dimension_numbers = #tpu.dot_dimension_numbers<[1], [0], [0], [1], [0, 0, 1, 1], [], []>} : vector<24x32xf32>, vector<32x32xf32>, vector<24x32xf32> -> vector<24x32xf32>
    %200 = arith.index_cast %c1_i32 : i32 to index
    %c0_119 = arith.constant 0 : index
    %c0_120 = arith.constant 0 : index
    %201 = vector.load %arg16[%200, %c0_119, %c0_120] : memref<2x1x32xf32, #tpu.memory_space<vmem>>, vector<1x1x32xf32>
    %202 = vector.shape_cast %201 : vector<1x1x32xf32> to vector<1x32xf32>
    %203 = vector.broadcast %202 : vector<1x32xf32> to vector<24x32xf32>
    %204 = arith.addf %199, %203 : vector<24x32xf32>
    %205 = tpu.concatenate %204, %204, %204, %204 in 0 : vector<24x32xf32>, vector<24x32xf32>, vector<24x32xf32>, vector<24x32xf32> -> vector<96x32xf32>
    %206 = arith.mulf %205, %19 : vector<96x32xf32>
    %cst_121 = arith.constant dense<0.000000e+00> : vector<24x32xf32>
    %207 = tpu.matmul %195, %206, %cst_121 {dimension_numbers = #tpu.dot_dimension_numbers<[1], [0], [0], [1], [0, 0, 1, 1], [], []>} : vector<24x96xf32>, vector<96x32xf32>, vector<24x32xf32> -> vector<24x32xf32>
    %208 = arith.index_cast %c1_i32 : i32 to index
    %c0_122 = arith.constant 0 : index
    %c0_123 = arith.constant 0 : index
    %209 = vector.load %arg17[%208, %c0_122, %c0_123] : memref<2x32x32xf32, #tpu.memory_space<vmem>>, vector<1x32x32xf32>
    %210 = vector.shape_cast %209 : vector<1x32x32xf32> to vector<32x32xf32>
    %cst_124 = arith.constant dense<0.000000e+00> : vector<24x32xf32>
    %211 = tpu.matmul %207, %210, %cst_124 {dimension_numbers = #tpu.dot_dimension_numbers<[1], [0], [0], [1], [0, 0, 1, 1], [], []>} : vector<24x32xf32>, vector<32x32xf32>, vector<24x32xf32> -> vector<24x32xf32>
    %212 = arith.index_cast %c1_i32 : i32 to index
    %c0_125 = arith.constant 0 : index
    %c0_126 = arith.constant 0 : index
    %213 = vector.load %arg18[%212, %c0_125, %c0_126] : memref<2x1x32xf32, #tpu.memory_space<vmem>>, vector<1x1x32xf32>
    %214 = vector.shape_cast %213 : vector<1x1x32xf32> to vector<1x32xf32>
    %215 = vector.broadcast %214 : vector<1x32xf32> to vector<24x32xf32>
    %216 = arith.addf %211, %215 : vector<24x32xf32>
    %217 = arith.addf %149, %216 : vector<24x32xf32>
    %218 = arith.index_cast %c1_i32 : i32 to index
    %c0_127 = arith.constant 0 : index
    %c0_128 = arith.constant 0 : index
    %219 = vector.load %arg19[%218, %c0_127, %c0_128] : memref<2x1x32xf32, #tpu.memory_space<vmem>>, vector<1x1x32xf32>
    %220 = vector.shape_cast %219 : vector<1x1x32xf32> to vector<1x32xf32>
    %221 = arith.index_cast %c1_i32 : i32 to index
    %c0_129 = arith.constant 0 : index
    %c0_130 = arith.constant 0 : index
    %222 = vector.load %arg20[%221, %c0_129, %c0_130] : memref<2x1x32xf32, #tpu.memory_space<vmem>>, vector<1x1x32xf32>
    %223 = vector.shape_cast %222 : vector<1x1x32xf32> to vector<1x32xf32>
    %cst_131 = arith.constant dense<0.000000e+00> : vector<24xf32>
    %224 = vector.multi_reduction <add>, %217, %cst_131 [1] : vector<24x32xf32> to vector<24xf32>
    %225 = vector.shape_cast %224 : vector<24xf32> to vector<24x1xf32>
    %cst_132 = arith.constant 3.200000e+01 : f32
    %226 = vector.broadcast %cst_132 : f32 to vector<24x1xf32>
    %227 = arith.divf %225, %226 : vector<24x1xf32>
    %228 = vector.broadcast %227 : vector<24x1xf32> to vector<24x32xf32>
    %229 = arith.subf %217, %228 : vector<24x32xf32>
    %230 = arith.mulf %229, %229 : vector<24x32xf32>
    %cst_133 = arith.constant dense<0.000000e+00> : vector<24xf32>
    %231 = vector.multi_reduction <add>, %230, %cst_133 [1] : vector<24x32xf32> to vector<24xf32>
    %232 = vector.shape_cast %231 : vector<24xf32> to vector<24x1xf32>
    %cst_134 = arith.constant 3.200000e+01 : f32
    %233 = vector.broadcast %cst_134 : f32 to vector<24x1xf32>
    %234 = arith.divf %232, %233 : vector<24x1xf32>
    %235 = vector.broadcast %227 : vector<24x1xf32> to vector<24x32xf32>
    %236 = arith.subf %217, %235 : vector<24x32xf32>
    %cst_135 = arith.constant 9.99999974E-6 : f32
    %237 = vector.broadcast %cst_135 : f32 to vector<24x1xf32>
    %238 = arith.addf %234, %237 : vector<24x1xf32>
    %239 = math.rsqrt %238 : vector<24x1xf32>
    %240 = vector.broadcast %239 : vector<24x1xf32> to vector<24x32xf32>
    %241 = arith.mulf %236, %240 : vector<24x32xf32>
    %242 = vector.broadcast %220 : vector<1x32xf32> to vector<24x32xf32>
    %243 = arith.mulf %241, %242 : vector<24x32xf32>
    %244 = vector.broadcast %223 : vector<1x32xf32> to vector<24x32xf32>
    %245 = arith.addf %243, %244 : vector<24x32xf32>
    %246 = arith.index_cast %c1_i32 : i32 to index
    %c0_136 = arith.constant 0 : index
    %c0_137 = arith.constant 0 : index
    %247 = vector.load %arg21[%246, %c0_136, %c0_137] : memref<2x32x64xf32, #tpu.memory_space<vmem>>, vector<1x32x64xf32>
    %248 = vector.shape_cast %247 : vector<1x32x64xf32> to vector<32x64xf32>
    %cst_138 = arith.constant dense<0.000000e+00> : vector<24x64xf32>
    %249 = tpu.matmul %245, %248, %cst_138 {dimension_numbers = #tpu.dot_dimension_numbers<[1], [0], [0], [1], [0, 0, 1, 1], [], []>} : vector<24x32xf32>, vector<32x64xf32>, vector<24x64xf32> -> vector<24x64xf32>
    %250 = arith.index_cast %c1_i32 : i32 to index
    %c0_139 = arith.constant 0 : index
    %c0_140 = arith.constant 0 : index
    %251 = vector.load %arg22[%250, %c0_139, %c0_140] : memref<2x1x64xf32, #tpu.memory_space<vmem>>, vector<1x1x64xf32>
    %252 = vector.shape_cast %251 : vector<1x1x64xf32> to vector<1x64xf32>
    %253 = vector.broadcast %252 : vector<1x64xf32> to vector<24x64xf32>
    %254 = arith.addf %249, %253 : vector<24x64xf32>
    %cst_141 = arith.constant 0.000000e+00 : f32
    %255 = vector.broadcast %cst_141 : f32 to vector<24x64xf32>
    %256 = arith.maximumf %254, %255 : vector<24x64xf32>
    %257 = arith.index_cast %c1_i32 : i32 to index
    %c0_142 = arith.constant 0 : index
    %c0_143 = arith.constant 0 : index
    %258 = vector.load %arg23[%257, %c0_142, %c0_143] : memref<2x64x32xf32, #tpu.memory_space<vmem>>, vector<1x64x32xf32>
    %259 = vector.shape_cast %258 : vector<1x64x32xf32> to vector<64x32xf32>
    %cst_144 = arith.constant dense<0.000000e+00> : vector<24x32xf32>
    %260 = tpu.matmul %256, %259, %cst_144 {dimension_numbers = #tpu.dot_dimension_numbers<[1], [0], [0], [1], [0, 0, 1, 1], [], []>} : vector<24x64xf32>, vector<64x32xf32>, vector<24x32xf32> -> vector<24x32xf32>
    %261 = arith.addf %245, %260 : vector<24x32xf32>
    %262 = arith.index_cast %c1_i32 : i32 to index
    %c0_145 = arith.constant 0 : index
    %c0_146 = arith.constant 0 : index
    %263 = vector.load %arg24[%262, %c0_145, %c0_146] : memref<2x1x32xf32, #tpu.memory_space<vmem>>, vector<1x1x32xf32>
    %264 = vector.shape_cast %263 : vector<1x1x32xf32> to vector<1x32xf32>
    %265 = vector.broadcast %264 : vector<1x32xf32> to vector<24x32xf32>
    %266 = arith.addf %261, %265 : vector<24x32xf32>
    %267 = arith.index_cast %c1_i32 : i32 to index
    %c0_147 = arith.constant 0 : index
    %c0_148 = arith.constant 0 : index
    %268 = vector.load %arg25[%267, %c0_147, %c0_148] : memref<2x1x32xf32, #tpu.memory_space<vmem>>, vector<1x1x32xf32>
    %269 = vector.shape_cast %268 : vector<1x1x32xf32> to vector<1x32xf32>
    %270 = arith.index_cast %c1_i32 : i32 to index
    %c0_149 = arith.constant 0 : index
    %c0_150 = arith.constant 0 : index
    %271 = vector.load %arg26[%270, %c0_149, %c0_150] : memref<2x1x32xf32, #tpu.memory_space<vmem>>, vector<1x1x32xf32>
    %272 = vector.shape_cast %271 : vector<1x1x32xf32> to vector<1x32xf32>
    %cst_151 = arith.constant dense<0.000000e+00> : vector<24xf32>
    %273 = vector.multi_reduction <add>, %266, %cst_151 [1] : vector<24x32xf32> to vector<24xf32>
    %274 = vector.shape_cast %273 : vector<24xf32> to vector<24x1xf32>
    %cst_152 = arith.constant 3.200000e+01 : f32
    %275 = vector.broadcast %cst_152 : f32 to vector<24x1xf32>
    %276 = arith.divf %274, %275 : vector<24x1xf32>
    %277 = vector.broadcast %276 : vector<24x1xf32> to vector<24x32xf32>
    %278 = arith.subf %266, %277 : vector<24x32xf32>
    %279 = arith.mulf %278, %278 : vector<24x32xf32>
    %cst_153 = arith.constant dense<0.000000e+00> : vector<24xf32>
    %280 = vector.multi_reduction <add>, %279, %cst_153 [1] : vector<24x32xf32> to vector<24xf32>
    %281 = vector.shape_cast %280 : vector<24xf32> to vector<24x1xf32>
    %cst_154 = arith.constant 3.200000e+01 : f32
    %282 = vector.broadcast %cst_154 : f32 to vector<24x1xf32>
    %283 = arith.divf %281, %282 : vector<24x1xf32>
    %284 = vector.broadcast %276 : vector<24x1xf32> to vector<24x32xf32>
    %285 = arith.subf %266, %284 : vector<24x32xf32>
    %cst_155 = arith.constant 9.99999974E-6 : f32
    %286 = vector.broadcast %cst_155 : f32 to vector<24x1xf32>
    %287 = arith.addf %283, %286 : vector<24x1xf32>
    %288 = math.rsqrt %287 : vector<24x1xf32>
    %289 = vector.broadcast %288 : vector<24x1xf32> to vector<24x32xf32>
    %290 = arith.mulf %285, %289 : vector<24x32xf32>
    %291 = vector.broadcast %269 : vector<1x32xf32> to vector<24x32xf32>
    %292 = arith.mulf %290, %291 : vector<24x32xf32>
    %293 = vector.broadcast %272 : vector<1x32xf32> to vector<24x32xf32>
    %294 = arith.addf %292, %293 : vector<24x32xf32>
    %c1_i32_156 = arith.constant 1 : i32
    %c0_157 = arith.constant 0 : index
    %c0_158 = arith.constant 0 : index
    %c0_159 = arith.constant 0 : index
    %295 = vector.load %arg27[%c0_157, %c0_158, %c0_159] : memref<1x24x32xf32, #tpu.memory_space<vmem>>, vector<1x24x32xf32>
    %296 = vector.shape_cast %295 : vector<1x24x32xf32> to vector<24x32xf32>
    %297 = vector.shape_cast %294 : vector<24x32xf32> to vector<1x24x32xf32>
    tpu.vector_store %arg27[%c0_157, %c0_158, %c0_159], %297 {strides = array<i32>} : memref<1x24x32xf32, #tpu.memory_space<vmem>>, vector<1x24x32xf32>,
    return
  }
  func.func @transform_0(%arg0: i32) -> (i32, i32, i32) {
    %c0_i32 = arith.constant 0 : i32
    %c0_i32_0 = arith.constant 0 : i32
    %c0_i32_1 = arith.constant 0 : i32
    return %arg0, %c0_i32, %c0_i32_0 : i32, i32, i32
  }
  func.func @transform_1(%arg0: i32) -> (i32, i32, i32) {
    %c0_i32 = arith.constant 0 : i32
    %c0_i32_0 = arith.constant 0 : i32
    %c0_i32_1 = arith.constant 0 : i32
    return %arg0, %c0_i32, %c0_i32_0 : i32, i32, i32
  }
  func.func @transform_2(%arg0: i32) -> (i32, i32, i32) {
    %c0_i32 = arith.constant 0 : i32
    %c0_i32_0 = arith.constant 0 : i32
    %c0_i32_1 = arith.constant 0 : i32
    return %arg0, %c0_i32, %c0_i32_0 : i32, i32, i32
  }
  func.func @transform_3(%arg0: i32) -> (i32, i32, i32) {
    %c0_i32 = arith.constant 0 : i32
    %c0_i32_0 = arith.constant 0 : i32
    %c0_i32_1 = arith.constant 0 : i32
    return %arg0, %c0_i32, %c0_i32_0 : i32, i32, i32
  }
  func.func @transform_4(%arg0: i32) -> (i32, i32, i32) {
    %c0_i32 = arith.constant 0 : i32
    %c0_i32_0 = arith.constant 0 : i32
    %c0_i32_1 = arith.constant 0 : i32
    return %arg0, %c0_i32, %c0_i32_0 : i32, i32, i32
  }
  func.func @transform_5(%arg0: i32) -> (i32, i32, i32) {
    %c0_i32 = arith.constant 0 : i32
    %c0_i32_0 = arith.constant 0 : i32
    %c0_i32_1 = arith.constant 0 : i32
    return %arg0, %c0_i32, %c0_i32_0 : i32, i32, i32
  }
  func.func @transform_6(%arg0: i32) -> (i32, i32) {
    %c0_i32 = arith.constant 0 : i32
    %c0_i32_0 = arith.constant 0 : i32
    %c0_i32_1 = arith.constant 0 : i32
    return %c0_i32, %c0_i32_0 : i32, i32
  }
  func.func @transform_7(%arg0: i32) -> (i32, i32) {
    %c0_i32 = arith.constant 0 : i32
    %c0_i32_0 = arith.constant 0 : i32
    %c0_i32_1 = arith.constant 0 : i32
    return %c0_i32, %c0_i32_0 : i32, i32
  }
  func.func @transform_8(%arg0: i32) -> (i32, i32) {
    %c0_i32 = arith.constant 0 : i32
    %c0_i32_0 = arith.constant 0 : i32
    %c0_i32_1 = arith.constant 0 : i32
    return %c0_i32, %c0_i32_0 : i32, i32
  }
  func.func @transform_9(%arg0: i32) -> (i32, i32) {
    %c0_i32 = arith.constant 0 : i32
    %c0_i32_0 = arith.constant 0 : i32
    %c0_i32_1 = arith.constant 0 : i32
    return %c0_i32, %c0_i32_0 : i32, i32
  }
  func.func @transform_10(%arg0: i32) -> (i32, i32) {
    %c0_i32 = arith.constant 0 : i32
    %c0_i32_0 = arith.constant 0 : i32
    %c0_i32_1 = arith.constant 0 : i32
    return %c0_i32, %c0_i32_0 : i32, i32
  }
  func.func @transform_11(%arg0: i32) -> (i32, i32) {
    %c0_i32 = arith.constant 0 : i32
    %c0_i32_0 = arith.constant 0 : i32
    %c0_i32_1 = arith.constant 0 : i32
    return %c0_i32, %c0_i32_0 : i32, i32
  }
  func.func @transform_12(%arg0: i32) -> (i32, i32, i32) {
    %c0_i32 = arith.constant 0 : i32
    %c0_i32_0 = arith.constant 0 : i32
    %c0_i32_1 = arith.constant 0 : i32
    %c0_i32_2 = arith.constant 0 : i32
    return %c0_i32, %c0_i32_0, %c0_i32_1 : i32, i32, i32
  }
  func.func @transform_13(%arg0: i32) -> (i32, i32, i32) {
    %c0_i32 = arith.constant 0 : i32
    %c0_i32_0 = arith.constant 0 : i32
    %c0_i32_1 = arith.constant 0 : i32
    %c0_i32_2 = arith.constant 0 : i32
    return %c0_i32, %c0_i32_0, %c0_i32_1 : i32, i32, i32
  }
  func.func @transform_14(%arg0: i32) -> (i32, i32, i32) {
    %c0_i32 = arith.constant 0 : i32
    %c0_i32_0 = arith.constant 0 : i32
    %c0_i32_1 = arith.constant 0 : i32
    %c0_i32_2 = arith.constant 0 : i32
    return %c0_i32, %c0_i32_0, %c0_i32_1 : i32, i32, i32
  }
  func.func @transform_15(%arg0: i32) -> (i32, i32, i32) {
    %c0_i32 = arith.constant 0 : i32
    %c0_i32_0 = arith.constant 0 : i32
    %c0_i32_1 = arith.constant 0 : i32
    %c0_i32_2 = arith.constant 0 : i32
    return %c0_i32, %c0_i32_0, %c0_i32_1 : i32, i32, i32
  }
  func.func @transform_16(%arg0: i32) -> (i32, i32, i32) {
    %c0_i32 = arith.constant 0 : i32
    %c0_i32_0 = arith.constant 0 : i32
    %c0_i32_1 = arith.constant 0 : i32
    %c0_i32_2 = arith.constant 0 : i32
    return %c0_i32, %c0_i32_0, %c0_i32_1 : i32, i32, i32
  }
  func.func @transform_17(%arg0: i32) -> (i32, i32, i32) {
    %c0_i32 = arith.constant 0 : i32
    %c0_i32_0 = arith.constant 0 : i32
    %c0_i32_1 = arith.constant 0 : i32
    %c0_i32_2 = arith.constant 0 : i32
    return %c0_i32, %c0_i32_0, %c0_i32_1 : i32, i32, i32
  }
  func.func @transform_18(%arg0: i32) -> (i32, i32, i32) {
    %c0_i32 = arith.constant 0 : i32
    %c0_i32_0 = arith.constant 0 : i32
    %c0_i32_1 = arith.constant 0 : i32
    %c0_i32_2 = arith.constant 0 : i32
    return %c0_i32, %c0_i32_0, %c0_i32_1 : i32, i32, i32
  }
  func.func @transform_19(%arg0: i32) -> (i32, i32, i32) {
    %c0_i32 = arith.constant 0 : i32
    %c0_i32_0 = arith.constant 0 : i32
    %c0_i32_1 = arith.constant 0 : i32
    %c0_i32_2 = arith.constant 0 : i32
    return %c0_i32, %c0_i32_0, %c0_i32_1 : i32, i32, i32
  }
  func.func @transform_20(%arg0: i32) -> (i32, i32, i32) {
    %c0_i32 = arith.constant 0 : i32
    %c0_i32_0 = arith.constant 0 : i32
    %c0_i32_1 = arith.constant 0 : i32
    %c0_i32_2 = arith.constant 0 : i32
    return %c0_i32, %c0_i32_0, %c0_i32_1 : i32, i32, i32
  }
  func.func @transform_21(%arg0: i32) -> (i32, i32, i32) {
    %c0_i32 = arith.constant 0 : i32
    %c0_i32_0 = arith.constant 0 : i32
    %c0_i32_1 = arith.constant 0 : i32
    %c0_i32_2 = arith.constant 0 : i32
    return %c0_i32, %c0_i32_0, %c0_i32_1 : i32, i32, i32
  }
  func.func @transform_22(%arg0: i32) -> (i32, i32, i32) {
    %c0_i32 = arith.constant 0 : i32
    %c0_i32_0 = arith.constant 0 : i32
    %c0_i32_1 = arith.constant 0 : i32
    %c0_i32_2 = arith.constant 0 : i32
    return %c0_i32, %c0_i32_0, %c0_i32_1 : i32, i32, i32
  }
  func.func @transform_23(%arg0: i32) -> (i32, i32, i32) {
    %c0_i32 = arith.constant 0 : i32
    %c0_i32_0 = arith.constant 0 : i32
    %c0_i32_1 = arith.constant 0 : i32
    %c0_i32_2 = arith.constant 0 : i32
    return %c0_i32, %c0_i32_0, %c0_i32_1 : i32, i32, i32
  }
  func.func @transform_24(%arg0: i32) -> (i32, i32, i32) {
    %c0_i32 = arith.constant 0 : i32
    %c0_i32_0 = arith.constant 0 : i32
    %c0_i32_1 = arith.constant 0 : i32
    %c0_i32_2 = arith.constant 0 : i32
    return %c0_i32, %c0_i32_0, %c0_i32_1 : i32, i32, i32
  }
  func.func @transform_25(%arg0: i32) -> (i32, i32, i32) {
    %c0_i32 = arith.constant 0 : i32
    %c0_i32_0 = arith.constant 0 : i32
    %c0_i32_1 = arith.constant 0 : i32
    %c0_i32_2 = arith.constant 0 : i32
    return %c0_i32, %c0_i32_0, %c0_i32_1 : i32, i32, i32
  }
  func.func @transform_26(%arg0: i32) -> (i32, i32, i32) {
    %c0_i32 = arith.constant 0 : i32
    %c0_i32_0 = arith.constant 0 : i32
    %c0_i32_1 = arith.constant 0 : i32
    return %arg0, %c0_i32, %c0_i32_0 : i32, i32, i32
  }
  func.func @transform_27(%arg0: i32) -> (i32, i32, i32, i32) {
    %c0_i32 = arith.constant 0 : i32
    %c0_i32_0 = arith.constant 0 : i32
    %c0_i32_1 = arith.constant 0 : i32
    %c0_i32_2 = arith.constant 0 : i32
    return %arg0, %c0_i32, %c0_i32_0, %c0_i32_1 : i32, i32, i32, i32
  }
}

</mosaic_0001>

<llo_original>
// kernel: _encoder_forward_fused.1
$region0: #{_encoder_forward_fused.1}
  #allocation0 [shape = 'u32[]', space=smem, size = 0x4, offset = 0x4, fixed_abs, tag = 'smem constant byte address 0x4 - core index']
  #allocation1 [shape = 'u32[72,128]{1,0:T(1,128)}', space=vmem, size = 0x9000, scoped, tag = 'internal scratch']
  %s0 = inlined_call_operand.vmem [shape: f32[2,24,32], index: 0, kind: input, shape index: {}]
  %s1 = inlined_call_operand.vmem [shape: f32[2,24,32], index: 1, kind: input, shape index: {}]
  %s2 = inlined_call_operand.vmem [shape: f32[2,24,32], index: 2, kind: input, shape index: {}]
  %s3 = inlined_call_operand.vmem [shape: f32[2,24,32], index: 3, kind: input, shape index: {}]
  %s4 = inlined_call_operand.vmem [shape: f32[2,24,2], index: 4, kind: input, shape index: {}]
  %s5 = inlined_call_operand.vmem [shape: f32[2,24,2], index: 5, kind: input, shape index: {}]
  %s6 = inlined_call_operand.vmem [shape: f32[4,64], index: 6, kind: input, shape index: {}]
  %s7 = inlined_call_operand.vmem [shape: f32[32,384], index: 7, kind: input, shape index: {}]
  %s8 = inlined_call_operand.vmem [shape: f32[32,384], index: 8, kind: input, shape index: {}]
  %s9 = inlined_call_operand.vmem [shape: f32[1,384], index: 9, kind: input, shape index: {}]
  %s10 = inlined_call_operand.vmem [shape: f32[384,96], index: 10, kind: input, shape index: {}]
  %s11 = inlined_call_operand.vmem [shape: f32[96,32], index: 11, kind: input, shape index: {}]
  %s12 = inlined_call_operand.vmem [shape: f32[2,64,128], index: 12, kind: input, shape index: {}]
  %s13 = inlined_call_operand.vmem [shape: f32[2,1,128], index: 13, kind: input, shape index: {}]
  %s14 = inlined_call_operand.vmem [shape: f32[2,32,32], index: 14, kind: input, shape index: {}]
  %s15 = inlined_call_operand.vmem [shape: f32[2,1,32], index: 15, kind: input, shape index: {}]
  %s16 = inlined_call_operand.vmem [shape: f32[2,32,32], index: 16, kind: input, shape index: {}]
  %s17 = inlined_call_operand.vmem [shape: f32[2,1,32], index: 17, kind: input, shape index: {}]
  %s18 = inlined_call_operand.vmem [shape: f32[2,1,32], index: 18, kind: input, shape index: {}]
  %s19 = inlined_call_operand.vmem [shape: f32[2,1,32], index: 19, kind: input, shape index: {}]
  %s20 = inlined_call_operand.vmem [shape: f32[2,32,64], index: 20, kind: input, shape index: {}]
  %s21 = inlined_call_operand.vmem [shape: f32[2,1,64], index: 21, kind: input, shape index: {}]
  %s22 = inlined_call_operand.vmem [shape: f32[2,64,32], index: 22, kind: input, shape index: {}]
  %s23 = inlined_call_operand.vmem [shape: f32[2,1,32], index: 23, kind: input, shape index: {}]
  %s24 = inlined_call_operand.vmem [shape: f32[2,1,32], index: 24, kind: input, shape index: {}]
  %s25 = inlined_call_operand.vmem [shape: f32[2,1,32], index: 25, kind: input, shape index: {}]
  %s26 = inlined_call_operand.hbm [shape: f32[2,24,32], index: 26, kind: output, shape index: {0}]
  %s27 = inlined_call_operand.vmem [shape: f32[2,2,24,128], index: 27, kind: output, shape index: {1}]
  %28 = xla_tuple %s26, %s27
  %s29 = sld [smem:[#allocation0]]
  $region145: #{_encoder_forward_fused.1} parent=0
    _
  %s31 = ssub.s32 1, %s29
  %s32 = scalar_select 0, %s31, %s29
  $region1: #{_encoder_forward_fused.1} parent=0
    #allocation2 [shape = 'u8[24576]{0}', space=vmem, size = 0x6000, scoped, tag = 'output window, operand 0']
    #allocation3 [shape = 's32[2]{0}', space=sflag, size = 0x8, scoped, tag = 'scoped memory for _encoder_forward_fused.1']
    %33 = vsyncpa [#allocation3], 0
    %s34 = scalar_lea.sflag [#allocation3], 1
    %35 = vsyncpa %s34, 0
    loop: start=0, step=1, limit=4
    $region2: #{_encoder_forward_fused.1} parent=1 // loop_pre_header
      _
    $region3: #{_encoder_forward_fused.1} parent=1 // loop_header
      %s37 = sphi 0, %s41
      %p38 = scmp.ge.s32.totalorder %s37, 4
      %s47 = sphi 0, %s49
      %s50 = sphi 0, %s47
      %s51 = sphi 0, %s50
      %s67 = sphi 0, %s51
      %s73 = sphi 0, %s75
      %s76 = sphi 0, %s73
      %s77 = sphi 0, %s76
      %s93 = sphi 0, %s77
      %s99 = sphi 0, %s101
      %s102 = sphi 0, %s99
      %s103 = sphi 0, %s102
      %s119 = sphi 0, %s103
      %s125 = sphi 0, %s127
      %s128 = sphi 0, %s125
      %s129 = sphi 0, %s128
      %s145 = sphi 0, %s129
      %s151 = sphi 0, %s153
      %s154 = sphi 0, %s151
      %s155 = sphi 0, %s154
      %s171 = sphi 0, %s155
      %s177 = sphi 0, %s179
      %s180 = sphi 0, %s177
      %s181 = sphi 0, %s180
      %s197 = sphi 0, %s181
      %s201 = sphi 0, %s201
      %s203 = sphi 0, %s201
      %s204 = sphi 0, %s203
      %s218 = sphi 0, %s204
      %s222 = sphi 0, %s222
      %s224 = sphi 0, %s222
      %s225 = sphi 0, %s224
      %s239 = sphi 0, %s225
      %s243 = sphi 0, %s243
      %s245 = sphi 0, %s243
      %s246 = sphi 0, %s245
      %s260 = sphi 0, %s246
      %s264 = sphi 0, %s264
      %s266 = sphi 0, %s264
      %s267 = sphi 0, %s266
      %s281 = sphi 0, %s267
      %s285 = sphi 0, %s285
      %s287 = sphi 0, %s285
      %s288 = sphi 0, %s287
      %s302 = sphi 0, %s288
      %s306 = sphi 0, %s306
      %s308 = sphi 0, %s306
      %s309 = sphi 0, %s308
      %s323 = sphi 0, %s309
      %s327 = sphi 0, %s327
      %s329 = sphi 0, %s327
      %s330 = sphi 0, %s329
      %s344 = sphi 0, %s330
      %s348 = sphi 0, %s348
      %s350 = sphi 0, %s348
      %s351 = sphi 0, %s350
      %s365 = sphi 0, %s351
      %s369 = sphi 0, %s369
      %s371 = sphi 0, %s369
      %s372 = sphi 0, %s371
      %s386 = sphi 0, %s372
      %s390 = sphi 0, %s390
      %s392 = sphi 0, %s390
      %s393 = sphi 0, %s392
      %s407 = sphi 0, %s393
      %s411 = sphi 0, %s411
      %s413 = sphi 0, %s411
      %s414 = sphi 0, %s413
      %s428 = sphi 0, %s414
      %s432 = sphi 0, %s432
      %s434 = sphi 0, %s432
      %s435 = sphi 0, %s434
      %s449 = sphi 0, %s435
      %s453 = sphi 0, %s453
      %s455 = sphi 0, %s453
      %s456 = sphi 0, %s455
      %s470 = sphi 0, %s456
      %s474 = sphi 0, %s474
      %s476 = sphi 0, %s474
      %s477 = sphi 0, %s476
      %s491 = sphi 0, %s477
      %s495 = sphi 0, %s495
      %s497 = sphi 0, %s495
      %s498 = sphi 0, %s497
      %s512 = sphi 0, %s498
      %s516 = sphi 0, %s516
      %s518 = sphi 0, %s516
      %s519 = sphi 0, %s518
      %s533 = sphi 0, %s519
      %s537 = sphi 0, %s537
      %s539 = sphi 0, %s537
      %s540 = sphi 0, %s539
      %s554 = sphi 0, %s540
      %s558 = sphi 0, %s558
      %s560 = sphi 0, %s558
      %s561 = sphi 0, %s560
      %s575 = sphi 0, %s561
      %s579 = sphi 0, %s579
      %s581 = sphi 0, %s579
      %s582 = sphi 0, %s581
      %s596 = sphi 0, %s582
      %s600 = sphi 0, %s600
      %s602 = sphi 0, %s600
      %s603 = sphi 0, %s602
      %s617 = sphi 0, %s603
      %s623 = sphi 0, %s625
      %s626 = sphi 0, %s623
      %s627 = sphi 0, %s626
      %s643 = sphi 0, %s627
      %s649 = sphi 0, %s651
      %s652 = sphi 0, %s649
      %s653 = sphi 0, %s652
      %s669 = sphi 0, %s653
    $region4: #{_encoder_forward_fused.1} parent=1 // loop_header_branch
      %40 = sbr.rel (%p38) target = $region8
    $region5: #{_encoder_forward_fused.1} parent=1 // loop_body
      %s42 = ssub.s32 %s37, 1
      %s43 = ssub.s32 %s37, 2
      %s44 = sadd.s32 %s37, 1
      %s45 = ssub.s32 %s37, %s44
      %p46 = scmp.eq.s32.totalorder %s45, 0
      %s48 = sadd.s32 %s47, 1
      %s49 = scalar_select %p46, %s47, %s48
      %p52 = pneg %p46
      %p53 = scmp.eq.s32.totalorder %s37, 1
      %p54 = por %p52, %p53
      %p55 = scmp.ne.s32.totalorder %s47, %s50
      %p56 = scmp.eq.s32.totalorder %s37, 0
      %p57 = por %p55, %p56
      %p58 = scmp.ne.s32.totalorder %s47, %s50
      %p59 = scmp.eq.s32.totalorder %s42, 1
      %p60 = por %p58, %p59
      %p61 = scmp.ne.s32.totalorder %s50, %s51
      %p62 = scmp.eq.s32.totalorder %s42, 0
      %p63 = por %p61, %p62
      %p64 = scmp.ne.s32.totalorder %s50, %s51
      %p65 = scmp.eq.s32.totalorder %s43, 1
      %p66 = por %p64, %p65
      %p68 = scmp.ne.s32.totalorder %s51, %s67
      %p69 = scmp.eq.s32.totalorder %s43, 0
      %p70 = por %p68, %p69
      %s71 = ssub.s32 %s37, %s44
      %p72 = scmp.eq.s32.totalorder %s71, 0
      %s74 = sadd.s32 %s73, 1
      %s75 = scalar_select %p72, %s73, %s74
      %p78 = pneg %p72
      %p79 = scmp.eq.s32.totalorder %s37, 1
      %p80 = por %p78, %p79
      %p81 = scmp.ne.s32.totalorder %s73, %s76
      %p82 = scmp.eq.s32.totalorder %s37, 0
      %p83 = por %p81, %p82
      %p84 = scmp.ne.s32.totalorder %s73, %s76
      %p85 = scmp.eq.s32.totalorder %s42, 1
      %p86 = por %p84, %p85
      %p87 = scmp.ne.s32.totalorder %s76, %s77
      %p88 = scmp.eq.s32.totalorder %s42, 0
      %p89 = por %p87, %p88
      %p90 = scmp.ne.s32.totalorder %s76, %s77
      %p91 = scmp.eq.s32.totalorder %s43, 1
      %p92 = por %p90, %p91
      %p94 = scmp.ne.s32.totalorder %s77, %s93
      %p95 = scmp.eq.s32.totalorder %s43, 0
      %p96 = por %p94, %p95
      %s97 = ssub.s32 %s37, %s44
      %p98 = scmp.eq.s32.totalorder %s97, 0
      %s100 = sadd.s32 %s99, 1
      %s101 = scalar_select %p98, %s99, %s100
      %p104 = pneg %p98
      %p105 = scmp.eq.s32.totalorder %s37, 1
      %p106 = por %p104, %p105
      %p107 = scmp.ne.s32.totalorder %s99, %s102
      %p108 = scmp.eq.s32.totalorder %s37, 0
      %p109 = por %p107, %p108
      %p110 = scmp.ne.s32.totalorder %s99, %s102
      %p111 = scmp.eq.s32.totalorder %s42, 1
      %p112 = por %p110, %p111
      %p113 = scmp.ne.s32.totalorder %s102, %s103
      %p114 = scmp.eq.s32.totalorder %s42, 0
      %p115 = por %p113, %p114
      %p116 = scmp.ne.s32.totalorder %s102, %s103
      %p117 = scmp.eq.s32.totalorder %s43, 1
      %p118 = por %p116, %p117
      %p120 = scmp.ne.s32.totalorder %s103, %s119
      %p121 = scmp.eq.s32.totalorder %s43, 0
      %p122 = por %p120, %p121
      %s123 = ssub.s32 %s37, %s44
      %p124 = scmp.eq.s32.totalorder %s123, 0
      %s126 = sadd.s32 %s125, 1
      %s127 = scalar_select %p124, %s125, %s126
      %p130 = pneg %p124
      %p131 = scmp.eq.s32.totalorder %s37, 1
      %p132 = por %p130, %p131
      %p133 = scmp.ne.s32.totalorder %s125, %s128
      %p134 = scmp.eq.s32.totalorder %s37, 0
      %p135 = por %p133, %p134
      %p136 = scmp.ne.s32.totalorder %s125, %s128
      %p137 = scmp.eq.s32.totalorder %s42, 1
      %p138 = por %p136, %p137
      %p139 = scmp.ne.s32.totalorder %s128, %s129
      %p140 = scmp.eq.s32.totalorder %s42, 0
      %p141 = por %p139, %p140
      %p142 = scmp.ne.s32.totalorder %s128, %s129
      %p143 = scmp.eq.s32.totalorder %s43, 1
      %p144 = por %p142, %p143
      %p146 = scmp.ne.s32.totalorder %s129, %s145
      %p147 = scmp.eq.s32.totalorder %s43, 0
      %p148 = por %p146, %p147
      %s149 = ssub.s32 %s37, %s44
      %p150 = scmp.eq.s32.totalorder %s149, 0
      %s152 = sadd.s32 %s151, 1
      %s153 = scalar_select %p150, %s151, %s152
      %p156 = pneg %p150
      %p157 = scmp.eq.s32.totalorder %s37, 1
      %p158 = por %p156, %p157
      %p159 = scmp.ne.s32.totalorder %s151, %s154
      %p160 = scmp.eq.s32.totalorder %s37, 0
      %p161 = por %p159, %p160
      %p162 = scmp.ne.s32.totalorder %s151, %s154
      %p163 = scmp.eq.s32.totalorder %s42, 1
      %p164 = por %p162, %p163
      %p165 = scmp.ne.s32.totalorder %s154, %s155
      %p166 = scmp.eq.s32.totalorder %s42, 0
      %p167 = por %p165, %p166
      %p168 = scmp.ne.s32.totalorder %s154, %s155
      %p169 = scmp.eq.s32.totalorder %s43, 1
      %p170 = por %p168, %p169
      %p172 = scmp.ne.s32.totalorder %s155, %s171
      %p173 = scmp.eq.s32.totalorder %s43, 0
      %p174 = por %p172, %p173
      %s175 = ssub.s32 %s37, %s44
      %p176 = scmp.eq.s32.totalorder %s175, 0
      %s178 = sadd.s32 %s177, 1
      %s179 = scalar_select %p176, %s177, %s178
      %p182 = pneg %p176
      %p183 = scmp.eq.s32.totalorder %s37, 1
      %p184 = por %p182, %p183
      %p185 = scmp.ne.s32.totalorder %s177, %s180
      %p186 = scmp.eq.s32.totalorder %s37, 0
      %p187 = por %p185, %p186
      %p188 = scmp.ne.s32.totalorder %s177, %s180
      %p189 = scmp.eq.s32.totalorder %s42, 1
      %p190 = por %p188, %p189
      %p191 = scmp.ne.s32.totalorder %s180, %s181
      %p192 = scmp.eq.s32.totalorder %s42, 0
      %p193 = por %p191, %p192
      %p194 = scmp.ne.s32.totalorder %s180, %s181
      %p195 = scmp.eq.s32.totalorder %s43, 1
      %p196 = por %p194, %p195
      %p198 = scmp.ne.s32.totalorder %s181, %s197
      %p199 = scmp.eq.s32.totalorder %s43, 0
      %p200 = por %p198, %p199
      %s202 = sadd.s32 %s201, 1
      %p205 = scmp.eq.s32.totalorder %s37, 1
      %p206 = scmp.ne.s32.totalorder %s201, %s203
      %p207 = scmp.eq.s32.totalorder %s37, 0
      %p208 = por %p206, %p207
      %p209 = scmp.ne.s32.totalorder %s201, %s203
      %p210 = scmp.eq.s32.totalorder %s42, 1
      %p211 = por %p209, %p210
      %p212 = scmp.ne.s32.totalorder %s203, %s204
      %p213 = scmp.eq.s32.totalorder %s42, 0
      %p214 = por %p212, %p213
      %p215 = scmp.ne.s32.totalorder %s203, %s204
      %p216 = scmp.eq.s32.totalorder %s43, 1
      %p217 = por %p215, %p216
      %p219 = scmp.ne.s32.totalorder %s204, %s218
      %p220 = scmp.eq.s32.totalorder %s43, 0
      %p221 = por %p219, %p220
      %s223 = sadd.s32 %s222, 1
      %p226 = scmp.eq.s32.totalorder %s37, 1
      %p227 = scmp.ne.s32.totalorder %s222, %s224
      %p228 = scmp.eq.s32.totalorder %s37, 0
      %p229 = por %p227, %p228
      %p230 = scmp.ne.s32.totalorder %s222, %s224
      %p231 = scmp.eq.s32.totalorder %s42, 1
      %p232 = por %p230, %p231
      %p233 = scmp.ne.s32.totalorder %s224, %s225
      %p234 = scmp.eq.s32.totalorder %s42, 0
      %p235 = por %p233, %p234
      %p236 = scmp.ne.s32.totalorder %s224, %s225
      %p237 = scmp.eq.s32.totalorder %s43, 1
      %p238 = por %p236, %p237
      %p240 = scmp.ne.s32.totalorder %s225, %s239
      %p241 = scmp.eq.s32.totalorder %s43, 0
      %p242 = por %p240, %p241
      %s244 = sadd.s32 %s243, 1
      %p247 = scmp.eq.s32.totalorder %s37, 1
      %p248 = scmp.ne.s32.totalorder %s243, %s245
      %p249 = scmp.eq.s32.totalorder %s37, 0
      %p250 = por %p248, %p249
      %p251 = scmp.ne.s32.totalorder %s243, %s245
      %p252 = scmp.eq.s32.totalorder %s42, 1
      %p253 = por %p251, %p252
      %p254 = scmp.ne.s32.totalorder %s245, %s246
      %p255 = scmp.eq.s32.totalorder %s42, 0
      %p256 = por %p254, %p255
      %p257 = scmp.ne.s32.totalorder %s245, %s246
      %p258 = scmp.eq.s32.totalorder %s43, 1
      %p259 = por %p257, %p258
      %p261 = scmp.ne.s32.totalorder %s246, %s260
      %p262 = scmp.eq.s32.totalorder %s43, 0
      %p263 = por %p261, %p262
      %s265 = sadd.s32 %s264, 1
      %p268 = scmp.eq.s32.totalorder %s37, 1
      %p269 = scmp.ne.s32.totalorder %s264, %s266
      %p270 = scmp.eq.s32.totalorder %s37, 0
      %p271 = por %p269, %p270
      %p272 = scmp.ne.s32.totalorder %s264, %s266
      %p273 = scmp.eq.s32.totalorder %s42, 1
      %p274 = por %p272, %p273
      %p275 = scmp.ne.s32.totalorder %s266, %s267
      %p276 = scmp.eq.s32.totalorder %s42, 0
      %p277 = por %p275, %p276
      %p278 = scmp.ne.s32.totalorder %s266, %s267
      %p279 = scmp.eq.s32.totalorder %s43, 1
      %p280 = por %p278, %p279
      %p282 = scmp.ne.s32.totalorder %s267, %s281
      %p283 = scmp.eq.s32.totalorder %s43, 0
      %p284 = por %p282, %p283
      %s286 = sadd.s32 %s285, 1
      %p289 = scmp.eq.s32.totalorder %s37, 1
      %p290 = scmp.ne.s32.totalorder %s285, %s287
      %p291 = scmp.eq.s32.totalorder %s37, 0
      %p292 = por %p290, %p291
      %p293 = scmp.ne.s32.totalorder %s285, %s287
      %p294 = scmp.eq.s32.totalorder %s42, 1
      %p295 = por %p293, %p294
      %p296 = scmp.ne.s32.totalorder %s287, %s288
      %p297 = scmp.eq.s32.totalorder %s42, 0
      %p298 = por %p296, %p297
      %p299 = scmp.ne.s32.totalorder %s287, %s288
      %p300 = scmp.eq.s32.totalorder %s43, 1
      %p301 = por %p299, %p300
      %p303 = scmp.ne.s32.totalorder %s288, %s302
      %p304 = scmp.eq.s32.totalorder %s43, 0
      %p305 = por %p303, %p304
      %s307 = sadd.s32 %s306, 1
      %p310 = scmp.eq.s32.totalorder %s37, 1
      %p311 = scmp.ne.s32.totalorder %s306, %s308
      %p312 = scmp.eq.s32.totalorder %s37, 0
      %p313 = por %p311, %p312
      %p314 = scmp.ne.s32.totalorder %s306, %s308
      %p315 = scmp.eq.s32.totalorder %s42, 1
      %p316 = por %p314, %p315
      %p317 = scmp.ne.s32.totalorder %s308, %s309
      %p318 = scmp.eq.s32.totalorder %s42, 0
      %p319 = por %p317, %p318
      %p320 = scmp.ne.s32.totalorder %s308, %s309
      %p321 = scmp.eq.s32.totalorder %s43, 1
      %p322 = por %p320, %p321
      %p324 = scmp.ne.s32.totalorder %s309, %s323
      %p325 = scmp.eq.s32.totalorder %s43, 0
      %p326 = por %p324, %p325
      %s328 = sadd.s32 %s327, 1
      %p331 = scmp.eq.s32.totalorder %s37, 1
      %p332 = scmp.ne.s32.totalorder %s327, %s329
      %p333 = scmp.eq.s32.totalorder %s37, 0
      %p334 = por %p332, %p333
      %p335 = scmp.ne.s32.totalorder %s327, %s329
      %p336 = scmp.eq.s32.totalorder %s42, 1
      %p337 = por %p335, %p336
      %p338 = scmp.ne.s32.totalorder %s329, %s330
      %p339 = scmp.eq.s32.totalorder %s42, 0
      %p340 = por %p338, %p339
      %p341 = scmp.ne.s32.totalorder %s329, %s330
      %p342 = scmp.eq.s32.totalorder %s43, 1
      %p343 = por %p341, %p342
      %p345 = scmp.ne.s32.totalorder %s330, %s344
      %p346 = scmp.eq.s32.totalorder %s43, 0
      %p347 = por %p345, %p346
      %s349 = sadd.s32 %s348, 1
      %p352 = scmp.eq.s32.totalorder %s37, 1
      %p353 = scmp.ne.s32.totalorder %s348, %s350
      %p354 = scmp.eq.s32.totalorder %s37, 0
      %p355 = por %p353, %p354
      %p356 = scmp.ne.s32.totalorder %s348, %s350
      %p357 = scmp.eq.s32.totalorder %s42, 1
      %p358 = por %p356, %p357
      %p359 = scmp.ne.s32.totalorder %s350, %s351
      %p360 = scmp.eq.s32.totalorder %s42, 0
      %p361 = por %p359, %p360
      %p362 = scmp.ne.s32.totalorder %s350, %s351
      %p363 = scmp.eq.s32.totalorder %s43, 1
      %p364 = por %p362, %p363
      %p366 = scmp.ne.s32.totalorder %s351, %s365
      %p367 = scmp.eq.s32.totalorder %s43, 0
      %p368 = por %p366, %p367
      %s370 = sadd.s32 %s369, 1
      %p373 = scmp.eq.s32.totalorder %s37, 1
      %p374 = scmp.ne.s32.totalorder %s369, %s371
      %p375 = scmp.eq.s32.totalorder %s37, 0
      %p376 = por %p374, %p375
      %p377 = scmp.ne.s32.totalorder %s369, %s371
      %p378 = scmp.eq.s32.totalorder %s42, 1
      %p379 = por %p377, %p378
      %p380 = scmp.ne.s32.totalorder %s371, %s372
      %p381 = scmp.eq.s32.totalorder %s42, 0
      %p382 = por %p380, %p381
      %p383 = scmp.ne.s32.totalorder %s371, %s372
      %p384 = scmp.eq.s32.totalorder %s43, 1
      %p385 = por %p383, %p384
      %p387 = scmp.ne.s32.totalorder %s372, %s386
      %p388 = scmp.eq.s32.totalorder %s43, 0
      %p389 = por %p387, %p388
      %s391 = sadd.s32 %s390, 1
      %p394 = scmp.eq.s32.totalorder %s37, 1
      %p395 = scmp.ne.s32.totalorder %s390, %s392
      %p396 = scmp.eq.s32.totalorder %s37, 0
      %p397 = por %p395, %p396
      %p398 = scmp.ne.s32.totalorder %s390, %s392
      %p399 = scmp.eq.s32.totalorder %s42, 1
      %p400 = por %p398, %p399
      %p401 = scmp.ne.s32.totalorder %s392, %s393
      %p402 = scmp.eq.s32.totalorder %s42, 0
      %p403 = por %p401, %p402
      %p404 = scmp.ne.s32.totalorder %s392, %s393
      %p405 = scmp.eq.s32.totalorder %s43, 1
      %p406 = por %p404, %p405
      %p408 = scmp.ne.s32.totalorder %s393, %s407
      %p409 = scmp.eq.s32.totalorder %s43, 0
      %p410 = por %p408, %p409
      %s412 = sadd.s32 %s411, 1
      %p415 = scmp.eq.s32.totalorder %s37, 1
      %p416 = scmp.ne.s32.totalorder %s411, %s413
      %p417 = scmp.eq.s32.totalorder %s37, 0
      %p418 = por %p416, %p417
      %p419 = scmp.ne.s32.totalorder %s411, %s413
      %p420 = scmp.eq.s32.totalorder %s42, 1
      %p421 = por %p419, %p420
      %p422 = scmp.ne.s32.totalorder %s413, %s414
      %p423 = scmp.eq.s32.totalorder %s42, 0
      %p424 = por %p422, %p423
      %p425 = scmp.ne.s32.totalorder %s413, %s414
      %p426 = scmp.eq.s32.totalorder %s43, 1
      %p427 = por %p425, %p426
      %p429 = scmp.ne.s32.totalorder %s414, %s428
      %p430 = scmp.eq.s32.totalorder %s43, 0
      %p431 = por %p429, %p430
      %s433 = sadd.s32 %s432, 1
      %p436 = scmp.eq.s32.totalorder %s37, 1
      %p437 = scmp.ne.s32.totalorder %s432, %s434
      %p438 = scmp.eq.s32.totalorder %s37, 0
      %p439 = por %p437, %p438
      %p440 = scmp.ne.s32.totalorder %s432, %s434
      %p441 = scmp.eq.s32.totalorder %s42, 1
      %p442 = por %p440, %p441
      %p443 = scmp.ne.s32.totalorder %s434, %s435
      %p444 = scmp.eq.s32.totalorder %s42, 0
      %p445 = por %p443, %p444
      %p446 = scmp.ne.s32.totalorder %s434, %s435
      %p447 = scmp.eq.s32.totalorder %s43, 1
      %p448 = por %p446, %p447
      %p450 = scmp.ne.s32.totalorder %s435, %s449
      %p451 = scmp.eq.s32.totalorder %s43, 0
      %p452 = por %p450, %p451
      %s454 = sadd.s32 %s453, 1
      %p457 = scmp.eq.s32.totalorder %s37, 1
      %p458 = scmp.ne.s32.totalorder %s453, %s455
      %p459 = scmp.eq.s32.totalorder %s37, 0
      %p460 = por %p458, %p459
      %p461 = scmp.ne.s32.totalorder %s453, %s455
      %p462 = scmp.eq.s32.totalorder %s42, 1
      %p463 = por %p461, %p462
      %p464 = scmp.ne.s32.totalorder %s455, %s456
      %p465 = scmp.eq.s32.totalorder %s42, 0
      %p466 = por %p464, %p465
      %p467 = scmp.ne.s32.totalorder %s455, %s456
      %p468 = scmp.eq.s32.totalorder %s43, 1
      %p469 = por %p467, %p468
      %p471 = scmp.ne.s32.totalorder %s456, %s470
      %p472 = scmp.eq.s32.totalorder %s43, 0
      %p473 = por %p471, %p472
      %s475 = sadd.s32 %s474, 1
      %p478 = scmp.eq.s32.totalorder %s37, 1
      %p479 = scmp.ne.s32.totalorder %s474, %s476
      %p480 = scmp.eq.s32.totalorder %s37, 0
      %p481 = por %p479, %p480
      %p482 = scmp.ne.s32.totalorder %s474, %s476
      %p483 = scmp.eq.s32.totalorder %s42, 1
      %p484 = por %p482, %p483
      %p485 = scmp.ne.s32.totalorder %s476, %s477
      %p486 = scmp.eq.s32.totalorder %s42, 0
      %p487 = por %p485, %p486
      %p488 = scmp.ne.s32.totalorder %s476, %s477
      %p489 = scmp.eq.s32.totalorder %s43, 1
      %p490 = por %p488, %p489
      %p492 = scmp.ne.s32.totalorder %s477, %s491
      %p493 = scmp.eq.s32.totalorder %s43, 0
      %p494 = por %p492, %p493
      %s496 = sadd.s32 %s495, 1
      %p499 = scmp.eq.s32.totalorder %s37, 1
      %p500 = scmp.ne.s32.totalorder %s495, %s497
      %p501 = scmp.eq.s32.totalorder %s37, 0
      %p502 = por %p500, %p501
      %p503 = scmp.ne.s32.totalorder %s495, %s497
      %p504 = scmp.eq.s32.totalorder %s42, 1
      %p505 = por %p503, %p504
      %p506 = scmp.ne.s32.totalorder %s497, %s498
      %p507 = scmp.eq.s32.totalorder %s42, 0
      %p508 = por %p506, %p507
      %p509 = scmp.ne.s32.totalorder %s497, %s498
      %p510 = scmp.eq.s32.totalorder %s43, 1
      %p511 = por %p509, %p510
      %p513 = scmp.ne.s32.totalorder %s498, %s512
      %p514 = scmp.eq.s32.totalorder %s43, 0
      %p515 = por %p513, %p514
      %s517 = sadd.s32 %s516, 1
      %p520 = scmp.eq.s32.totalorder %s37, 1
      %p521 = scmp.ne.s32.totalorder %s516, %s518
      %p522 = scmp.eq.s32.totalorder %s37, 0
      %p523 = por %p521, %p522
      %p524 = scmp.ne.s32.totalorder %s516, %s518
      %p525 = scmp.eq.s32.totalorder %s42, 1
      %p526 = por %p524, %p525
      %p527 = scmp.ne.s32.totalorder %s518, %s519
      %p528 = scmp.eq.s32.totalorder %s42, 0
      %p529 = por %p527, %p528
      %p530 = scmp.ne.s32.totalorder %s518, %s519
      %p531 = scmp.eq.s32.totalorder %s43, 1
      %p532 = por %p530, %p531
      %p534 = scmp.ne.s32.totalorder %s519, %s533
      %p535 = scmp.eq.s32.totalorder %s43, 0
      %p536 = por %p534, %p535
      %s538 = sadd.s32 %s537, 1
      %p541 = scmp.eq.s32.totalorder %s37, 1
      %p542 = scmp.ne.s32.totalorder %s537, %s539
      %p543 = scmp.eq.s32.totalorder %s37, 0
      %p544 = por %p542, %p543
      %p545 = scmp.ne.s32.totalorder %s537, %s539
      %p546 = scmp.eq.s32.totalorder %s42, 1
      %p547 = por %p545, %p546
      %p548 = scmp.ne.s32.totalorder %s539, %s540
      %p549 = scmp.eq.s32.totalorder %s42, 0
      %p550 = por %p548, %p549
      %p551 = scmp.ne.s32.totalorder %s539, %s540
      %p552 = scmp.eq.s32.totalorder %s43, 1
      %p553 = por %p551, %p552
      %p555 = scmp.ne.s32.totalorder %s540, %s554
      %p556 = scmp.eq.s32.totalorder %s43, 0
      %p557 = por %p555, %p556
      %s559 = sadd.s32 %s558, 1
      %p562 = scmp.eq.s32.totalorder %s37, 1
      %p563 = scmp.ne.s32.totalorder %s558, %s560
      %p564 = scmp.eq.s32.totalorder %s37, 0
      %p565 = por %p563, %p564
      %p566 = scmp.ne.s32.totalorder %s558, %s560
      %p567 = scmp.eq.s32.totalorder %s42, 1
      %p568 = por %p566, %p567
      %p569 = scmp.ne.s32.totalorder %s560, %s561
      %p570 = scmp.eq.s32.totalorder %s42, 0
      %p571 = por %p569, %p570
      %p572 = scmp.ne.s32.totalorder %s560, %s561
      %p573 = scmp.eq.s32.totalorder %s43, 1
      %p574 = por %p572, %p573
      %p576 = scmp.ne.s32.totalorder %s561, %s575
      %p577 = scmp.eq.s32.totalorder %s43, 0
      %p578 = por %p576, %p577
      %s580 = sadd.s32 %s579, 1
      %p583 = scmp.eq.s32.totalorder %s37, 1
      %p584 = scmp.ne.s32.totalorder %s579, %s581
      %p585 = scmp.eq.s32.totalorder %s37, 0
      %p586 = por %p584, %p585
      %p587 = scmp.ne.s32.totalorder %s579, %s581
      %p588 = scmp.eq.s32.totalorder %s42, 1
      %p589 = por %p587, %p588
      %p590 = scmp.ne.s32.totalorder %s581, %s582
      %p591 = scmp.eq.s32.totalorder %s42, 0
      %p592 = por %p590, %p591
      %p593 = scmp.ne.s32.totalorder %s581, %s582
      %p594 = scmp.eq.s32.totalorder %s43, 1
      %p595 = por %p593, %p594
      %p597 = scmp.ne.s32.totalorder %s582, %s596
      %p598 = scmp.eq.s32.totalorder %s43, 0
      %p599 = por %p597, %p598
      %s601 = sadd.s32 %s600, 1
      %p604 = scmp.eq.s32.totalorder %s37, 1
      %p605 = scmp.ne.s32.totalorder %s600, %s602
      %p606 = scmp.eq.s32.totalorder %s37, 0
      %p607 = por %p605, %p606
      %p608 = scmp.ne.s32.totalorder %s600, %s602
      %p609 = scmp.eq.s32.totalorder %s42, 1
      %p610 = por %p608, %p609
      %p611 = scmp.ne.s32.totalorder %s602, %s603
      %p612 = scmp.eq.s32.totalorder %s42, 0
      %p613 = por %p611, %p612
      %p614 = scmp.ne.s32.totalorder %s602, %s603
      %p615 = scmp.eq.s32.totalorder %s43, 1
      %p616 = por %p614, %p615
      %p618 = scmp.ne.s32.totalorder %s603, %s617
      %p619 = scmp.eq.s32.totalorder %s43, 0
      %p620 = por %p618, %p619
      %s621 = ssub.s32 %s37, %s44
      %p622 = scmp.eq.s32.totalorder %s621, 0
      %s624 = sadd.s32 %s623, 1
      %s625 = scalar_select %p622, %s623, %s624
      %p628 = pneg %p622
      %p629 = scmp.eq.s32.totalorder %s37, 1
      %p630 = por %p628, %p629
      %p631 = scmp.ne.s32.totalorder %s623, %s626
      %p632 = scmp.eq.s32.totalorder %s37, 0
      %p633 = por %p631, %p632
      %p634 = scmp.ne.s32.totalorder %s623, %s626
      %p635 = scmp.eq.s32.totalorder %s42, 1
      %p636 = por %p634, %p635
      %p637 = scmp.ne.s32.totalorder %s626, %s627
      %p638 = scmp.eq.s32.totalorder %s42, 0
      %p639 = por %p637, %p638
      %p640 = scmp.ne.s32.totalorder %s626, %s627
      %p641 = scmp.eq.s32.totalorder %s43, 1
      %p642 = por %p640, %p641
      %p644 = scmp.ne.s32.totalorder %s627, %s643
      %p645 = scmp.eq.s32.totalorder %s43, 0
      %p646 = por %p644, %p645
      %s647 = ssub.s32 %s37, %s44
      %p648 = scmp.eq.s32.totalorder %s647, 0
      %s650 = sadd.s32 %s649, 1
      %s651 = scalar_select %p648, %s649, %s650
      %p654 = pneg %p648
      %p655 = scmp.eq.s32.totalorder %s37, 1
      %p656 = por %p654, %p655
      %p657 = scmp.ne.s32.totalorder %s649, %s652
      %p658 = scmp.eq.s32.totalorder %s37, 0
      %p659 = por %p657, %p658
      %p660 = scmp.ne.s32.totalorder %s649, %s652
      %p661 = scmp.eq.s32.totalorder %s42, 1
      %p662 = por %p660, %p661
      %p663 = scmp.ne.s32.totalorder %s652, %s653
      %p664 = scmp.eq.s32.totalorder %s42, 0
      %p665 = por %p663, %p664
      %p666 = scmp.ne.s32.totalorder %s652, %s653
      %p667 = scmp.eq.s32.totalorder %s43, 1
      %p668 = por %p666, %p667
      %p670 = scmp.ne.s32.totalorder %s653, %s669
      %p671 = scmp.eq.s32.totalorder %s43, 0
      %p672 = por %p670, %p671
      %p673 = scmp.le.s32.totalorder 1, %s37
      %p674 = scmp.lt.s32.totalorder %s37, 3
      %p675 = pnand %p673, %p674
      %p676 = pneg %p675
      // Predicated region
      $region9: #{_encoder_forward_fused.1} parent=5 // pred_check
        _
      $region10: #{_encoder_forward_fused.1} parent=5 // pred_check_branch
        %678 = sbr.rel (%p675) target = $region12
      $region11: #{_encoder_forward_fused.1} parent=5 // pred_region
        %s679 = ssub.s32 %s37, 1
        // Predicated region
        $region13: #{_encoder_forward_fused.1} parent=11 // pred_check
          %p680 = pneg %p214
        $region14: #{_encoder_forward_fused.1} parent=11 // pred_check_branch
          %682 = sbr.rel (%p680) target = $region16
        $region15: #{_encoder_forward_fused.1} parent=11 // pred_region
          _
        $region16: #{_encoder_forward_fused.1} parent=11 // pred_fallthru
          _
        // Predicated region
        $region17: #{_encoder_forward_fused.1} parent=11 // pred_check
          %p683 = pneg %p235
        $region18: #{_encoder_forward_fused.1} parent=11 // pred_check_branch
          %685 = sbr.rel (%p683) target = $region20
        $region19: #{_encoder_forward_fused.1} parent=11 // pred_region
          _
        $region20: #{_encoder_forward_fused.1} parent=11 // pred_fallthru
          _
        // Predicated region
        $region21: #{_encoder_forward_fused.1} parent=11 // pred_check
          %p686 = pneg %p256
        $region22: #{_encoder_forward_fused.1} parent=11 // pred_check_branch
          %688 = sbr.rel (%p686) target = $region24
        $region23: #{_encoder_forward_fused.1} parent=11 // pred_region
          _
        $region24: #{_encoder_forward_fused.1} parent=11 // pred_fallthru
          _
        // Predicated region
        $region25: #{_encoder_forward_fused.1} parent=11 // pred_check
          %p689 = pneg %p277
        $region26: #{_encoder_forward_fused.1} parent=11 // pred_check_branch
          %691 = sbr.rel (%p689) target = $region28
        $region27: #{_encoder_forward_fused.1} parent=11 // pred_region
          _
        $region28: #{_encoder_forward_fused.1} parent=11 // pred_fallthru
          _
        // Predicated region
        $region29: #{_encoder_forward_fused.1} parent=11 // pred_check
          %p692 = pneg %p298
        $region30: #{_encoder_forward_fused.1} parent=11 // pred_check_branch
          %694 = sbr.rel (%p692) target = $region32
        $region31: #{_encoder_forward_fused.1} parent=11 // pred_region
          _
        $region32: #{_encoder_forward_fused.1} parent=11 // pred_fallthru
          _
        // Predicated region
        $region33: #{_encoder_forward_fused.1} parent=11 // pred_check
          %p695 = pneg %p319
        $region34: #{_encoder_forward_fused.1} parent=11 // pred_check_branch
          %697 = sbr.rel (%p695) target = $region36
        $region35: #{_encoder_forward_fused.1} parent=11 // pred_region
          _
        $region36: #{_encoder_forward_fused.1} parent=11 // pred_fallthru
          _
        // Predicated region
        $region37: #{_encoder_forward_fused.1} parent=11 // pred_check
          %p698 = pneg %p340
        $region38: #{_encoder_forward_fused.1} parent=11 // pred_check_branch
          %700 = sbr.rel (%p698) target = $region40
        $region39: #{_encoder_forward_fused.1} parent=11 // pred_region
          _
        $region40: #{_encoder_forward_fused.1} parent=11 // pred_fallthru
          _
        // Predicated region
        $region41: #{_encoder_forward_fused.1} parent=11 // pred_check
          %p701 = pneg %p361
        $region42: #{_encoder_forward_fused.1} parent=11 // pred_check_branch
          %703 = sbr.rel (%p701) target = $region44
        $region43: #{_encoder_forward_fused.1} parent=11 // pred_region
          _
        $region44: #{_encoder_forward_fused.1} parent=11 // pred_fallthru
          _
        // Predicated region
        $region45: #{_encoder_forward_fused.1} parent=11 // pred_check
          %p704 = pneg %p382
        $region46: #{_encoder_forward_fused.1} parent=11 // pred_check_branch
          %706 = sbr.rel (%p704) target = $region48
        $region47: #{_encoder_forward_fused.1} parent=11 // pred_region
          _
        $region48: #{_encoder_forward_fused.1} parent=11 // pred_fallthru
          _
        // Predicated region
        $region49: #{_encoder_forward_fused.1} parent=11 // pred_check
          %p707 = pneg %p403
        $region50: #{_encoder_forward_fused.1} parent=11 // pred_check_branch
          %709 = sbr.rel (%p707) target = $region52
        $region51: #{_encoder_forward_fused.1} parent=11 // pred_region
          _
        $region52: #{_encoder_forward_fused.1} parent=11 // pred_fallthru
          _
        // Predicated region
        $region53: #{_encoder_forward_fused.1} parent=11 // pred_check
          %p710 = pneg %p424
        $region54: #{_encoder_forward_fused.1} parent=11 // pred_check_branch
          %712 = sbr.rel (%p710) target = $region56
        $region55: #{_encoder_forward_fused.1} parent=11 // pred_region
          _
        $region56: #{_encoder_forward_fused.1} parent=11 // pred_fallthru
          _
        // Predicated region
        $region57: #{_encoder_forward_fused.1} parent=11 // pred_check
          %p713 = pneg %p445
        $region58: #{_encoder_forward_fused.1} parent=11 // pred_check_branch
          %715 = sbr.rel (%p713) target = $region60
        $region59: #{_encoder_forward_fused.1} parent=11 // pred_region
          _
        $region60: #{_encoder_forward_fused.1} parent=11 // pred_fallthru
          _
        // Predicated region
        $region61: #{_encoder_forward_fused.1} parent=11 // pred_check
          %p716 = pneg %p466
        $region62: #{_encoder_forward_fused.1} parent=11 // pred_check_branch
          %718 = sbr.rel (%p716) target = $region64
        $region63: #{_encoder_forward_fused.1} parent=11 // pred_region
          _
        $region64: #{_encoder_forward_fused.1} parent=11 // pred_fallthru
          _
        // Predicated region
        $region65: #{_encoder_forward_fused.1} parent=11 // pred_check
          %p719 = pneg %p487
        $region66: #{_encoder_forward_fused.1} parent=11 // pred_check_branch
          %721 = sbr.rel (%p719) target = $region68
        $region67: #{_encoder_forward_fused.1} parent=11 // pred_region
          _
        $region68: #{_encoder_forward_fused.1} parent=11 // pred_fallthru
          _
        // Predicated region
        $region69: #{_encoder_forward_fused.1} parent=11 // pred_check
          %p722 = pneg %p508
        $region70: #{_encoder_forward_fused.1} parent=11 // pred_check_branch
          %724 = sbr.rel (%p722) target = $region72
        $region71: #{_encoder_forward_fused.1} parent=11 // pred_region
          _
        $region72: #{_encoder_forward_fused.1} parent=11 // pred_fallthru
          _
        // Predicated region
        $region73: #{_encoder_forward_fused.1} parent=11 // pred_check
          %p725 = pneg %p529
        $region74: #{_encoder_forward_fused.1} parent=11 // pred_check_branch
          %727 = sbr.rel (%p725) target = $region76
        $region75: #{_encoder_forward_fused.1} parent=11 // pred_region
          _
        $region76: #{_encoder_forward_fused.1} parent=11 // pred_fallthru
          _
        // Predicated region
        $region77: #{_encoder_forward_fused.1} parent=11 // pred_check
          %p728 = pneg %p550
        $region78: #{_encoder_forward_fused.1} parent=11 // pred_check_branch
          %730 = sbr.rel (%p728) target = $region80
        $region79: #{_encoder_forward_fused.1} parent=11 // pred_region
          _
        $region80: #{_encoder_forward_fused.1} parent=11 // pred_fallthru
          _
        // Predicated region
        $region81: #{_encoder_forward_fused.1} parent=11 // pred_check
          %p731 = pneg %p571
        $region82: #{_encoder_forward_fused.1} parent=11 // pred_check_branch
          %733 = sbr.rel (%p731) target = $region84
        $region83: #{_encoder_forward_fused.1} parent=11 // pred_region
          _
        $region84: #{_encoder_forward_fused.1} parent=11 // pred_fallthru
          _
        // Predicated region
        $region85: #{_encoder_forward_fused.1} parent=11 // pred_check
          %p734 = pneg %p592
        $region86: #{_encoder_forward_fused.1} parent=11 // pred_check_branch
          %736 = sbr.rel (%p734) target = $region88
        $region87: #{_encoder_forward_fused.1} parent=11 // pred_region
          _
        $region88: #{_encoder_forward_fused.1} parent=11 // pred_fallthru
          _
        // Predicated region
        $region89: #{_encoder_forward_fused.1} parent=11 // pred_check
          %p737 = pneg %p613
        $region90: #{_encoder_forward_fused.1} parent=11 // pred_check_branch
          %739 = sbr.rel (%p737) target = $region92
        $region91: #{_encoder_forward_fused.1} parent=11 // pred_region
          _
        $region92: #{_encoder_forward_fused.1} parent=11 // pred_fallthru
          _
      $region12: #{_encoder_forward_fused.1} parent=5 // pred_fallthru
        _
      %p740 = scmp.lt.s32.totalorder %s37, 2
      // Predicated region
      $region93: #{_encoder_forward_fused.1} parent=5 // pred_check
        %p741 = pneg %p740
      $region94: #{_encoder_forward_fused.1} parent=5 // pred_check_branch
        %743 = sbr.rel (%p741) target = $region96
      $region95: #{_encoder_forward_fused.1} parent=5 // pred_region
        // Predicated region
        $region97: #{_encoder_forward_fused.1} parent=95 // pred_check
          %p744 = pneg %p57
        $region98: #{_encoder_forward_fused.1} parent=95 // pred_check_branch
          %746 = sbr.rel (%p744) target = $region100
        $region99: #{_encoder_forward_fused.1} parent=95 // pred_region
          %p747 = scmp.lt.s32.totalorder %s37, 1
          %s748 = scalar_select %p747, %s37, 1
          %s749 = smul.addr %s748, 3
          %s750 = smul.addr %s749, 8
          %s751 = scalar_lea.vmem %s0, %s750
        $region100: #{_encoder_forward_fused.1} parent=95 // pred_fallthru
          _
        // Predicated region
        $region101: #{_encoder_forward_fused.1} parent=95 // pred_check
          %p752 = pneg %p83
        $region102: #{_encoder_forward_fused.1} parent=95 // pred_check_branch
          %754 = sbr.rel (%p752) target = $region104
        $region103: #{_encoder_forward_fused.1} parent=95 // pred_region
          %p755 = scmp.lt.s32.totalorder %s37, 1
          %s756 = scalar_select %p755, %s37, 1
          %s757 = smul.addr %s756, 3
          %s758 = smul.addr %s757, 8
          %s759 = scalar_lea.vmem %s1, %s758
        $region104: #{_encoder_forward_fused.1} parent=95 // pred_fallthru
          _
        // Predicated region
        $region105: #{_encoder_forward_fused.1} parent=95 // pred_check
          %p760 = pneg %p109
        $region106: #{_encoder_forward_fused.1} parent=95 // pred_check_branch
          %762 = sbr.rel (%p760) target = $region108
        $region107: #{_encoder_forward_fused.1} parent=95 // pred_region
          %p763 = scmp.lt.s32.totalorder %s37, 1
          %s764 = scalar_select %p763, %s37, 1
          %s765 = smul.addr %s764, 3
          %s766 = smul.addr %s765, 8
          %s767 = scalar_lea.vmem %s2, %s766
        $region108: #{_encoder_forward_fused.1} parent=95 // pred_fallthru
          _
        // Predicated region
        $region109: #{_encoder_forward_fused.1} parent=95 // pred_check
          %p768 = pneg %p135
        $region110: #{_encoder_forward_fused.1} parent=95 // pred_check_branch
          %770 = sbr.rel (%p768) target = $region112
        $region111: #{_encoder_forward_fused.1} parent=95 // pred_region
          %p771 = scmp.lt.s32.totalorder %s37, 1
          %s772 = scalar_select %p771, %s37, 1
          %s773 = smul.addr %s772, 3
          %s774 = smul.addr %s773, 8
          %s775 = scalar_lea.vmem %s3, %s774
        $region112: #{_encoder_forward_fused.1} parent=95 // pred_fallthru
          _
        // Predicated region
        $region113: #{_encoder_forward_fused.1} parent=95 // pred_check
          %p776 = pneg %p161
        $region114: #{_encoder_forward_fused.1} parent=95 // pred_check_branch
          %778 = sbr.rel (%p776) target = $region116
        $region115: #{_encoder_forward_fused.1} parent=95 // pred_region
          %p779 = scmp.lt.s32.totalorder %s37, 1
          %s780 = scalar_select %p779, %s37, 1
          %s781 = smul.addr %s780, 3
          %s782 = smul.addr %s781, 8
          %s783 = scalar_lea.vmem %s4, %s782
        $region116: #{_encoder_forward_fused.1} parent=95 // pred_fallthru
          _
        // Predicated region
        $region117: #{_encoder_forward_fused.1} parent=95 // pred_check
          %p784 = pneg %p187
        $region118: #{_encoder_forward_fused.1} parent=95 // pred_check_branch
          %786 = sbr.rel (%p784) target = $region120
        $region119: #{_encoder_forward_fused.1} parent=95 // pred_region
          %p787 = scmp.lt.s32.totalorder %s37, 1
          %s788 = scalar_select %p787, %s37, 1
          %s789 = smul.addr %s788, 3
          %s790 = smul.addr %s789, 8
          %s791 = scalar_lea.vmem %s5, %s790
        $region120: #{_encoder_forward_fused.1} parent=95 // pred_fallthru
          _
      $region96: #{_encoder_forward_fused.1} parent=5 // pred_fallthru
        _
      %p792 = scmp.le.s32.totalorder 1, %s37
      %p793 = scmp.lt.s32.totalorder %s37, 3
      %p794 = pnand %p792, %p793
      %p795 = pneg %p794
      // Predicated region
      $region121: #{_encoder_forward_fused.1} parent=5 // pred_check
        _
      $region122: #{_encoder_forward_fused.1} parent=5 // pred_check_branch
        %797 = sbr.rel (%p794) target = $region124
      $region123: #{_encoder_forward_fused.1} parent=5 // pred_region
        %s798 = ssub.s32 %s37, 1
        %p799 = scmp.lt.s32.totalorder %s42, 1
        %s800 = scalar_select %p799, %s42, 1
        %s801 = smul.addr %s800, 3
        %s802 = smul.addr %s801, 8
        %s803 = scalar_lea.vmem %s0, %s802
        %p804 = pneg %p63
        %p805 = pneg %p60
        %p806 = scmp.lt.s32.totalorder %s42, 1
        %s807 = scalar_select %p806, %s42, 1
        %s808 = smul.addr %s807, 3
        %s809 = smul.addr %s808, 8
        %s810 = scalar_lea.vmem %s1, %s809
        %p811 = pneg %p89
        %p812 = pneg %p86
        %p813 = scmp.lt.s32.totalorder %s42, 1
        %s814 = scalar_select %p813, %s42, 1
        %s815 = smul.addr %s814, 3
        %s816 = smul.addr %s815, 8
        %s817 = scalar_lea.vmem %s2, %s816
        %p818 = pneg %p115
        %p819 = pneg %p112
        %p820 = scmp.lt.s32.totalorder %s42, 1
        %s821 = scalar_select %p820, %s42, 1
        %s822 = smul.addr %s821, 3
        %s823 = smul.addr %s822, 8
        %s824 = scalar_lea.vmem %s3, %s823
        %p825 = pneg %p141
        %p826 = pneg %p138
        %p827 = scmp.lt.s32.totalorder %s42, 1
        %s828 = scalar_select %p827, %s42, 1
        %s829 = smul.addr %s828, 3
        %s830 = smul.addr %s829, 8
        %s831 = scalar_lea.vmem %s4, %s830
        %p832 = pneg %p167
        %p833 = pneg %p164
        %p834 = scmp.lt.s32.totalorder %s42, 1
        %s835 = scalar_select %p834, %s42, 1
        %s836 = smul.addr %s835, 3
        %s837 = smul.addr %s836, 8
        %s838 = scalar_lea.vmem %s5, %s837
        %p839 = pneg %p193
        %p840 = pneg %p190
        %p841 = pneg %p214
        %p842 = pneg %p211
        %p843 = pneg %p235
        %p844 = pneg %p232
        %p845 = pneg %p256
        %p846 = pneg %p253
        %p847 = pneg %p277
        %p848 = pneg %p274
        %p849 = pneg %p298
        %p850 = pneg %p295
        %p851 = pneg %p319
        %p852 = pneg %p316
        %p853 = pneg %p340
        %p854 = pneg %p337
        %p855 = pneg %p361
        %p856 = pneg %p358
        %p857 = pneg %p382
        %p858 = pneg %p379
        %p859 = pneg %p403
        %p860 = pneg %p400
        %p861 = pneg %p424
        %p862 = pneg %p421
        %p863 = pneg %p445
        %p864 = pneg %p442
        %p865 = pneg %p466
        %p866 = pneg %p463
        %p867 = pneg %p487
        %p868 = pneg %p484
        %p869 = pneg %p508
        %p870 = pneg %p505
        %p871 = pneg %p529
        %p872 = pneg %p526
        %p873 = pneg %p550
        %p874 = pneg %p547
        %p875 = pneg %p571
        %p876 = pneg %p568
        %p877 = pneg %p592
        %p878 = pneg %p589
        %p879 = pneg %p613
        %p880 = pneg %p610
        %p881 = pneg %p639
        %p882 = pneg %p636
        %s883 = sand.u32 %s626, 1
        %s884 = scalar_lea.sflag [#allocation3], %s883
        %s885 = sand.u32 %s626, 1
        %s886 = smul.addr %s885, 24
        %s887 = scalar_lea.vmem [#allocation2], %s886
        %p888 = pneg %p665
        %p889 = pneg %p662
        %p890 = scmp.lt.s32.totalorder %s42, 1
        %s891 = scalar_select %p890, %s42, 1
        %s892 = smul.addr %s891, 6
        %s893 = smul.addr %s892, 8
        %s894 = scalar_lea.vmem %s27, %s893
        %p895 = scmp.lt.s32.totalorder %s42, 1
        %s896 = scalar_select %p895, %s42, 1
        %s897 = smul.addr %s896, 3
        %s898 = smul.addr %s897, 8
        %s899 = scalar_lea.vmem %s0, %s898
        %p900 = scmp.lt.s32.totalorder %s42, 1
        %s901 = scalar_select %p900, %s42, 1
        %s902 = smul.addr %s901, 3
        %s903 = smul.addr %s902, 8
        %s904 = scalar_lea.vmem %s1, %s903
        %p905 = scmp.lt.s32.totalorder %s42, 1
        %s906 = scalar_select %p905, %s42, 1
        %s907 = smul.addr %s906, 3
        %s908 = smul.addr %s907, 8
        %s909 = scalar_lea.vmem %s2, %s908
        %p910 = scmp.lt.s32.totalorder %s42, 1
        %s911 = scalar_select %p910, %s42, 1
        %s912 = smul.addr %s911, 3
        %s913 = smul.addr %s912, 8
        %s914 = scalar_lea.vmem %s3, %s913
        %p915 = scmp.lt.s32.totalorder %s42, 1
        %s916 = scalar_select %p915, %s42, 1
        %s917 = smul.addr %s916, 3
        %s918 = smul.addr %s917, 8
        %s919 = scalar_lea.vmem %s4, %s918
        %p920 = scmp.lt.s32.totalorder %s42, 1
        %s921 = scalar_select %p920, %s42, 1
        %s922 = smul.addr %s921, 3
        %s923 = smul.addr %s922, 8
        %s924 = scalar_lea.vmem %s5, %s923
        %p925 = scmp.lt.s32.totalorder %s42, 1
        %s926 = scalar_select %p925, %s42, 1
        %s927 = smul.addr %s926, 6
        %s928 = smul.addr %s927, 8
        %s929 = scalar_lea.vmem %s27, %s928
        %v930 = vld [vmem:[%s899] sm:$0xff]
        %v931 = vld [vmem:[%s899 + $0x8] sm:$0xff]
        %v932 = vld [vmem:[%s899 + $0x10] sm:$0xff]
        %v933 = vld [vmem:[%s904] sm:$0xff]
        %v934 = vld [vmem:[%s904 + $0x8] sm:$0xff]
        %v935 = vld [vmem:[%s904 + $0x10] sm:$0xff]
        %v936 = vld [vmem:[%s909] sm:$0xff]
        %v937 = vld [vmem:[%s909 + $0x8] sm:$0xff]
        %v938 = vld [vmem:[%s909 + $0x10] sm:$0xff]
        %v939 = vld [vmem:[%s914] sm:$0xff]
        %v940 = vld [vmem:[%s914 + $0x8] sm:$0xff]
        %v941 = vld [vmem:[%s914 + $0x10] sm:$0xff]
        %v942 = vld [vmem:[%s919] sm:$0xff]
        %v943 = vld [vmem:[%s919 + $0x8] sm:$0xff]
        %v944 = vld [vmem:[%s919 + $0x10] sm:$0xff]
        %v945 = vld [vmem:[%s924] sm:$0xff]
        %v946 = vld [vmem:[%s924 + $0x8] sm:$0xff]
        %v947 = vld [vmem:[%s924 + $0x10] sm:$0xff]
        %951 = vrot.lane.b32.xlu0 %v945, 2
        %v952 = vpop.permute.xlu0 %951
        %953 = vrot.lane.b32.xlu0 %v946, 2
        %v954 = vpop.permute.xlu0 %953
        %955 = vrot.lane.b32.xlu0 %v947, 2
        %v956 = vpop.permute.xlu0 %955
        %vm960 = vcmask 15360
        %v961 = vsel %vm960, %v942, %v952
        %v962 = vsel %vm960, %v943, %v954
        %v963 = vsel %vm960, %v944, %v956
        %v964 = vld [vmem:[%s6] sm:$0xf]
        %vm965 = vcmask 31744
        %v967 = vsel %vm965, %v961, 0
        %v970 = vsel %vm965, %v962, 0
        %v973 = vsel %vm965, %v963, 0
        %vm975 = vcmask 1043456
        %v977 = vsel %vm975, %v964, 0
        %979 = vmatpush.msra.mxu0 0.0
        %980 = vmatpush.msra.mxu0 0.0
        %981 = vmatpush.msra.mxu0 0.0
        %982 = vmatpush.msra.mxu0 0.0
        %983 = vmatpush.msra.mxu0 0.0
        %984 = vmatpush.msra.mxu0 0.0
        %985 = vmatpush.msra.mxu0 0.0
        %986 = vmatpush.msra.mxu0 0.0
        %987 = vmatpush.msra.mxu0 0.0
        %988 = vmatpush.msra.mxu0 0.0
        %989 = vmatpush.msra.mxu0 0.0
        %990 = vmatpush.msra.mxu0 0.0
        %991 = vmatpush.msra.mxu0 0.0
        %992 = vmatpush.msra.mxu0 0.0
        %993 = vmatpush.msra.mxu0 0.0
        %994 = vmatpush.msra.mxu0 %v977
        %995 = vmatmul.f32.gmra.mxu0 %v967
        %v996 = vpop.f32.mrf.mxu0
        %v997 = vadd.f32 0.0, %v996
        %998 = vmatmul.f32.gmra.mxu0 %v970
        %v999 = vpop.f32.mrf.mxu0
        %v1000 = vadd.f32 0.0, %v999
        %1001 = vmatmul.f32.gmra.mxu0 %v973
        %v1002 = vpop.f32.mrf.mxu0
        %v1003 = vadd.f32 0.0, %v1002
        %1004 = vdwg.mxu0
        %v1005 = vld [vmem:[%s7] sm:$0xff]
        %v1006 = vld [vmem:[%s7 + $0x8] sm:$0xff]
        %v1007 = vld [vmem:[%s7 + $0x10] sm:$0xff]
        %v1008 = vld [vmem:[%s7 + $0x18] sm:$0xff]
        %v1009 = vld [vmem:[%s7 + $0x20] sm:$0xff]
        %v1010 = vld [vmem:[%s7 + $0x28] sm:$0xff]
        %v1011 = vld [vmem:[%s7 + $0x30] sm:$0xff]
        %v1012 = vld [vmem:[%s7 + $0x38] sm:$0xff]
        %v1013 = vld [vmem:[%s7 + $0x40] sm:$0xff]
        %v1014 = vld [vmem:[%s7 + $0x48] sm:$0xff]
        %v1015 = vld [vmem:[%s7 + $0x50] sm:$0xff]
        %v1016 = vld [vmem:[%s7 + $0x58] sm:$0xff]
        %v1017 = vld [vmem:[%s8] sm:$0xff]
        %v1018 = vld [vmem:[%s8 + $0x8] sm:$0xff]
        %v1019 = vld [vmem:[%s8 + $0x10] sm:$0xff]
        %v1020 = vld [vmem:[%s8 + $0x18] sm:$0xff]
        %v1021 = vld [vmem:[%s8 + $0x20] sm:$0xff]
        %v1022 = vld [vmem:[%s8 + $0x28] sm:$0xff]
        %v1023 = vld [vmem:[%s8 + $0x30] sm:$0xff]
        %v1024 = vld [vmem:[%s8 + $0x38] sm:$0xff]
        %v1025 = vld [vmem:[%s8 + $0x40] sm:$0xff]
        %v1026 = vld [vmem:[%s8 + $0x48] sm:$0xff]
        %v1027 = vld [vmem:[%s8 + $0x50] sm:$0xff]
        %v1028 = vld [vmem:[%s8 + $0x58] sm:$0xff]
        %v1029 = vld [vmem:[%s9] sm:$0x7]
        %v1030 = vld [vmem:[%s10] sm:$0xff]
        %v1031 = vld [vmem:[%s10 + $0x8] sm:$0xff]
        %v1032 = vld [vmem:[%s10 + $0x10] sm:$0xff]
        %v1033 = vld [vmem:[%s10 + $0x18] sm:$0xff]
        %v1034 = vld [vmem:[%s10 + $0x20] sm:$0xff]
        %v1035 = vld [vmem:[%s10 + $0x28] sm:$0xff]
        %v1036 = vld [vmem:[%s10 + $0x30] sm:$0xff]
        %v1037 = vld [vmem:[%s10 + $0x38] sm:$0xff]
        %v1038 = vld [vmem:[%s10 + $0x40] sm:$0xff]
        %v1039 = vld [vmem:[%s10 + $0x48] sm:$0xff]
        %v1040 = vld [vmem:[%s10 + $0x50] sm:$0xff]
        %v1041 = vld [vmem:[%s10 + $0x58] sm:$0xff]
        %v1042 = vld [vmem:[%s10 + $0x60] sm:$0xff]
        %v1043 = vld [vmem:[%s10 + $0x68] sm:$0xff]
        %v1044 = vld [vmem:[%s10 + $0x70] sm:$0xff]
        %v1045 = vld [vmem:[%s10 + $0x78] sm:$0xff]
        %v1046 = vld [vmem:[%s10 + $0x80] sm:$0xff]
        %v1047 = vld [vmem:[%s10 + $0x88] sm:$0xff]
        %v1048 = vld [vmem:[%s10 + $0x90] sm:$0xff]
        %v1049 = vld [vmem:[%s10 + $0x98] sm:$0xff]
        %v1050 = vld [vmem:[%s10 + $0xa0] sm:$0xff]
        %v1051 = vld [vmem:[%s10 + $0xa8] sm:$0xff]
        %v1052 = vld [vmem:[%s10 + $0xb0] sm:$0xff]
        %v1053 = vld [vmem:[%s10 + $0xb8] sm:$0xff]
        %v1054 = vld [vmem:[%s10 + $0xc0] sm:$0xff]
        %v1055 = vld [vmem:[%s10 + $0xc8] sm:$0xff]
        %v1056 = vld [vmem:[%s10 + $0xd0] sm:$0xff]
        %v1057 = vld [vmem:[%s10 + $0xd8] sm:$0xff]
        %v1058 = vld [vmem:[%s10 + $0xe0] sm:$0xff]
        %v1059 = vld [vmem:[%s10 + $0xe8] sm:$0xff]
        %v1060 = vld [vmem:[%s10 + $0xf0] sm:$0xff]
        %v1061 = vld [vmem:[%s10 + $0xf8] sm:$0xff]
        %v1062 = vld [vmem:[%s10 + $0x100] sm:$0xff]
        %v1063 = vld [vmem:[%s10 + $0x108] sm:$0xff]
        %v1064 = vld [vmem:[%s10 + $0x110] sm:$0xff]
        %v1065 = vld [vmem:[%s10 + $0x118] sm:$0xff]
        %v1066 = vld [vmem:[%s10 + $0x120] sm:$0xff]
        %v1067 = vld [vmem:[%s10 + $0x128] sm:$0xff]
        %v1068 = vld [vmem:[%s10 + $0x130] sm:$0xff]
        %v1069 = vld [vmem:[%s10 + $0x138] sm:$0xff]
        %v1070 = vld [vmem:[%s10 + $0x140] sm:$0xff]
        %v1071 = vld [vmem:[%s10 + $0x148] sm:$0xff]
        %v1072 = vld [vmem:[%s10 + $0x150] sm:$0xff]
        %v1073 = vld [vmem:[%s10 + $0x158] sm:$0xff]
        %v1074 = vld [vmem:[%s10 + $0x160] sm:$0xff]
        %v1075 = vld [vmem:[%s10 + $0x168] sm:$0xff]
        %v1076 = vld [vmem:[%s10 + $0x170] sm:$0xff]
        %v1077 = vld [vmem:[%s10 + $0x178] sm:$0xff]
        %v1078 = vld [vmem:[%s11] sm:$0xff]
        %v1079 = vld [vmem:[%s11 + $0x8] sm:$0xff]
        %v1080 = vld [vmem:[%s11 + $0x10] sm:$0xff]
        %v1081 = vld [vmem:[%s11 + $0x18] sm:$0xff]
        %v1082 = vld [vmem:[%s11 + $0x20] sm:$0xff]
        %v1083 = vld [vmem:[%s11 + $0x28] sm:$0xff]
        %v1084 = vld [vmem:[%s11 + $0x30] sm:$0xff]
        %v1085 = vld [vmem:[%s11 + $0x38] sm:$0xff]
        %v1086 = vld [vmem:[%s11 + $0x40] sm:$0xff]
        %v1087 = vld [vmem:[%s11 + $0x48] sm:$0xff]
        %v1088 = vld [vmem:[%s11 + $0x50] sm:$0xff]
        %v1089 = vld [vmem:[%s11 + $0x58] sm:$0xff]
        %v1090 = vadd.f32 %v930, %v936
        %v1091 = vadd.f32 %v931, %v937
        %v1092 = vadd.f32 %v932, %v938
        %v1093 = vadd.f32 %v933, %v939
        %v1094 = vadd.f32 %v934, %v940
        %v1095 = vadd.f32 %v935, %v941
        %1099 = vrot.lane.b32.xlu0 %v1093, 32
        %v1100 = vpop.permute.xlu0 %1099
        %1101 = vrot.lane.b32.xlu0 %v1094, 32
        %v1102 = vpop.permute.xlu0 %1101
        %1103 = vrot.lane.b32.xlu0 %v1095, 32
        %v1104 = vpop.permute.xlu0 %1103
        %vm1108 = vcmask 261120
        %v1109 = vsel %vm1108, %v1090, %v1100
        %v1110 = vsel %vm1108, %v1091, %v1102
        %v1111 = vsel %vm1108, %v1092, %v1104
        %v1112 = vld [vmem:[%s12] sm:$0xff]
        %v1113 = vld [vmem:[%s12 + $0x8] sm:$0xff]
        %v1114 = vld [vmem:[%s12 + $0x10] sm:$0xff]
        %v1115 = vld [vmem:[%s12 + $0x18] sm:$0xff]
        %v1116 = vld [vmem:[%s12 + $0x20] sm:$0xff]
        %v1117 = vld [vmem:[%s12 + $0x28] sm:$0xff]
        %v1118 = vld [vmem:[%s12 + $0x30] sm:$0xff]
        %v1119 = vld [vmem:[%s12 + $0x38] sm:$0xff]
        %v1120 = vld [vmem:[%s13] sm:$0x1]
        %v1122 = vperm.slane %v1120, 0
        %vm1124 = vcmask 523264
        %v1126 = vsel %vm1124, %v1109, 0
        %v1129 = vsel %vm1124, %v1110, 0
        %v1132 = vsel %vm1124, %v1111, 0
        %1134 = vmatpush.msra.mxu0 0.0
        %1135 = vmatpush.msra.mxu0 0.0
        %1136 = vmatpush.msra.mxu0 0.0
        %1137 = vmatpush.msra.mxu0 0.0
        %1138 = vmatpush.msra.mxu0 0.0
        %1139 = vmatpush.msra.mxu0 0.0
        %1140 = vmatpush.msra.mxu0 0.0
        %1141 = vmatpush.msra.mxu0 0.0
        %1142 = vmatpush.msra.mxu0 %v1119
        %1143 = vmatpush.msra.mxu0 %v1118
        %1144 = vmatpush.msra.mxu0 %v1117
        %1145 = vmatpush.msra.mxu0 %v1116
        %1146 = vmatpush.msra.mxu0 %v1115
        %1147 = vmatpush.msra.mxu0 %v1114
        %1148 = vmatpush.msra.mxu0 %v1113
        %1149 = vmatpush.msra.mxu0 %v1112
        %1150 = vmatmul.f32.gmra.mxu0 %v1126
        %v1151 = vpop.f32.mrf.mxu0
        %v1152 = vadd.f32 %v1122, %v1151
        %1153 = vmatmul.f32.gmra.mxu0 %v1129
        %v1154 = vpop.f32.mrf.mxu0
        %v1155 = vadd.f32 %v1122, %v1154
        %1156 = vmatmul.f32.gmra.mxu0 %v1132
        %v1157 = vpop.f32.mrf.mxu0
        %v1158 = vadd.f32 %v1122, %v1157
        %1159 = vdwg.mxu0
        %v1160 = vadd.f32 %v1152, %v997
        %v1161 = vadd.f32 %v1155, %v1000
        %v1162 = vadd.f32 %v1158, %v1003
        %1166 = vrot.lane.b32.xlu0 %v1152, 120
        %v1167 = vpop.permute.xlu0 %1166
        %1168 = vrot.lane.b32.xlu0 %v1155, 120
        %v1169 = vpop.permute.xlu0 %1168
        %1170 = vrot.lane.b32.xlu0 %v1158, 120
        %v1171 = vpop.permute.xlu0 %1170
        %1172 = vrot.lane.b32.xlu0 %v1152, 112
        %v1173 = vpop.permute.xlu0 %1172
        %1174 = vrot.lane.b32.xlu0 %v1155, 112
        %v1175 = vpop.permute.xlu0 %1174
        %1176 = vrot.lane.b32.xlu0 %v1158, 112
        %v1177 = vpop.permute.xlu0 %1176
        %1178 = vrot.lane.b32.xlu0 %v1152, 104
        %v1179 = vpop.permute.xlu0 %1178
        %1180 = vrot.lane.b32.xlu0 %v1155, 104
        %v1181 = vpop.permute.xlu0 %1180
        %1182 = vrot.lane.b32.xlu0 %v1158, 104
        %v1183 = vpop.permute.xlu0 %1182
        %1184 = vrot.lane.b32.xlu0 %v1152, 96
        %v1185 = vpop.permute.xlu0 %1184
        %1186 = vrot.lane.b32.xlu0 %v1155, 96
        %v1187 = vpop.permute.xlu0 %1186
        %1188 = vrot.lane.b32.xlu0 %v1158, 96
        %v1189 = vpop.permute.xlu0 %1188
        %1190 = vrot.lane.b32.xlu0 %v1152, 88
        %v1191 = vpop.permute.xlu0 %1190
        %1192 = vrot.lane.b32.xlu0 %v1155, 88
        %v1193 = vpop.permute.xlu0 %1192
        %1194 = vrot.lane.b32.xlu0 %v1158, 88
        %v1195 = vpop.permute.xlu0 %1194
        %1196 = vrot.lane.b32.xlu0 %v1152, 80
        %v1197 = vpop.permute.xlu0 %1196
        %1198 = vrot.lane.b32.xlu0 %v1155, 80
        %v1199 = vpop.permute.xlu0 %1198
        %1200 = vrot.lane.b32.xlu0 %v1158, 80
        %v1201 = vpop.permute.xlu0 %1200
        %1202 = vrot.lane.b32.xlu0 %v1152, 72
        %v1203 = vpop.permute.xlu0 %1202
        %1204 = vrot.lane.b32.xlu0 %v1155, 72
        %v1205 = vpop.permute.xlu0 %1204
        %1206 = vrot.lane.b32.xlu0 %v1158, 72
        %v1207 = vpop.permute.xlu0 %1206
        %1208 = vrot.lane.b32.xlu0 %v1152, 64
        %v1209 = vpop.permute.xlu0 %1208
        %1210 = vrot.lane.b32.xlu0 %v1155, 64
        %v1211 = vpop.permute.xlu0 %1210
        %1212 = vrot.lane.b32.xlu0 %v1158, 64
        %v1213 = vpop.permute.xlu0 %1212
        %1214 = vrot.lane.b32.xlu0 %v1167, 64
        %v1215 = vpop.permute.xlu0 %1214
        %1216 = vrot.lane.b32.xlu0 %v1169, 64
        %v1217 = vpop.permute.xlu0 %1216
        %1218 = vrot.lane.b32.xlu0 %v1171, 64
        %v1219 = vpop.permute.xlu0 %1218
        %1220 = vrot.lane.b32.xlu0 %v1173, 64
        %v1221 = vpop.permute.xlu0 %1220
        %1222 = vrot.lane.b32.xlu0 %v1175, 64
        %v1223 = vpop.permute.xlu0 %1222
        %1224 = vrot.lane.b32.xlu0 %v1177, 64
        %v1225 = vpop.permute.xlu0 %1224
        %1226 = vrot.lane.b32.xlu0 %v1179, 64
        %v1227 = vpop.permute.xlu0 %1226
        %1228 = vrot.lane.b32.xlu0 %v1181, 64
        %v1229 = vpop.permute.xlu0 %1228
        %1230 = vrot.lane.b32.xlu0 %v1183, 64
        %v1231 = vpop.permute.xlu0 %1230
        %1232 = vrot.lane.b32.xlu0 %v1185, 64
        %v1233 = vpop.permute.xlu0 %1232
        %1234 = vrot.lane.b32.xlu0 %v1187, 64
        %v1235 = vpop.permute.xlu0 %1234
        %1236 = vrot.lane.b32.xlu0 %v1189, 64
        %v1237 = vpop.permute.xlu0 %1236
        %1238 = vrot.lane.b32.xlu0 %v1191, 64
        %v1239 = vpop.permute.xlu0 %1238
        %1240 = vrot.lane.b32.xlu0 %v1193, 64
        %v1241 = vpop.permute.xlu0 %1240
        %1242 = vrot.lane.b32.xlu0 %v1195, 64
        %v1243 = vpop.permute.xlu0 %1242
        %1244 = vrot.lane.b32.xlu0 %v1197, 64
        %v1245 = vpop.permute.xlu0 %1244
        %1246 = vrot.lane.b32.xlu0 %v1199, 64
        %v1247 = vpop.permute.xlu0 %1246
        %1248 = vrot.lane.b32.xlu0 %v1201, 64
        %v1249 = vpop.permute.xlu0 %1248
        %1250 = vrot.lane.b32.xlu0 %v1203, 64
        %v1251 = vpop.permute.xlu0 %1250
        %1252 = vrot.lane.b32.xlu0 %v1205, 64
        %v1253 = vpop.permute.xlu0 %1252
        %1254 = vrot.lane.b32.xlu0 %v1207, 64
        %v1255 = vpop.permute.xlu0 %1254
        %v1280 = vrot.slane %v1221, 4
        %vm1281 = vcmask 1047556
        %v1282 = vsel %vm1281, %v1280, %v1209
        %v1283 = vrot.slane %v1209, 4
        %v1284 = vsel %vm1281, %v1221, %v1283
        %v1286 = vunpack.c.l.s4 1983009808
        %v1287 = vunpack.c.0.s8 %v1286
        %v1288 = vperm.slane %v1282, %v1287
        %v1290 = vunpack.c.l.s4 1983009808
        %v1291 = vunpack.c.0.s8 %v1290
        %v1292 = vperm.slane %v1284, %v1291
        %v1293 = vrot.slane %v1227, 4
        %v1294 = vsel %vm1281, %v1293, %v1215
        %v1295 = vrot.slane %v1215, 4
        %v1296 = vsel %vm1281, %v1227, %v1295
        %v1298 = vunpack.c.l.s4 1983009808
        %v1299 = vunpack.c.0.s8 %v1298
        %v1300 = vperm.slane %v1294, %v1299
        %v1302 = vunpack.c.l.s4 1983009808
        %v1303 = vunpack.c.0.s8 %v1302
        %v1304 = vperm.slane %v1296, %v1303
        %v1305 = vrot.slane %v1245, 4
        %v1306 = vsel %vm1281, %v1305, %v1233
        %v1307 = vrot.slane %v1233, 4
        %v1308 = vsel %vm1281, %v1245, %v1307
        %v1310 = vunpack.c.l.s4 1983009808
        %v1311 = vunpack.c.0.s8 %v1310
        %v1312 = vperm.slane %v1306, %v1311
        %v1314 = vunpack.c.l.s4 1983009808
        %v1315 = vunpack.c.0.s8 %v1314
        %v1316 = vperm.slane %v1308, %v1315
        %v1317 = vrot.slane %v1251, 4
        %v1318 = vsel %vm1281, %v1317, %v1239
        %v1319 = vrot.slane %v1239, 4
        %v1320 = vsel %vm1281, %v1251, %v1319
        %v1322 = vunpack.c.l.s4 1983009808
        %v1323 = vunpack.c.0.s8 %v1322
        %v1324 = vperm.slane %v1318, %v1323
        %v1326 = vunpack.c.l.s4 1983009808
        %v1327 = vunpack.c.0.s8 %v1326
        %v1328 = vperm.slane %v1320, %v1327
        %v1329 = vrot.slane %v1300, 4
        %v1330 = vsel %vm1281, %v1329, %v1288
        %v1331 = vrot.slane %v1288, 4
        %v1332 = vsel %vm1281, %v1300, %v1331
        %v1334 = vunpack.c.l.s4 1934713408
        %v1335 = vunpack.c.0.s8 %v1334
        %v1336 = vperm.slane %v1330, %v1335
        %v1338 = vunpack.c.l.s4 1934713408
        %v1339 = vunpack.c.0.s8 %v1338
        %v1340 = vperm.slane %v1332, %v1339
        %v1341 = vrot.slane %v1304, 4
        %v1342 = vsel %vm1281, %v1341, %v1292
        %v1343 = vrot.slane %v1292, 4
        %v1344 = vsel %vm1281, %v1304, %v1343
        %v1346 = vunpack.c.l.s4 1934713408
        %v1347 = vunpack.c.0.s8 %v1346
        %v1348 = vperm.slane %v1342, %v1347
        %v1350 = vunpack.c.l.s4 1934713408
        %v1351 = vunpack.c.0.s8 %v1350
        %v1352 = vperm.slane %v1344, %v1351
        %v1353 = vrot.slane %v1324, 4
        %v1354 = vsel %vm1281, %v1353, %v1312
        %v1355 = vrot.slane %v1312, 4
        %v1356 = vsel %vm1281, %v1324, %v1355
        %v1358 = vunpack.c.l.s4 1934713408
        %v1359 = vunpack.c.0.s8 %v1358
        %v1360 = vperm.slane %v1354, %v1359
        %v1362 = vunpack.c.l.s4 1934713408
        %v1363 = vunpack.c.0.s8 %v1362
        %v1364 = vperm.slane %v1356, %v1363
        %v1365 = vrot.slane %v1328, 4
        %v1366 = vsel %vm1281, %v1365, %v1316
        %v1367 = vrot.slane %v1316, 4
        %v1368 = vsel %vm1281, %v1328, %v1367
        %v1370 = vunpack.c.l.s4 1934713408
        %v1371 = vunpack.c.0.s8 %v1370
        %v1372 = vperm.slane %v1366, %v1371
        %v1374 = vunpack.c.l.s4 1934713408
        %v1375 = vunpack.c.0.s8 %v1374
        %v1376 = vperm.slane %v1368, %v1375
        %v1377 = vrot.slane %v1360, 4
        %v1378 = vsel %vm1281, %v1377, %v1336
        %v1379 = vrot.slane %v1336, 4
        %v1380 = vsel %vm1281, %v1360, %v1379
        %v1381 = vrot.slane %v1364, 4
        %v1382 = vsel %vm1281, %v1381, %v1340
        %v1383 = vrot.slane %v1340, 4
        %v1384 = vsel %vm1281, %v1364, %v1383
        %v1385 = vrot.slane %v1372, 4
        %v1386 = vsel %vm1281, %v1385, %v1348
        %v1387 = vrot.slane %v1348, 4
        %v1388 = vsel %vm1281, %v1372, %v1387
        %v1389 = vrot.slane %v1376, 4
        %v1390 = vsel %vm1281, %v1389, %v1352
        %v1391 = vrot.slane %v1352, 4
        %v1392 = vsel %vm1281, %v1376, %v1391
        %v1393 = vrot.slane %v1223, 4
        %v1394 = vsel %vm1281, %v1393, %v1211
        %v1395 = vrot.slane %v1211, 4
        %v1396 = vsel %vm1281, %v1223, %v1395
        %v1398 = vunpack.c.l.s4 1983009808
        %v1399 = vunpack.c.0.s8 %v1398
        %v1400 = vperm.slane %v1394, %v1399
        %v1402 = vunpack.c.l.s4 1983009808
        %v1403 = vunpack.c.0.s8 %v1402
        %v1404 = vperm.slane %v1396, %v1403
        %v1405 = vrot.slane %v1229, 4
        %v1406 = vsel %vm1281, %v1405, %v1217
        %v1407 = vrot.slane %v1217, 4
        %v1408 = vsel %vm1281, %v1229, %v1407
        %v1410 = vunpack.c.l.s4 1983009808
        %v1411 = vunpack.c.0.s8 %v1410
        %v1412 = vperm.slane %v1406, %v1411
        %v1414 = vunpack.c.l.s4 1983009808
        %v1415 = vunpack.c.0.s8 %v1414
        %v1416 = vperm.slane %v1408, %v1415
        %v1417 = vrot.slane %v1247, 4
        %v1418 = vsel %vm1281, %v1417, %v1235
        %v1419 = vrot.slane %v1235, 4
        %v1420 = vsel %vm1281, %v1247, %v1419
        %v1422 = vunpack.c.l.s4 1983009808
        %v1423 = vunpack.c.0.s8 %v1422
        %v1424 = vperm.slane %v1418, %v1423
        %v1426 = vunpack.c.l.s4 1983009808
        %v1427 = vunpack.c.0.s8 %v1426
        %v1428 = vperm.slane %v1420, %v1427
        %v1429 = vrot.slane %v1253, 4
        %v1430 = vsel %vm1281, %v1429, %v1241
        %v1431 = vrot.slane %v1241, 4
        %v1432 = vsel %vm1281, %v1253, %v1431
        %v1434 = vunpack.c.l.s4 1983009808
        %v1435 = vunpack.c.0.s8 %v1434
        %v1436 = vperm.slane %v1430, %v1435
        %v1438 = vunpack.c.l.s4 1983009808
        %v1439 = vunpack.c.0.s8 %v1438
        %v1440 = vperm.slane %v1432, %v1439
        %v1441 = vrot.slane %v1412, 4
        %v1442 = vsel %vm1281, %v1441, %v1400
        %v1443 = vrot.slane %v1400, 4
        %v1444 = vsel %vm1281, %v1412, %v1443
        %v1446 = vunpack.c.l.s4 1934713408
        %v1447 = vunpack.c.0.s8 %v1446
        %v1448 = vperm.slane %v1442, %v1447
        %v1450 = vunpack.c.l.s4 1934713408
        %v1451 = vunpack.c.0.s8 %v1450
        %v1452 = vperm.slane %v1444, %v1451
        %v1453 = vrot.slane %v1416, 4
        %v1454 = vsel %vm1281, %v1453, %v1404
        %v1455 = vrot.slane %v1404, 4
        %v1456 = vsel %vm1281, %v1416, %v1455
        %v1458 = vunpack.c.l.s4 1934713408
        %v1459 = vunpack.c.0.s8 %v1458
        %v1460 = vperm.slane %v1454, %v1459
        %v1462 = vunpack.c.l.s4 1934713408
        %v1463 = vunpack.c.0.s8 %v1462
        %v1464 = vperm.slane %v1456, %v1463
        %v1465 = vrot.slane %v1436, 4
        %v1466 = vsel %vm1281, %v1465, %v1424
        %v1467 = vrot.slane %v1424, 4
        %v1468 = vsel %vm1281, %v1436, %v1467
        %v1470 = vunpack.c.l.s4 1934713408
        %v1471 = vunpack.c.0.s8 %v1470
        %v1472 = vperm.slane %v1466, %v1471
        %v1474 = vunpack.c.l.s4 1934713408
        %v1475 = vunpack.c.0.s8 %v1474
        %v1476 = vperm.slane %v1468, %v1475
        %v1477 = vrot.slane %v1440, 4
        %v1478 = vsel %vm1281, %v1477, %v1428
        %v1479 = vrot.slane %v1428, 4
        %v1480 = vsel %vm1281, %v1440, %v1479
        %v1482 = vunpack.c.l.s4 1934713408
        %v1483 = vunpack.c.0.s8 %v1482
        %v1484 = vperm.slane %v1478, %v1483
        %v1486 = vunpack.c.l.s4 1934713408
        %v1487 = vunpack.c.0.s8 %v1486
        %v1488 = vperm.slane %v1480, %v1487
        %v1489 = vrot.slane %v1472, 4
        %v1490 = vsel %vm1281, %v1489, %v1448
        %v1491 = vrot.slane %v1448, 4
        %v1492 = vsel %vm1281, %v1472, %v1491
        %v1493 = vrot.slane %v1476, 4
        %v1494 = vsel %vm1281, %v1493, %v1452
        %v1495 = vrot.slane %v1452, 4
        %v1496 = vsel %vm1281, %v1476, %v1495
        %v1497 = vrot.slane %v1484, 4
        %v1498 = vsel %vm1281, %v1497, %v1460
        %v1499 = vrot.slane %v1460, 4
        %v1500 = vsel %vm1281, %v1484, %v1499
        %v1501 = vrot.slane %v1488, 4
        %v1502 = vsel %vm1281, %v1501, %v1464
        %v1503 = vrot.slane %v1464, 4
        %v1504 = vsel %vm1281, %v1488, %v1503
        %v1505 = vrot.slane %v1225, 4
        %v1506 = vsel %vm1281, %v1505, %v1213
        %v1507 = vrot.slane %v1213, 4
        %v1508 = vsel %vm1281, %v1225, %v1507
        %v1510 = vunpack.c.l.s4 1983009808
        %v1511 = vunpack.c.0.s8 %v1510
        %v1512 = vperm.slane %v1506, %v1511
        %v1514 = vunpack.c.l.s4 1983009808
        %v1515 = vunpack.c.0.s8 %v1514
        %v1516 = vperm.slane %v1508, %v1515
        %v1517 = vrot.slane %v1231, 4
        %v1518 = vsel %vm1281, %v1517, %v1219
        %v1519 = vrot.slane %v1219, 4
        %v1520 = vsel %vm1281, %v1231, %v1519
        %v1522 = vunpack.c.l.s4 1983009808
        %v1523 = vunpack.c.0.s8 %v1522
        %v1524 = vperm.slane %v1518, %v1523
        %v1526 = vunpack.c.l.s4 1983009808
        %v1527 = vunpack.c.0.s8 %v1526
        %v1528 = vperm.slane %v1520, %v1527
        %v1529 = vrot.slane %v1249, 4
        %v1530 = vsel %vm1281, %v1529, %v1237
        %v1531 = vrot.slane %v1237, 4
        %v1532 = vsel %vm1281, %v1249, %v1531
        %v1534 = vunpack.c.l.s4 1983009808
        %v1535 = vunpack.c.0.s8 %v1534
        %v1536 = vperm.slane %v1530, %v1535
        %v1538 = vunpack.c.l.s4 1983009808
        %v1539 = vunpack.c.0.s8 %v1538
        %v1540 = vperm.slane %v1532, %v1539
        %v1541 = vrot.slane %v1255, 4
        %v1542 = vsel %vm1281, %v1541, %v1243
        %v1543 = vrot.slane %v1243, 4
        %v1544 = vsel %vm1281, %v1255, %v1543
        %v1546 = vunpack.c.l.s4 1983009808
        %v1547 = vunpack.c.0.s8 %v1546
        %v1548 = vperm.slane %v1542, %v1547
        %v1550 = vunpack.c.l.s4 1983009808
        %v1551 = vunpack.c.0.s8 %v1550
        %v1552 = vperm.slane %v1544, %v1551
        %v1553 = vrot.slane %v1524, 4
        %v1554 = vsel %vm1281, %v1553, %v1512
        %v1555 = vrot.slane %v1512, 4
        %v1556 = vsel %vm1281, %v1524, %v1555
        %v1558 = vunpack.c.l.s4 1934713408
        %v1559 = vunpack.c.0.s8 %v1558
        %v1560 = vperm.slane %v1554, %v1559
        %v1562 = vunpack.c.l.s4 1934713408
        %v1563 = vunpack.c.0.s8 %v1562
        %v1564 = vperm.slane %v1556, %v1563
        %v1565 = vrot.slane %v1528, 4
        %v1566 = vsel %vm1281, %v1565, %v1516
        %v1567 = vrot.slane %v1516, 4
        %v1568 = vsel %vm1281, %v1528, %v1567
        %v1570 = vunpack.c.l.s4 1934713408
        %v1571 = vunpack.c.0.s8 %v1570
        %v1572 = vperm.slane %v1566, %v1571
        %v1574 = vunpack.c.l.s4 1934713408
        %v1575 = vunpack.c.0.s8 %v1574
        %v1576 = vperm.slane %v1568, %v1575
        %v1577 = vrot.slane %v1548, 4
        %v1578 = vsel %vm1281, %v1577, %v1536
        %v1579 = vrot.slane %v1536, 4
        %v1580 = vsel %vm1281, %v1548, %v1579
        %v1582 = vunpack.c.l.s4 1934713408
        %v1583 = vunpack.c.0.s8 %v1582
        %v1584 = vperm.slane %v1578, %v1583
        %v1586 = vunpack.c.l.s4 1934713408
        %v1587 = vunpack.c.0.s8 %v1586
        %v1588 = vperm.slane %v1580, %v1587
        %v1589 = vrot.slane %v1552, 4
        %v1590 = vsel %vm1281, %v1589, %v1540
        %v1591 = vrot.slane %v1540, 4
        %v1592 = vsel %vm1281, %v1552, %v1591
        %v1594 = vunpack.c.l.s4 1934713408
        %v1595 = vunpack.c.0.s8 %v1594
        %v1596 = vperm.slane %v1590, %v1595
        %v1598 = vunpack.c.l.s4 1934713408
        %v1599 = vunpack.c.0.s8 %v1598
        %v1600 = vperm.slane %v1592, %v1599
        %v1601 = vrot.slane %v1584, 4
        %v1602 = vsel %vm1281, %v1601, %v1560
        %v1603 = vrot.slane %v1560, 4
        %v1604 = vsel %vm1281, %v1584, %v1603
        %v1605 = vrot.slane %v1588, 4
        %v1606 = vsel %vm1281, %v1605, %v1564
        %v1607 = vrot.slane %v1564, 4
        %v1608 = vsel %vm1281, %v1588, %v1607
        %v1609 = vrot.slane %v1596, 4
        %v1610 = vsel %vm1281, %v1609, %v1572
        %v1611 = vrot.slane %v1572, 4
        %v1612 = vsel %vm1281, %v1596, %v1611
        %v1613 = vrot.slane %v1600, 4
        %v1614 = vsel %vm1281, %v1613, %v1576
        %v1615 = vrot.slane %v1576, 4
        %v1616 = vsel %vm1281, %v1600, %v1615
        %vm1617 = vcmask 64512
        %v1618 = vsel %vm1617, %v1378, -inf
        %1619 = vmax.xlane.f32.xlu0 %v1618
        %v1620 = vpop.xlane.xlu0 %1619
        %v1621 = vsel %vm1617, %v1380, -inf
        %1622 = vmax.xlane.f32.xlu0 %v1621
        %v1623 = vpop.xlane.xlu0 %1622
        %v1624 = vsel %vm1617, %v1382, -inf
        %1625 = vmax.xlane.f32.xlu0 %v1624
        %v1626 = vpop.xlane.xlu0 %1625
        %v1627 = vsel %vm1617, %v1384, -inf
        %1628 = vmax.xlane.f32.xlu0 %v1627
        %v1629 = vpop.xlane.xlu0 %1628
        %v1630 = vsel %vm1617, %v1386, -inf
        %1631 = vmax.xlane.f32.xlu0 %v1630
        %v1632 = vpop.xlane.xlu0 %1631
        %v1633 = vsel %vm1617, %v1388, -inf
        %1634 = vmax.xlane.f32.xlu0 %v1633
        %v1635 = vpop.xlane.xlu0 %1634
        %v1636 = vsel %vm1617, %v1390, -inf
        %1637 = vmax.xlane.f32.xlu0 %v1636
        %v1638 = vpop.xlane.xlu0 %1637
        %v1639 = vsel %vm1617, %v1392, -inf
        %1640 = vmax.xlane.f32.xlu0 %v1639
        %v1641 = vpop.xlane.xlu0 %1640
        %v1642 = vsel %vm1617, %v1490, -inf
        %1643 = vmax.xlane.f32.xlu0 %v1642
        %v1644 = vpop.xlane.xlu0 %1643
        %v1645 = vsel %vm1617, %v1492, -inf
        %1646 = vmax.xlane.f32.xlu0 %v1645
        %v1647 = vpop.xlane.xlu0 %1646
        %v1648 = vsel %vm1617, %v1494, -inf
        %1649 = vmax.xlane.f32.xlu0 %v1648
        %v1650 = vpop.xlane.xlu0 %1649
        %v1651 = vsel %vm1617, %v1496, -inf
        %1652 = vmax.xlane.f32.xlu0 %v1651
        %v1653 = vpop.xlane.xlu0 %1652
        %v1654 = vsel %vm1617, %v1498, -inf
        %1655 = vmax.xlane.f32.xlu0 %v1654
        %v1656 = vpop.xlane.xlu0 %1655
        %v1657 = vsel %vm1617, %v1500, -inf
        %1658 = vmax.xlane.f32.xlu0 %v1657
        %v1659 = vpop.xlane.xlu0 %1658
        %v1660 = vsel %vm1617, %v1502, -inf
        %1661 = vmax.xlane.f32.xlu0 %v1660
        %v1662 = vpop.xlane.xlu0 %1661
        %v1663 = vsel %vm1617, %v1504, -inf
        %1664 = vmax.xlane.f32.xlu0 %v1663
        %v1665 = vpop.xlane.xlu0 %1664
        %v1666 = vsel %vm1617, %v1602, -inf
        %1667 = vmax.xlane.f32.xlu0 %v1666
        %v1668 = vpop.xlane.xlu0 %1667
        %v1669 = vsel %vm1617, %v1604, -inf
        %1670 = vmax.xlane.f32.xlu0 %v1669
        %v1671 = vpop.xlane.xlu0 %1670
        %v1672 = vsel %vm1617, %v1606, -inf
        %1673 = vmax.xlane.f32.xlu0 %v1672
        %v1674 = vpop.xlane.xlu0 %1673
        %v1675 = vsel %vm1617, %v1608, -inf
        %1676 = vmax.xlane.f32.xlu0 %v1675
        %v1677 = vpop.xlane.xlu0 %1676
        %v1678 = vsel %vm1617, %v1610, -inf
        %1679 = vmax.xlane.f32.xlu0 %v1678
        %v1680 = vpop.xlane.xlu0 %1679
        %v1681 = vsel %vm1617, %v1612, -inf
        %1682 = vmax.xlane.f32.xlu0 %v1681
        %v1683 = vpop.xlane.xlu0 %1682
        %v1684 = vsel %vm1617, %v1614, -inf
        %1685 = vmax.xlane.f32.xlu0 %v1684
        %v1686 = vpop.xlane.xlu0 %1685
        %v1687 = vsel %vm1617, %v1616, -inf
        %1688 = vmax.xlane.f32.xlu0 %v1687
        %v1689 = vpop.xlane.xlu0 %1688
        %v1690 = vsub.f32 %v1378, %v1620
        %v1691 = vsub.f32 %v1380, %v1623
        %v1692 = vsub.f32 %v1382, %v1626
        %v1693 = vsub.f32 %v1384, %v1629
        %v1694 = vsub.f32 %v1386, %v1632
        %v1695 = vsub.f32 %v1388, %v1635
        %v1696 = vsub.f32 %v1390, %v1638
        %v1697 = vsub.f32 %v1392, %v1641
        %v1698 = vsub.f32 %v1490, %v1644
        %v1699 = vsub.f32 %v1492, %v1647
        %v1700 = vsub.f32 %v1494, %v1650
        %v1701 = vsub.f32 %v1496, %v1653
        %v1702 = vsub.f32 %v1498, %v1656
        %v1703 = vsub.f32 %v1500, %v1659
        %v1704 = vsub.f32 %v1502, %v1662
        %v1705 = vsub.f32 %v1504, %v1665
        %v1706 = vsub.f32 %v1602, %v1668
        %v1707 = vsub.f32 %v1604, %v1671
        %v1708 = vsub.f32 %v1606, %v1674
        %v1709 = vsub.f32 %v1608, %v1677
        %v1710 = vsub.f32 %v1610, %v1680
        %v1711 = vsub.f32 %v1612, %v1683
        %v1712 = vsub.f32 %v1614, %v1686
        %v1713 = vsub.f32 %v1616, %v1689
        %v1714 = vmul.f32 %v1690, 1.442695
        %v1715 = vpow.pop %v1714
        %v1716 = vmul.f32 %v1691, 1.442695
        %v1717 = vpow.pop %v1716
        %v1718 = vmul.f32 %v1692, 1.442695
        %v1719 = vpow.pop %v1718
        %v1720 = vmul.f32 %v1693, 1.442695
        %v1721 = vpow.pop %v1720
        %v1722 = vmul.f32 %v1694, 1.442695
        %v1723 = vpow.pop %v1722
        %v1724 = vmul.f32 %v1695, 1.442695
        %v1725 = vpow.pop %v1724
        %v1726 = vmul.f32 %v1696, 1.442695
        %v1727 = vpow.pop %v1726
        %v1728 = vmul.f32 %v1697, 1.442695
        %v1729 = vpow.pop %v1728
        %v1730 = vmul.f32 %v1698, 1.442695
        %v1731 = vpow.pop %v1730
        %v1732 = vmul.f32 %v1699, 1.442695
        %v1733 = vpow.pop %v1732
        %v1734 = vmul.f32 %v1700, 1.442695
        %v1735 = vpow.pop %v1734
        %v1736 = vmul.f32 %v1701, 1.442695
        %v1737 = vpow.pop %v1736
        %v1738 = vmul.f32 %v1702, 1.442695
        %v1739 = vpow.pop %v1738
        %v1740 = vmul.f32 %v1703, 1.442695
        %v1741 = vpow.pop %v1740
        %v1742 = vmul.f32 %v1704, 1.442695
        %v1743 = vpow.pop %v1742
        %v1744 = vmul.f32 %v1705, 1.442695
        %v1745 = vpow.pop %v1744
        %v1746 = vmul.f32 %v1706, 1.442695
        %v1747 = vpow.pop %v1746
        %v1748 = vmul.f32 %v1707, 1.442695
        %v1749 = vpow.pop %v1748
        %v1750 = vmul.f32 %v1708, 1.442695
        %v1751 = vpow.pop %v1750
        %v1752 = vmul.f32 %v1709, 1.442695
        %v1753 = vpow.pop %v1752
        %v1754 = vmul.f32 %v1710, 1.442695
        %v1755 = vpow.pop %v1754
        %v1756 = vmul.f32 %v1711, 1.442695
        %v1757 = vpow.pop %v1756
        %v1758 = vmul.f32 %v1712, 1.442695
        %v1759 = vpow.pop %v1758
        %v1760 = vmul.f32 %v1713, 1.442695
        %v1761 = vpow.pop %v1760
        %v1762 = vsel %vm1617, %v1715, 0.0
        %1763 = vadd.xlane.f32.xlu0 %v1762
        %v1764 = vpop.xlane.xlu0 %1763
        %v1765 = vsel %vm1617, %v1717, 0.0
        %1766 = vadd.xlane.f32.xlu0 %v1765
        %v1767 = vpop.xlane.xlu0 %1766
        %v1768 = vsel %vm1617, %v1719, 0.0
        %1769 = vadd.xlane.f32.xlu0 %v1768
        %v1770 = vpop.xlane.xlu0 %1769
        %v1771 = vsel %vm1617, %v1721, 0.0
        %1772 = vadd.xlane.f32.xlu0 %v1771
        %v1773 = vpop.xlane.xlu0 %1772
        %v1774 = vsel %vm1617, %v1723, 0.0
        %1775 = vadd.xlane.f32.xlu0 %v1774
        %v1776 = vpop.xlane.xlu0 %1775
        %v1777 = vsel %vm1617, %v1725, 0.0
        %1778 = vadd.xlane.f32.xlu0 %v1777
        %v1779 = vpop.xlane.xlu0 %1778
        %v1780 = vsel %vm1617, %v1727, 0.0
        %1781 = vadd.xlane.f32.xlu0 %v1780
        %v1782 = vpop.xlane.xlu0 %1781
        %v1783 = vsel %vm1617, %v1729, 0.0
        %1784 = vadd.xlane.f32.xlu0 %v1783
        %v1785 = vpop.xlane.xlu0 %1784
        %v1786 = vsel %vm1617, %v1731, 0.0
        %1787 = vadd.xlane.f32.xlu0 %v1786
        %v1788 = vpop.xlane.xlu0 %1787
        %v1789 = vsel %vm1617, %v1733, 0.0
        %1790 = vadd.xlane.f32.xlu0 %v1789
        %v1791 = vpop.xlane.xlu0 %1790
        %v1792 = vsel %vm1617, %v1735, 0.0
        %1793 = vadd.xlane.f32.xlu0 %v1792
        %v1794 = vpop.xlane.xlu0 %1793
        %v1795 = vsel %vm1617, %v1737, 0.0
        %1796 = vadd.xlane.f32.xlu0 %v1795
        %v1797 = vpop.xlane.xlu0 %1796
        %v1798 = vsel %vm1617, %v1739, 0.0
        %1799 = vadd.xlane.f32.xlu0 %v1798
        %v1800 = vpop.xlane.xlu0 %1799
        %v1801 = vsel %vm1617, %v1741, 0.0
        %1802 = vadd.xlane.f32.xlu0 %v1801
        %v1803 = vpop.xlane.xlu0 %1802
        %v1804 = vsel %vm1617, %v1743, 0.0
        %1805 = vadd.xlane.f32.xlu0 %v1804
        %v1806 = vpop.xlane.xlu0 %1805
        %v1807 = vsel %vm1617, %v1745, 0.0
        %1808 = vadd.xlane.f32.xlu0 %v1807
        %v1809 = vpop.xlane.xlu0 %1808
        %v1810 = vsel %vm1617, %v1747, 0.0
        %1811 = vadd.xlane.f32.xlu0 %v1810
        %v1812 = vpop.xlane.xlu0 %1811
        %v1813 = vsel %vm1617, %v1749, 0.0
        %1814 = vadd.xlane.f32.xlu0 %v1813
        %v1815 = vpop.xlane.xlu0 %1814
        %v1816 = vsel %vm1617, %v1751, 0.0
        %1817 = vadd.xlane.f32.xlu0 %v1816
        %v1818 = vpop.xlane.xlu0 %1817
        %v1819 = vsel %vm1617, %v1753, 0.0
        %1820 = vadd.xlane.f32.xlu0 %v1819
        %v1821 = vpop.xlane.xlu0 %1820
        %v1822 = vsel %vm1617, %v1755, 0.0
        %1823 = vadd.xlane.f32.xlu0 %v1822
        %v1824 = vpop.xlane.xlu0 %1823
        %v1825 = vsel %vm1617, %v1757, 0.0
        %1826 = vadd.xlane.f32.xlu0 %v1825
        %v1827 = vpop.xlane.xlu0 %1826
        %v1828 = vsel %vm1617, %v1759, 0.0
        %1829 = vadd.xlane.f32.xlu0 %v1828
        %v1830 = vpop.xlane.xlu0 %1829
        %v1831 = vsel %vm1617, %v1761, 0.0
        %1832 = vadd.xlane.f32.xlu0 %v1831
        %v1833 = vpop.xlane.xlu0 %1832
        %v1834 = vrcp.pop %v1764
        %v1835 = vmul.f32 %v1764, %v1834
        %v1836 = vsub.f32 1.0, %v1835
        %v1837 = vmul.f32 %v1834, %v1836
        %v1838 = vadd.f32 %v1834, %v1837
        %vm1839 = vweird.f32 %v1764
        %vm1840 = vweird.f32 %v1834
        %vm1841 = vmor %vm1839, %vm1840
        %v1842 = vsel %vm1841, %v1834, %v1838
        %v1843 = vand.u32 2147483647, %v1764
        %vm1844 = vcmp.eq.f32.partialorder %v1843, 8.507059e+37
        %v1845 = vand.u32 %v1764, 2147483648
        %v1846 = vor.u32 1.1754944e-38, %v1845
        %v1847 = vsel %vm1844, %v1846, %v1842
        %v1848 = vmul.f32 %v1715, %v1847
        %v1849 = vrcp.pop %v1767
        %v1850 = vmul.f32 %v1767, %v1849
        %v1851 = vsub.f32 1.0, %v1850
        %v1852 = vmul.f32 %v1849, %v1851
        %v1853 = vadd.f32 %v1849, %v1852
        %vm1854 = vweird.f32 %v1767
        %vm1855 = vweird.f32 %v1849
        %vm1856 = vmor %vm1854, %vm1855
        %v1857 = vsel %vm1856, %v1849, %v1853
        %v1858 = vand.u32 2147483647, %v1767
        %vm1859 = vcmp.eq.f32.partialorder %v1858, 8.507059e+37
        %v1860 = vand.u32 %v1767, 2147483648
        %v1861 = vor.u32 1.1754944e-38, %v1860
        %v1862 = vsel %vm1859, %v1861, %v1857
        %v1863 = vmul.f32 %v1717, %v1862
        %v1864 = vrcp.pop %v1770
        %v1865 = vmul.f32 %v1770, %v1864
        %v1866 = vsub.f32 1.0, %v1865
        %v1867 = vmul.f32 %v1864, %v1866
        %v1868 = vadd.f32 %v1864, %v1867
        %vm1869 = vweird.f32 %v1770
        %vm1870 = vweird.f32 %v1864
        %vm1871 = vmor %vm1869, %vm1870
        %v1872 = vsel %vm1871, %v1864, %v1868
        %v1873 = vand.u32 2147483647, %v1770
        %vm1874 = vcmp.eq.f32.partialorder %v1873, 8.507059e+37
        %v1875 = vand.u32 %v1770, 2147483648
        %v1876 = vor.u32 1.1754944e-38, %v1875
        %v1877 = vsel %vm1874, %v1876, %v1872
        %v1878 = vmul.f32 %v1719, %v1877
        %v1879 = vrcp.pop %v1773
        %v1880 = vmul.f32 %v1773, %v1879
        %v1881 = vsub.f32 1.0, %v1880
        %v1882 = vmul.f32 %v1879, %v1881
        %v1883 = vadd.f32 %v1879, %v1882
        %vm1884 = vweird.f32 %v1773
        %vm1885 = vweird.f32 %v1879
        %vm1886 = vmor %vm1884, %vm1885
        %v1887 = vsel %vm1886, %v1879, %v1883
        %v1888 = vand.u32 2147483647, %v1773
        %vm1889 = vcmp.eq.f32.partialorder %v1888, 8.507059e+37
        %v1890 = vand.u32 %v1773, 2147483648
        %v1891 = vor.u32 1.1754944e-38, %v1890
        %v1892 = vsel %vm1889, %v1891, %v1887
        %v1893 = vmul.f32 %v1721, %v1892
        %v1894 = vrcp.pop %v1776
        %v1895 = vmul.f32 %v1776, %v1894
        %v1896 = vsub.f32 1.0, %v1895
        %v1897 = vmul.f32 %v1894, %v1896
        %v1898 = vadd.f32 %v1894, %v1897
        %vm1899 = vweird.f32 %v1776
        %vm1900 = vweird.f32 %v1894
        %vm1901 = vmor %vm1899, %vm1900
        %v1902 = vsel %vm1901, %v1894, %v1898
        %v1903 = vand.u32 2147483647, %v1776
        %vm1904 = vcmp.eq.f32.partialorder %v1903, 8.507059e+37
        %v1905 = vand.u32 %v1776, 2147483648
        %v1906 = vor.u32 1.1754944e-38, %v1905
        %v1907 = vsel %vm1904, %v1906, %v1902
        %v1908 = vmul.f32 %v1723, %v1907
        %v1909 = vrcp.pop %v1779
        %v1910 = vmul.f32 %v1779, %v1909
        %v1911 = vsub.f32 1.0, %v1910
        %v1912 = vmul.f32 %v1909, %v1911
        %v1913 = vadd.f32 %v1909, %v1912
        %vm1914 = vweird.f32 %v1779
        %vm1915 = vweird.f32 %v1909
        %vm1916 = vmor %vm1914, %vm1915
        %v1917 = vsel %vm1916, %v1909, %v1913
        %v1918 = vand.u32 2147483647, %v1779
        %vm1919 = vcmp.eq.f32.partialorder %v1918, 8.507059e+37
        %v1920 = vand.u32 %v1779, 2147483648
        %v1921 = vor.u32 1.1754944e-38, %v1920
        %v1922 = vsel %vm1919, %v1921, %v1917
        %v1923 = vmul.f32 %v1725, %v1922
        %v1924 = vrcp.pop %v1782
        %v1925 = vmul.f32 %v1782, %v1924
        %v1926 = vsub.f32 1.0, %v1925
        %v1927 = vmul.f32 %v1924, %v1926
        %v1928 = vadd.f32 %v1924, %v1927
        %vm1929 = vweird.f32 %v1782
        %vm1930 = vweird.f32 %v1924
        %vm1931 = vmor %vm1929, %vm1930
        %v1932 = vsel %vm1931, %v1924, %v1928
        %v1933 = vand.u32 2147483647, %v1782
        %vm1934 = vcmp.eq.f32.partialorder %v1933, 8.507059e+37
        %v1935 = vand.u32 %v1782, 2147483648
        %v1936 = vor.u32 1.1754944e-38, %v1935
        %v1937 = vsel %vm1934, %v1936, %v1932
        %v1938 = vmul.f32 %v1727, %v1937
        %v1939 = vrcp.pop %v1785
        %v1940 = vmul.f32 %v1785, %v1939
        %v1941 = vsub.f32 1.0, %v1940
        %v1942 = vmul.f32 %v1939, %v1941
        %v1943 = vadd.f32 %v1939, %v1942
        %vm1944 = vweird.f32 %v1785
        %vm1945 = vweird.f32 %v1939
        %vm1946 = vmor %vm1944, %vm1945
        %v1947 = vsel %vm1946, %v1939, %v1943
        %v1948 = vand.u32 2147483647, %v1785
        %vm1949 = vcmp.eq.f32.partialorder %v1948, 8.507059e+37
        %v1950 = vand.u32 %v1785, 2147483648
        %v1951 = vor.u32 1.1754944e-38, %v1950
        %v1952 = vsel %vm1949, %v1951, %v1947
        %v1953 = vmul.f32 %v1729, %v1952
        %v1954 = vrcp.pop %v1788
        %v1955 = vmul.f32 %v1788, %v1954
        %v1956 = vsub.f32 1.0, %v1955
        %v1957 = vmul.f32 %v1954, %v1956
        %v1958 = vadd.f32 %v1954, %v1957
        %vm1959 = vweird.f32 %v1788
        %vm1960 = vweird.f32 %v1954
        %vm1961 = vmor %vm1959, %vm1960
        %v1962 = vsel %vm1961, %v1954, %v1958
        %v1963 = vand.u32 2147483647, %v1788
        %vm1964 = vcmp.eq.f32.partialorder %v1963, 8.507059e+37
        %v1965 = vand.u32 %v1788, 2147483648
        %v1966 = vor.u32 1.1754944e-38, %v1965
        %v1967 = vsel %vm1964, %v1966, %v1962
        %v1968 = vmul.f32 %v1731, %v1967
        %v1969 = vrcp.pop %v1791
        %v1970 = vmul.f32 %v1791, %v1969
        %v1971 = vsub.f32 1.0, %v1970
        %v1972 = vmul.f32 %v1969, %v1971
        %v1973 = vadd.f32 %v1969, %v1972
        %vm1974 = vweird.f32 %v1791
        %vm1975 = vweird.f32 %v1969
        %vm1976 = vmor %vm1974, %vm1975
        %v1977 = vsel %vm1976, %v1969, %v1973
        %v1978 = vand.u32 2147483647, %v1791
        %vm1979 = vcmp.eq.f32.partialorder %v1978, 8.507059e+37
        %v1980 = vand.u32 %v1791, 2147483648
        %v1981 = vor.u32 1.1754944e-38, %v1980
        %v1982 = vsel %vm1979, %v1981, %v1977
        %v1983 = vmul.f32 %v1733, %v1982
        %v1984 = vrcp.pop %v1794
        %v1985 = vmul.f32 %v1794, %v1984
        %v1986 = vsub.f32 1.0, %v1985
        %v1987 = vmul.f32 %v1984, %v1986
        %v1988 = vadd.f32 %v1984, %v1987
        %vm1989 = vweird.f32 %v1794
        %vm1990 = vweird.f32 %v1984
        %vm1991 = vmor %vm1989, %vm1990
        %v1992 = vsel %vm1991, %v1984, %v1988
        %v1993 = vand.u32 2147483647, %v1794
        %vm1994 = vcmp.eq.f32.partialorder %v1993, 8.507059e+37
        %v1995 = vand.u32 %v1794, 2147483648
        %v1996 = vor.u32 1.1754944e-38, %v1995
        %v1997 = vsel %vm1994, %v1996, %v1992
        %v1998 = vmul.f32 %v1735, %v1997
        %v1999 = vrcp.pop %v1797
        %v2000 = vmul.f32 %v1797, %v1999
        %v2001 = vsub.f32 1.0, %v2000
        %v2002 = vmul.f32 %v1999, %v2001
        %v2003 = vadd.f32 %v1999, %v2002
        %vm2004 = vweird.f32 %v1797
        %vm2005 = vweird.f32 %v1999
        %vm2006 = vmor %vm2004, %vm2005
        %v2007 = vsel %vm2006, %v1999, %v2003
        %v2008 = vand.u32 2147483647, %v1797
        %vm2009 = vcmp.eq.f32.partialorder %v2008, 8.507059e+37
        %v2010 = vand.u32 %v1797, 2147483648
        %v2011 = vor.u32 1.1754944e-38, %v2010
        %v2012 = vsel %vm2009, %v2011, %v2007
        %v2013 = vmul.f32 %v1737, %v2012
        %v2014 = vrcp.pop %v1800
        %v2015 = vmul.f32 %v1800, %v2014
        %v2016 = vsub.f32 1.0, %v2015
        %v2017 = vmul.f32 %v2014, %v2016
        %v2018 = vadd.f32 %v2014, %v2017
        %vm2019 = vweird.f32 %v1800
        %vm2020 = vweird.f32 %v2014
        %vm2021 = vmor %vm2019, %vm2020
        %v2022 = vsel %vm2021, %v2014, %v2018
        %v2023 = vand.u32 2147483647, %v1800
        %vm2024 = vcmp.eq.f32.partialorder %v2023, 8.507059e+37
        %v2025 = vand.u32 %v1800, 2147483648
        %v2026 = vor.u32 1.1754944e-38, %v2025
        %v2027 = vsel %vm2024, %v2026, %v2022
        %v2028 = vmul.f32 %v1739, %v2027
        %v2029 = vrcp.pop %v1803
        %v2030 = vmul.f32 %v1803, %v2029
        %v2031 = vsub.f32 1.0, %v2030
        %v2032 = vmul.f32 %v2029, %v2031
        %v2033 = vadd.f32 %v2029, %v2032
        %vm2034 = vweird.f32 %v1803
        %vm2035 = vweird.f32 %v2029
        %vm2036 = vmor %vm2034, %vm2035
        %v2037 = vsel %vm2036, %v2029, %v2033
        %v2038 = vand.u32 2147483647, %v1803
        %vm2039 = vcmp.eq.f32.partialorder %v2038, 8.507059e+37
        %v2040 = vand.u32 %v1803, 2147483648
        %v2041 = vor.u32 1.1754944e-38, %v2040
        %v2042 = vsel %vm2039, %v2041, %v2037
        %v2043 = vmul.f32 %v1741, %v2042
        %v2044 = vrcp.pop %v1806
        %v2045 = vmul.f32 %v1806, %v2044
        %v2046 = vsub.f32 1.0, %v2045
        %v2047 = vmul.f32 %v2044, %v2046
        %v2048 = vadd.f32 %v2044, %v2047
        %vm2049 = vweird.f32 %v1806
        %vm2050 = vweird.f32 %v2044
        %vm2051 = vmor %vm2049, %vm2050
        %v2052 = vsel %vm2051, %v2044, %v2048
        %v2053 = vand.u32 2147483647, %v1806
        %vm2054 = vcmp.eq.f32.partialorder %v2053, 8.507059e+37
        %v2055 = vand.u32 %v1806, 2147483648
        %v2056 = vor.u32 1.1754944e-38, %v2055
        %v2057 = vsel %vm2054, %v2056, %v2052
        %v2058 = vmul.f32 %v1743, %v2057
        %v2059 = vrcp.pop %v1809
        %v2060 = vmul.f32 %v1809, %v2059
        %v2061 = vsub.f32 1.0, %v2060
        %v2062 = vmul.f32 %v2059, %v2061
        %v2063 = vadd.f32 %v2059, %v2062
        %vm2064 = vweird.f32 %v1809
        %vm2065 = vweird.f32 %v2059
        %vm2066 = vmor %vm2064, %vm2065
        %v2067 = vsel %vm2066, %v2059, %v2063
        %v2068 = vand.u32 2147483647, %v1809
        %vm2069 = vcmp.eq.f32.partialorder %v2068, 8.507059e+37
        %v2070 = vand.u32 %v1809, 2147483648
        %v2071 = vor.u32 1.1754944e-38, %v2070
        %v2072 = vsel %vm2069, %v2071, %v2067
        %v2073 = vmul.f32 %v1745, %v2072
        %v2074 = vrcp.pop %v1812
        %v2075 = vmul.f32 %v1812, %v2074
        %v2076 = vsub.f32 1.0, %v2075
        %v2077 = vmul.f32 %v2074, %v2076
        %v2078 = vadd.f32 %v2074, %v2077
        %vm2079 = vweird.f32 %v1812
        %vm2080 = vweird.f32 %v2074
        %vm2081 = vmor %vm2079, %vm2080
        %v2082 = vsel %vm2081, %v2074, %v2078
        %v2083 = vand.u32 2147483647, %v1812
        %vm2084 = vcmp.eq.f32.partialorder %v2083, 8.507059e+37
        %v2085 = vand.u32 %v1812, 2147483648
        %v2086 = vor.u32 1.1754944e-38, %v2085
        %v2087 = vsel %vm2084, %v2086, %v2082
        %v2088 = vmul.f32 %v1747, %v2087
        %v2089 = vrcp.pop %v1815
        %v2090 = vmul.f32 %v1815, %v2089
        %v2091 = vsub.f32 1.0, %v2090
        %v2092 = vmul.f32 %v2089, %v2091
        %v2093 = vadd.f32 %v2089, %v2092
        %vm2094 = vweird.f32 %v1815
        %vm2095 = vweird.f32 %v2089
        %vm2096 = vmor %vm2094, %vm2095
        %v2097 = vsel %vm2096, %v2089, %v2093
        %v2098 = vand.u32 2147483647, %v1815
        %vm2099 = vcmp.eq.f32.partialorder %v2098, 8.507059e+37
        %v2100 = vand.u32 %v1815, 2147483648
        %v2101 = vor.u32 1.1754944e-38, %v2100
        %v2102 = vsel %vm2099, %v2101, %v2097
        %v2103 = vmul.f32 %v1749, %v2102
        %v2104 = vrcp.pop %v1818
        %v2105 = vmul.f32 %v1818, %v2104
        %v2106 = vsub.f32 1.0, %v2105
        %v2107 = vmul.f32 %v2104, %v2106
        %v2108 = vadd.f32 %v2104, %v2107
        %vm2109 = vweird.f32 %v1818
        %vm2110 = vweird.f32 %v2104
        %vm2111 = vmor %vm2109, %vm2110
        %v2112 = vsel %vm2111, %v2104, %v2108
        %v2113 = vand.u32 2147483647, %v1818
        %vm2114 = vcmp.eq.f32.partialorder %v2113, 8.507059e+37
        %v2115 = vand.u32 %v1818, 2147483648
        %v2116 = vor.u32 1.1754944e-38, %v2115
        %v2117 = vsel %vm2114, %v2116, %v2112
        %v2118 = vmul.f32 %v1751, %v2117
        %v2119 = vrcp.pop %v1821
        %v2120 = vmul.f32 %v1821, %v2119
        %v2121 = vsub.f32 1.0, %v2120
        %v2122 = vmul.f32 %v2119, %v2121
        %v2123 = vadd.f32 %v2119, %v2122
        %vm2124 = vweird.f32 %v1821
        %vm2125 = vweird.f32 %v2119
        %vm2126 = vmor %vm2124, %vm2125
        %v2127 = vsel %vm2126, %v2119, %v2123
        %v2128 = vand.u32 2147483647, %v1821
        %vm2129 = vcmp.eq.f32.partialorder %v2128, 8.507059e+37
        %v2130 = vand.u32 %v1821, 2147483648
        %v2131 = vor.u32 1.1754944e-38, %v2130
        %v2132 = vsel %vm2129, %v2131, %v2127
        %v2133 = vmul.f32 %v1753, %v2132
        %v2134 = vrcp.pop %v1824
        %v2135 = vmul.f32 %v1824, %v2134
        %v2136 = vsub.f32 1.0, %v2135
        %v2137 = vmul.f32 %v2134, %v2136
        %v2138 = vadd.f32 %v2134, %v2137
        %vm2139 = vweird.f32 %v1824
        %vm2140 = vweird.f32 %v2134
        %vm2141 = vmor %vm2139, %vm2140
        %v2142 = vsel %vm2141, %v2134, %v2138
        %v2143 = vand.u32 2147483647, %v1824
        %vm2144 = vcmp.eq.f32.partialorder %v2143, 8.507059e+37
        %v2145 = vand.u32 %v1824, 2147483648
        %v2146 = vor.u32 1.1754944e-38, %v2145
        %v2147 = vsel %vm2144, %v2146, %v2142
        %v2148 = vmul.f32 %v1755, %v2147
        %v2149 = vrcp.pop %v1827
        %v2150 = vmul.f32 %v1827, %v2149
        %v2151 = vsub.f32 1.0, %v2150
        %v2152 = vmul.f32 %v2149, %v2151
        %v2153 = vadd.f32 %v2149, %v2152
        %vm2154 = vweird.f32 %v1827
        %vm2155 = vweird.f32 %v2149
        %vm2156 = vmor %vm2154, %vm2155
        %v2157 = vsel %vm2156, %v2149, %v2153
        %v2158 = vand.u32 2147483647, %v1827
        %vm2159 = vcmp.eq.f32.partialorder %v2158, 8.507059e+37
        %v2160 = vand.u32 %v1827, 2147483648
        %v2161 = vor.u32 1.1754944e-38, %v2160
        %v2162 = vsel %vm2159, %v2161, %v2157
        %v2163 = vmul.f32 %v1757, %v2162
        %v2164 = vrcp.pop %v1830
        %v2165 = vmul.f32 %v1830, %v2164
        %v2166 = vsub.f32 1.0, %v2165
        %v2167 = vmul.f32 %v2164, %v2166
        %v2168 = vadd.f32 %v2164, %v2167
        %vm2169 = vweird.f32 %v1830
        %vm2170 = vweird.f32 %v2164
        %vm2171 = vmor %vm2169, %vm2170
        %v2172 = vsel %vm2171, %v2164, %v2168
        %v2173 = vand.u32 2147483647, %v1830
        %vm2174 = vcmp.eq.f32.partialorder %v2173, 8.507059e+37
        %v2175 = vand.u32 %v1830, 2147483648
        %v2176 = vor.u32 1.1754944e-38, %v2175
        %v2177 = vsel %vm2174, %v2176, %v2172
        %v2178 = vmul.f32 %v1759, %v2177
        %v2179 = vrcp.pop %v1833
        %v2180 = vmul.f32 %v1833, %v2179
        %v2181 = vsub.f32 1.0, %v2180
        %v2182 = vmul.f32 %v2179, %v2181
        %v2183 = vadd.f32 %v2179, %v2182
        %vm2184 = vweird.f32 %v1833
        %vm2185 = vweird.f32 %v2179
        %vm2186 = vmor %vm2184, %vm2185
        %v2187 = vsel %vm2186, %v2179, %v2183
        %v2188 = vand.u32 2147483647, %v1833
        %vm2189 = vcmp.eq.f32.partialorder %v2188, 8.507059e+37
        %v2190 = vand.u32 %v1833, 2147483648
        %v2191 = vor.u32 1.1754944e-38, %v2190
        %v2192 = vsel %vm2189, %v2191, %v2187
        %v2193 = vmul.f32 %v1761, %v2192
        %v2194 = vrot.slane %v1878, 4
        %v2195 = vsel %vm1281, %v2194, %v1848
        %v2196 = vrot.slane %v1848, 4
        %v2197 = vsel %vm1281, %v1878, %v2196
        %v2199 = vunpack.c.l.s4 1983009808
        %v2200 = vunpack.c.0.s8 %v2199
        %v2201 = vperm.slane %v2195, %v2200
        %v2203 = vunpack.c.l.s4 1983009808
        %v2204 = vunpack.c.0.s8 %v2203
        %v2205 = vperm.slane %v2197, %v2204
        %v2206 = vrot.slane %v1893, 4
        %v2207 = vsel %vm1281, %v2206, %v1863
        %v2208 = vrot.slane %v1863, 4
        %v2209 = vsel %vm1281, %v1893, %v2208
        %v2211 = vunpack.c.l.s4 1983009808
        %v2212 = vunpack.c.0.s8 %v2211
        %v2213 = vperm.slane %v2207, %v2212
        %v2215 = vunpack.c.l.s4 1983009808
        %v2216 = vunpack.c.0.s8 %v2215
        %v2217 = vperm.slane %v2209, %v2216
        %v2218 = vrot.slane %v1938, 4
        %v2219 = vsel %vm1281, %v2218, %v1908
        %v2220 = vrot.slane %v1908, 4
        %v2221 = vsel %vm1281, %v1938, %v2220
        %v2223 = vunpack.c.l.s4 1983009808
        %v2224 = vunpack.c.0.s8 %v2223
        %v2225 = vperm.slane %v2219, %v2224
        %v2227 = vunpack.c.l.s4 1983009808
        %v2228 = vunpack.c.0.s8 %v2227
        %v2229 = vperm.slane %v2221, %v2228
        %v2230 = vrot.slane %v1953, 4
        %v2231 = vsel %vm1281, %v2230, %v1923
        %v2232 = vrot.slane %v1923, 4
        %v2233 = vsel %vm1281, %v1953, %v2232
        %v2235 = vunpack.c.l.s4 1983009808
        %v2236 = vunpack.c.0.s8 %v2235
        %v2237 = vperm.slane %v2231, %v2236
        %v2239 = vunpack.c.l.s4 1983009808
        %v2240 = vunpack.c.0.s8 %v2239
        %v2241 = vperm.slane %v2233, %v2240
        %v2242 = vrot.slane %v2213, 4
        %v2243 = vsel %vm1281, %v2242, %v2201
        %v2244 = vrot.slane %v2201, 4
        %v2245 = vsel %vm1281, %v2213, %v2244
        %v2247 = vunpack.c.l.s4 1934713408
        %v2248 = vunpack.c.0.s8 %v2247
        %v2249 = vperm.slane %v2243, %v2248
        %v2251 = vunpack.c.l.s4 1934713408
        %v2252 = vunpack.c.0.s8 %v2251
        %v2253 = vperm.slane %v2245, %v2252
        %v2254 = vrot.slane %v2217, 4
        %v2255 = vsel %vm1281, %v2254, %v2205
        %v2256 = vrot.slane %v2205, 4
        %v2257 = vsel %vm1281, %v2217, %v2256
        %v2259 = vunpack.c.l.s4 1934713408
        %v2260 = vunpack.c.0.s8 %v2259
        %v2261 = vperm.slane %v2255, %v2260
        %v2263 = vunpack.c.l.s4 1934713408
        %v2264 = vunpack.c.0.s8 %v2263
        %v2265 = vperm.slane %v2257, %v2264
        %v2266 = vrot.slane %v2237, 4
        %v2267 = vsel %vm1281, %v2266, %v2225
        %v2268 = vrot.slane %v2225, 4
        %v2269 = vsel %vm1281, %v2237, %v2268
        %v2271 = vunpack.c.l.s4 1934713408
        %v2272 = vunpack.c.0.s8 %v2271
        %v2273 = vperm.slane %v2267, %v2272
        %v2275 = vunpack.c.l.s4 1934713408
        %v2276 = vunpack.c.0.s8 %v2275
        %v2277 = vperm.slane %v2269, %v2276
        %v2278 = vrot.slane %v2241, 4
        %v2279 = vsel %vm1281, %v2278, %v2229
        %v2280 = vrot.slane %v2229, 4
        %v2281 = vsel %vm1281, %v2241, %v2280
        %v2283 = vunpack.c.l.s4 1934713408
        %v2284 = vunpack.c.0.s8 %v2283
        %v2285 = vperm.slane %v2279, %v2284
        %v2287 = vunpack.c.l.s4 1934713408
        %v2288 = vunpack.c.0.s8 %v2287
        %v2289 = vperm.slane %v2281, %v2288
        %v2290 = vrot.slane %v2273, 4
        %v2291 = vsel %vm1281, %v2290, %v2249
        %v2292 = vrot.slane %v2249, 4
        %v2293 = vsel %vm1281, %v2273, %v2292
        %v2294 = vrot.slane %v2277, 4
        %v2295 = vsel %vm1281, %v2294, %v2253
        %v2296 = vrot.slane %v2253, 4
        %v2297 = vsel %vm1281, %v2277, %v2296
        %v2298 = vrot.slane %v2285, 4
        %v2299 = vsel %vm1281, %v2298, %v2261
        %v2300 = vrot.slane %v2261, 4
        %v2301 = vsel %vm1281, %v2285, %v2300
        %v2302 = vrot.slane %v2289, 4
        %v2303 = vsel %vm1281, %v2302, %v2265
        %v2304 = vrot.slane %v2265, 4
        %v2305 = vsel %vm1281, %v2289, %v2304
        %v2306 = vrot.slane %v1998, 4
        %v2307 = vsel %vm1281, %v2306, %v1968
        %v2308 = vrot.slane %v1968, 4
        %v2309 = vsel %vm1281, %v1998, %v2308
        %v2311 = vunpack.c.l.s4 1983009808
        %v2312 = vunpack.c.0.s8 %v2311
        %v2313 = vperm.slane %v2307, %v2312
        %v2315 = vunpack.c.l.s4 1983009808
        %v2316 = vunpack.c.0.s8 %v2315
        %v2317 = vperm.slane %v2309, %v2316
        %v2318 = vrot.slane %v2013, 4
        %v2319 = vsel %vm1281, %v2318, %v1983
        %v2320 = vrot.slane %v1983, 4
        %v2321 = vsel %vm1281, %v2013, %v2320
        %v2323 = vunpack.c.l.s4 1983009808
        %v2324 = vunpack.c.0.s8 %v2323
        %v2325 = vperm.slane %v2319, %v2324
        %v2327 = vunpack.c.l.s4 1983009808
        %v2328 = vunpack.c.0.s8 %v2327
        %v2329 = vperm.slane %v2321, %v2328
        %v2330 = vrot.slane %v2058, 4
        %v2331 = vsel %vm1281, %v2330, %v2028
        %v2332 = vrot.slane %v2028, 4
        %v2333 = vsel %vm1281, %v2058, %v2332
        %v2335 = vunpack.c.l.s4 1983009808
        %v2336 = vunpack.c.0.s8 %v2335
        %v2337 = vperm.slane %v2331, %v2336
        %v2339 = vunpack.c.l.s4 1983009808
        %v2340 = vunpack.c.0.s8 %v2339
        %v2341 = vperm.slane %v2333, %v2340
        %v2342 = vrot.slane %v2073, 4
        %v2343 = vsel %vm1281, %v2342, %v2043
        %v2344 = vrot.slane %v2043, 4
        %v2345 = vsel %vm1281, %v2073, %v2344
        %v2347 = vunpack.c.l.s4 1983009808
        %v2348 = vunpack.c.0.s8 %v2347
        %v2349 = vperm.slane %v2343, %v2348
        %v2351 = vunpack.c.l.s4 1983009808
        %v2352 = vunpack.c.0.s8 %v2351
        %v2353 = vperm.slane %v2345, %v2352
        %v2354 = vrot.slane %v2325, 4
        %v2355 = vsel %vm1281, %v2354, %v2313
        %v2356 = vrot.slane %v2313, 4
        %v2357 = vsel %vm1281, %v2325, %v2356
        %v2359 = vunpack.c.l.s4 1934713408
        %v2360 = vunpack.c.0.s8 %v2359
        %v2361 = vperm.slane %v2355, %v2360
        %v2363 = vunpack.c.l.s4 1934713408
        %v2364 = vunpack.c.0.s8 %v2363
        %v2365 = vperm.slane %v2357, %v2364
        %v2366 = vrot.slane %v2329, 4
        %v2367 = vsel %vm1281, %v2366, %v2317
        %v2368 = vrot.slane %v2317, 4
        %v2369 = vsel %vm1281, %v2329, %v2368
        %v2371 = vunpack.c.l.s4 1934713408
        %v2372 = vunpack.c.0.s8 %v2371
        %v2373 = vperm.slane %v2367, %v2372
        %v2375 = vunpack.c.l.s4 1934713408
        %v2376 = vunpack.c.0.s8 %v2375
        %v2377 = vperm.slane %v2369, %v2376
        %v2378 = vrot.slane %v2349, 4
        %v2379 = vsel %vm1281, %v2378, %v2337
        %v2380 = vrot.slane %v2337, 4
        %v2381 = vsel %vm1281, %v2349, %v2380
        %v2383 = vunpack.c.l.s4 1934713408
        %v2384 = vunpack.c.0.s8 %v2383
        %v2385 = vperm.slane %v2379, %v2384
        %v2387 = vunpack.c.l.s4 1934713408
        %v2388 = vunpack.c.0.s8 %v2387
        %v2389 = vperm.slane %v2381, %v2388
        %v2390 = vrot.slane %v2353, 4
        %v2391 = vsel %vm1281, %v2390, %v2341
        %v2392 = vrot.slane %v2341, 4
        %v2393 = vsel %vm1281, %v2353, %v2392
        %v2395 = vunpack.c.l.s4 1934713408
        %v2396 = vunpack.c.0.s8 %v2395
        %v2397 = vperm.slane %v2391, %v2396
        %v2399 = vunpack.c.l.s4 1934713408
        %v2400 = vunpack.c.0.s8 %v2399
        %v2401 = vperm.slane %v2393, %v2400
        %v2402 = vrot.slane %v2385, 4
        %v2403 = vsel %vm1281, %v2402, %v2361
        %v2404 = vrot.slane %v2361, 4
        %v2405 = vsel %vm1281, %v2385, %v2404
        %v2406 = vrot.slane %v2389, 4
        %v2407 = vsel %vm1281, %v2406, %v2365
        %v2408 = vrot.slane %v2365, 4
        %v2409 = vsel %vm1281, %v2389, %v2408
        %v2410 = vrot.slane %v2397, 4
        %v2411 = vsel %vm1281, %v2410, %v2373
        %v2412 = vrot.slane %v2373, 4
        %v2413 = vsel %vm1281, %v2397, %v2412
        %v2414 = vrot.slane %v2401, 4
        %v2415 = vsel %vm1281, %v2414, %v2377
        %v2416 = vrot.slane %v2377, 4
        %v2417 = vsel %vm1281, %v2401, %v2416
        %v2418 = vrot.slane %v2118, 4
        %v2419 = vsel %vm1281, %v2418, %v2088
        %v2420 = vrot.slane %v2088, 4
        %v2421 = vsel %vm1281, %v2118, %v2420
        %v2423 = vunpack.c.l.s4 1983009808
        %v2424 = vunpack.c.0.s8 %v2423
        %v2425 = vperm.slane %v2419, %v2424
        %v2427 = vunpack.c.l.s4 1983009808
        %v2428 = vunpack.c.0.s8 %v2427
        %v2429 = vperm.slane %v2421, %v2428
        %v2430 = vrot.slane %v2133, 4
        %v2431 = vsel %vm1281, %v2430, %v2103
        %v2432 = vrot.slane %v2103, 4
        %v2433 = vsel %vm1281, %v2133, %v2432
        %v2435 = vunpack.c.l.s4 1983009808
        %v2436 = vunpack.c.0.s8 %v2435
        %v2437 = vperm.slane %v2431, %v2436
        %v2439 = vunpack.c.l.s4 1983009808
        %v2440 = vunpack.c.0.s8 %v2439
        %v2441 = vperm.slane %v2433, %v2440
        %v2442 = vrot.slane %v2178, 4
        %v2443 = vsel %vm1281, %v2442, %v2148
        %v2444 = vrot.slane %v2148, 4
        %v2445 = vsel %vm1281, %v2178, %v2444
        %v2447 = vunpack.c.l.s4 1983009808
        %v2448 = vunpack.c.0.s8 %v2447
        %v2449 = vperm.slane %v2443, %v2448
        %v2451 = vunpack.c.l.s4 1983009808
        %v2452 = vunpack.c.0.s8 %v2451
        %v2453 = vperm.slane %v2445, %v2452
        %v2454 = vrot.slane %v2193, 4
        %v2455 = vsel %vm1281, %v2454, %v2163
        %v2456 = vrot.slane %v2163, 4
        %v2457 = vsel %vm1281, %v2193, %v2456
        %v2459 = vunpack.c.l.s4 1983009808
        %v2460 = vunpack.c.0.s8 %v2459
        %v2461 = vperm.slane %v2455, %v2460
        %v2463 = vunpack.c.l.s4 1983009808
        %v2464 = vunpack.c.0.s8 %v2463
        %v2465 = vperm.slane %v2457, %v2464
        %v2466 = vrot.slane %v2437, 4
        %v2467 = vsel %vm1281, %v2466, %v2425
        %v2468 = vrot.slane %v2425, 4
        %v2469 = vsel %vm1281, %v2437, %v2468
        %v2471 = vunpack.c.l.s4 1934713408
        %v2472 = vunpack.c.0.s8 %v2471
        %v2473 = vperm.slane %v2467, %v2472
        %v2475 = vunpack.c.l.s4 1934713408
        %v2476 = vunpack.c.0.s8 %v2475
        %v2477 = vperm.slane %v2469, %v2476
        %v2478 = vrot.slane %v2441, 4
        %v2479 = vsel %vm1281, %v2478, %v2429
        %v2480 = vrot.slane %v2429, 4
        %v2481 = vsel %vm1281, %v2441, %v2480
        %v2483 = vunpack.c.l.s4 1934713408
        %v2484 = vunpack.c.0.s8 %v2483
        %v2485 = vperm.slane %v2479, %v2484
        %v2487 = vunpack.c.l.s4 1934713408
        %v2488 = vunpack.c.0.s8 %v2487
        %v2489 = vperm.slane %v2481, %v2488
        %v2490 = vrot.slane %v2461, 4
        %v2491 = vsel %vm1281, %v2490, %v2449
        %v2492 = vrot.slane %v2449, 4
        %v2493 = vsel %vm1281, %v2461, %v2492
        %v2495 = vunpack.c.l.s4 1934713408
        %v2496 = vunpack.c.0.s8 %v2495
        %v2497 = vperm.slane %v2491, %v2496
        %v2499 = vunpack.c.l.s4 1934713408
        %v2500 = vunpack.c.0.s8 %v2499
        %v2501 = vperm.slane %v2493, %v2500
        %v2502 = vrot.slane %v2465, 4
        %v2503 = vsel %vm1281, %v2502, %v2453
        %v2504 = vrot.slane %v2453, 4
        %v2505 = vsel %vm1281, %v2465, %v2504
        %v2507 = vunpack.c.l.s4 1934713408
        %v2508 = vunpack.c.0.s8 %v2507
        %v2509 = vperm.slane %v2503, %v2508
        %v2511 = vunpack.c.l.s4 1934713408
        %v2512 = vunpack.c.0.s8 %v2511
        %v2513 = vperm.slane %v2505, %v2512
        %v2514 = vrot.slane %v2497, 4
        %v2515 = vsel %vm1281, %v2514, %v2473
        %v2516 = vrot.slane %v2473, 4
        %v2517 = vsel %vm1281, %v2497, %v2516
        %v2518 = vrot.slane %v2501, 4
        %v2519 = vsel %vm1281, %v2518, %v2477
        %v2520 = vrot.slane %v2477, 4
        %v2521 = vsel %vm1281, %v2501, %v2520
        %v2522 = vrot.slane %v2509, 4
        %v2523 = vsel %vm1281, %v2522, %v2485
        %v2524 = vrot.slane %v2485, 4
        %v2525 = vsel %vm1281, %v2509, %v2524
        %v2526 = vrot.slane %v2513, 4
        %v2527 = vsel %vm1281, %v2526, %v2489
        %v2528 = vrot.slane %v2489, 4
        %v2529 = vsel %vm1281, %v2513, %v2528
        %2533 = vrot.lane.b32.xlu0 %v2293, 8
        %v2534 = vpop.permute.xlu0 %2533
        %2535 = vrot.lane.b32.xlu0 %v2405, 8
        %v2536 = vpop.permute.xlu0 %2535
        %2537 = vrot.lane.b32.xlu0 %v2517, 8
        %v2538 = vpop.permute.xlu0 %2537
        %2545 = vrot.lane.b32.xlu0 %v2295, 16
        %v2546 = vpop.permute.xlu0 %2545
        %2547 = vrot.lane.b32.xlu0 %v2407, 16
        %v2548 = vpop.permute.xlu0 %2547
        %2549 = vrot.lane.b32.xlu0 %v2519, 16
        %v2550 = vpop.permute.xlu0 %2549
        %2557 = vrot.lane.b32.xlu0 %v2297, 24
        %v2558 = vpop.permute.xlu0 %2557
        %2559 = vrot.lane.b32.xlu0 %v2409, 24
        %v2560 = vpop.permute.xlu0 %2559
        %2561 = vrot.lane.b32.xlu0 %v2521, 24
        %v2562 = vpop.permute.xlu0 %2561
        %2569 = vrot.lane.b32.xlu0 %v2299, 32
        %v2570 = vpop.permute.xlu0 %2569
        %2571 = vrot.lane.b32.xlu0 %v2411, 32
        %v2572 = vpop.permute.xlu0 %2571
        %2573 = vrot.lane.b32.xlu0 %v2523, 32
        %v2574 = vpop.permute.xlu0 %2573
        %2581 = vrot.lane.b32.xlu0 %v2301, 40
        %v2582 = vpop.permute.xlu0 %2581
        %2583 = vrot.lane.b32.xlu0 %v2413, 40
        %v2584 = vpop.permute.xlu0 %2583
        %2585 = vrot.lane.b32.xlu0 %v2525, 40
        %v2586 = vpop.permute.xlu0 %2585
        %2593 = vrot.lane.b32.xlu0 %v2303, 48
        %v2594 = vpop.permute.xlu0 %2593
        %2595 = vrot.lane.b32.xlu0 %v2415, 48
        %v2596 = vpop.permute.xlu0 %2595
        %2597 = vrot.lane.b32.xlu0 %v2527, 48
        %v2598 = vpop.permute.xlu0 %2597
        %2605 = vrot.lane.b32.xlu0 %v2305, 56
        %v2606 = vpop.permute.xlu0 %2605
        %2607 = vrot.lane.b32.xlu0 %v2417, 56
        %v2608 = vpop.permute.xlu0 %2607
        %2609 = vrot.lane.b32.xlu0 %v2529, 56
        %v2610 = vpop.permute.xlu0 %2609
        %v2614 = vsel %vm1617, %v2291, %v2534
        %v2615 = vsel %vm1617, %v2403, %v2536
        %v2616 = vsel %vm1617, %v2515, %v2538
        %vm2617 = vcmask 130048
        %v2618 = vsel %vm2617, %v2614, %v2546
        %v2619 = vsel %vm2617, %v2615, %v2548
        %v2620 = vsel %vm2617, %v2616, %v2550
        %vm2621 = vcmask 195584
        %v2622 = vsel %vm2621, %v2618, %v2558
        %v2623 = vsel %vm2621, %v2619, %v2560
        %v2624 = vsel %vm2621, %v2620, %v2562
        %v2625 = vsel %vm1108, %v2622, %v2570
        %v2626 = vsel %vm1108, %v2623, %v2572
        %v2627 = vsel %vm1108, %v2624, %v2574
        %vm2628 = vcmask 326656
        %v2629 = vsel %vm2628, %v2625, %v2582
        %v2630 = vsel %vm2628, %v2626, %v2584
        %v2631 = vsel %vm2628, %v2627, %v2586
        %vm2632 = vcmask 392192
        %v2633 = vsel %vm2632, %v2629, %v2594
        %v2634 = vsel %vm2632, %v2630, %v2596
        %v2635 = vsel %vm2632, %v2631, %v2598
        %vm2636 = vcmask 457728
        %v2637 = vsel %vm2636, %v2633, %v2606
        %v2638 = vsel %vm2636, %v2634, %v2608
        %v2639 = vsel %vm2636, %v2635, %v2610
        %2643 = vrot.lane.b32.xlu0 %v2637, 64
        %v2644 = vpop.permute.xlu0 %2643
        %2645 = vrot.lane.b32.xlu0 %v2638, 64
        %v2646 = vpop.permute.xlu0 %2645
        %2647 = vrot.lane.b32.xlu0 %v2639, 64
        %v2648 = vpop.permute.xlu0 %2647
        %v2652 = vsel %vm1124, %v1160, %v2644
        %v2653 = vsel %vm1124, %v1161, %v2646
        %v2654 = vsel %vm1124, %v1162, %v2648
        %2655 = vst [vmem:[%s929] sm:$0xff] %v2652
        %2656 = vst [vmem:[%s929 + $0x8] sm:$0xff] %v2653
        %2657 = vst [vmem:[%s929 + $0x10] sm:$0xff] %v2654
        %v2659 = vsel %vm1108, %v1160, 0
        %v2662 = vsel %vm1108, %v1161, 0
        %v2665 = vsel %vm1108, %v1162, 0
        %2667 = vmatpush.msra.mxu0 0.0
        %2668 = vmatpush.msra.mxu0 0.0
        %2669 = vmatpush.msra.mxu0 0.0
        %2670 = vmatpush.msra.mxu0 0.0
        %2671 = vmatpush.msra.mxu0 0.0
        %2672 = vmatpush.msra.mxu0 0.0
        %2673 = vmatpush.msra.mxu0 0.0
        %2674 = vmatpush.msra.mxu0 0.0
        %2675 = vmatpush.msra.mxu0 0.0
        %2676 = vmatpush.msra.mxu0 0.0
        %2677 = vmatpush.msra.mxu0 0.0
        %2678 = vmatpush.msra.mxu0 0.0
        %2679 = vmatpush.msra.mxu0 %v1014
        %2680 = vmatpush.msra.mxu0 %v1011
        %2681 = vmatpush.msra.mxu0 %v1008
        %2682 = vmatpush.msra.mxu0 %v1005
        %2683 = vmatmul.f32.gmra.mxu0 %v2659
        %v2684 = vpop.f32.mrf.mxu0
        %v2685 = vadd.f32 0.0, %v2684
        %2686 = vmatmul.f32.gmra.mxu0 %v2662
        %v2687 = vpop.f32.mrf.mxu0
        %v2688 = vadd.f32 0.0, %v2687
        %2689 = vmatmul.f32.gmra.mxu0 %v2665
        %v2690 = vpop.f32.mrf.mxu0
        %v2691 = vadd.f32 0.0, %v2690
        %2692 = vdwg.mxu0
        %2693 = vmatpush.msra.mxu0 0.0
        %2694 = vmatpush.msra.mxu0 0.0
        %2695 = vmatpush.msra.mxu0 0.0
        %2696 = vmatpush.msra.mxu0 0.0
        %2697 = vmatpush.msra.mxu0 0.0
        %2698 = vmatpush.msra.mxu0 0.0
        %2699 = vmatpush.msra.mxu0 0.0
        %2700 = vmatpush.msra.mxu0 0.0
        %2701 = vmatpush.msra.mxu0 0.0
        %2702 = vmatpush.msra.mxu0 0.0
        %2703 = vmatpush.msra.mxu0 0.0
        %2704 = vmatpush.msra.mxu0 0.0
        %2705 = vmatpush.msra.mxu0 %v1015
        %2706 = vmatpush.msra.mxu0 %v1012
        %2707 = vmatpush.msra.mxu0 %v1009
        %2708 = vmatpush.msra.mxu0 %v1006
        %2709 = vmatmul.f32.gmra.mxu0 %v2659
        %v2710 = vpop.f32.mrf.mxu0
        %v2711 = vadd.f32 0.0, %v2710
        %2712 = vmatmul.f32.gmra.mxu0 %v2662
        %v2713 = vpop.f32.mrf.mxu0
        %v2714 = vadd.f32 0.0, %v2713
        %2715 = vmatmul.f32.gmra.mxu0 %v2665
        %v2716 = vpop.f32.mrf.mxu0
        %v2717 = vadd.f32 0.0, %v2716
        %2718 = vdwg.mxu0
        %2719 = vmatpush.msra.mxu0 0.0
        %2720 = vmatpush.msra.mxu0 0.0
        %2721 = vmatpush.msra.mxu0 0.0
        %2722 = vmatpush.msra.mxu0 0.0
        %2723 = vmatpush.msra.mxu0 0.0
        %2724 = vmatpush.msra.mxu0 0.0
        %2725 = vmatpush.msra.mxu0 0.0
        %2726 = vmatpush.msra.mxu0 0.0
        %2727 = vmatpush.msra.mxu0 0.0
        %2728 = vmatpush.msra.mxu0 0.0
        %2729 = vmatpush.msra.mxu0 0.0
        %2730 = vmatpush.msra.mxu0 0.0
        %2731 = vmatpush.msra.mxu0 %v1016
        %2732 = vmatpush.msra.mxu0 %v1013
        %2733 = vmatpush.msra.mxu0 %v1010
        %2734 = vmatpush.msra.mxu0 %v1007
        %2735 = vmatmul.f32.gmra.mxu0 %v2659
        %v2736 = vpop.f32.mrf.mxu0
        %v2737 = vadd.f32 0.0, %v2736
        %2738 = vmatmul.f32.gmra.mxu0 %v2662
        %v2739 = vpop.f32.mrf.mxu0
        %v2740 = vadd.f32 0.0, %v2739
        %2741 = vmatmul.f32.gmra.mxu0 %v2665
        %v2742 = vpop.f32.mrf.mxu0
        %v2743 = vadd.f32 0.0, %v2742
        %2744 = vdwg.mxu0
        %v2745 = vsub.f32 %v2685, 0.5
        %v2746 = vsub.f32 %v2711, 0.5
        %v2747 = vsub.f32 %v2737, 0.5
        %v2748 = vsub.f32 %v2688, 0.5
        %v2749 = vsub.f32 %v2714, 0.5
        %v2750 = vsub.f32 %v2740, 0.5
        %v2751 = vsub.f32 %v2691, 0.5
        %v2752 = vsub.f32 %v2717, 0.5
        %v2753 = vsub.f32 %v2743, 0.5
        %v2754 = vsel %vm1108, %v2637, 0
        %v2756 = vsel %vm1108, %v2638, 0
        %v2758 = vsel %vm1108, %v2639, 0
        %2760 = vmatpush.msra.mxu0 0.0
        %2761 = vmatpush.msra.mxu0 0.0
        %2762 = vmatpush.msra.mxu0 0.0
        %2763 = vmatpush.msra.mxu0 0.0
        %2764 = vmatpush.msra.mxu0 0.0
        %2765 = vmatpush.msra.mxu0 0.0
        %2766 = vmatpush.msra.mxu0 0.0
        %2767 = vmatpush.msra.mxu0 0.0
        %2768 = vmatpush.msra.mxu0 0.0
        %2769 = vmatpush.msra.mxu0 0.0
        %2770 = vmatpush.msra.mxu0 0.0
        %2771 = vmatpush.msra.mxu0 0.0
        %2772 = vmatpush.msra.mxu0 %v1026
        %2773 = vmatpush.msra.mxu0 %v1023
        %2774 = vmatpush.msra.mxu0 %v1020
        %2775 = vmatpush.msra.mxu0 %v1017
        %2776 = vmatmul.f32.gmra.mxu0 %v2754
        %v2777 = vpop.f32.mrf.mxu0
        %v2778 = vadd.f32 0.0, %v2777
        %2779 = vmatmul.f32.gmra.mxu0 %v2756
        %v2780 = vpop.f32.mrf.mxu0
        %v2781 = vadd.f32 0.0, %v2780
        %2782 = vmatmul.f32.gmra.mxu0 %v2758
        %v2783 = vpop.f32.mrf.mxu0
        %v2784 = vadd.f32 0.0, %v2783
        %2785 = vdwg.mxu0
        %2786 = vmatpush.msra.mxu0 0.0
        %2787 = vmatpush.msra.mxu0 0.0
        %2788 = vmatpush.msra.mxu0 0.0
        %2789 = vmatpush.msra.mxu0 0.0
        %2790 = vmatpush.msra.mxu0 0.0
        %2791 = vmatpush.msra.mxu0 0.0
        %2792 = vmatpush.msra.mxu0 0.0
        %2793 = vmatpush.msra.mxu0 0.0
        %2794 = vmatpush.msra.mxu0 0.0
        %2795 = vmatpush.msra.mxu0 0.0
        %2796 = vmatpush.msra.mxu0 0.0
        %2797 = vmatpush.msra.mxu0 0.0
        %2798 = vmatpush.msra.mxu0 %v1027
        %2799 = vmatpush.msra.mxu0 %v1024
        %2800 = vmatpush.msra.mxu0 %v1021
        %2801 = vmatpush.msra.mxu0 %v1018
        %2802 = vmatmul.f32.gmra.mxu0 %v2754
        %v2803 = vpop.f32.mrf.mxu0
        %v2804 = vadd.f32 0.0, %v2803
        %2805 = vmatmul.f32.gmra.mxu0 %v2756
        %v2806 = vpop.f32.mrf.mxu0
        %v2807 = vadd.f32 0.0, %v2806
        %2808 = vmatmul.f32.gmra.mxu0 %v2758
        %v2809 = vpop.f32.mrf.mxu0
        %v2810 = vadd.f32 0.0, %v2809
        %2811 = vdwg.mxu0
        %2812 = vmatpush.msra.mxu0 0.0
        %2813 = vmatpush.msra.mxu0 0.0
        %2814 = vmatpush.msra.mxu0 0.0
        %2815 = vmatpush.msra.mxu0 0.0
        %2816 = vmatpush.msra.mxu0 0.0
        %2817 = vmatpush.msra.mxu0 0.0
        %2818 = vmatpush.msra.mxu0 0.0
        %2819 = vmatpush.msra.mxu0 0.0
        %2820 = vmatpush.msra.mxu0 0.0
        %2821 = vmatpush.msra.mxu0 0.0
        %2822 = vmatpush.msra.mxu0 0.0
        %2823 = vmatpush.msra.mxu0 0.0
        %2824 = vmatpush.msra.mxu0 %v1028
        %2825 = vmatpush.msra.mxu0 %v1025
        %2826 = vmatpush.msra.mxu0 %v1022
        %2827 = vmatpush.msra.mxu0 %v1019
        %2828 = vmatmul.f32.gmra.mxu0 %v2754
        %v2829 = vpop.f32.mrf.mxu0
        %v2830 = vadd.f32 0.0, %v2829
        %2831 = vmatmul.f32.gmra.mxu0 %v2756
        %v2832 = vpop.f32.mrf.mxu0
        %v2833 = vadd.f32 0.0, %v2832
        %2834 = vmatmul.f32.gmra.mxu0 %v2758
        %v2835 = vpop.f32.mrf.mxu0
        %v2836 = vadd.f32 0.0, %v2835
        %2837 = vdwg.mxu0
        %v2839 = vperm.slane %v1029, 0
        %v2840 = vperm.slane %v1029, 1
        %v2841 = vperm.slane %v1029, 2
        %v2845 = vsub.f32 %v2745, %v2839
        %v2846 = vsub.f32 %v2746, %v2840
        %v2847 = vsub.f32 %v2747, %v2841
        %v2848 = vsub.f32 %v2748, %v2839
        %v2849 = vsub.f32 %v2749, %v2840
        %v2850 = vsub.f32 %v2750, %v2841
        %v2851 = vsub.f32 %v2751, %v2839
        %v2852 = vsub.f32 %v2752, %v2840
        %v2853 = vsub.f32 %v2753, %v2841
        %v2854 = vand.u32 2147483647, %v2845
        %v2855 = vand.u32 2147483647, %v2846
        %v2856 = vand.u32 2147483647, %v2847
        %v2857 = vand.u32 2147483647, %v2848
        %v2858 = vand.u32 2147483647, %v2849
        %v2859 = vand.u32 2147483647, %v2850
        %v2860 = vand.u32 2147483647, %v2851
        %v2861 = vand.u32 2147483647, %v2852
        %v2862 = vand.u32 2147483647, %v2853
        %v2863 = vsub.f32 1.0, %v2854
        %v2864 = vsub.f32 1.0, %v2855
        %v2865 = vsub.f32 1.0, %v2856
        %v2866 = vsub.f32 1.0, %v2857
        %v2867 = vsub.f32 1.0, %v2858
        %v2868 = vsub.f32 1.0, %v2859
        %v2869 = vsub.f32 1.0, %v2860
        %v2870 = vsub.f32 1.0, %v2861
        %v2871 = vsub.f32 1.0, %v2862
        %v2872 = vmax.f32 %v2863, 0.0
        %v2873 = vmax.f32 %v2864, 0.0
        %v2874 = vmax.f32 %v2865, 0.0
        %v2875 = vmax.f32 %v2866, 0.0
        %v2876 = vmax.f32 %v2867, 0.0
        %v2877 = vmax.f32 %v2868, 0.0
        %v2878 = vmax.f32 %v2869, 0.0
        %v2879 = vmax.f32 %v2870, 0.0
        %v2880 = vmax.f32 %v2871, 0.0
        %v2881 = vmul.f32 %v2778, %v2872
        %v2882 = vmul.f32 %v2804, %v2873
        %v2883 = vmul.f32 %v2830, %v2874
        %v2884 = vmul.f32 %v2781, %v2875
        %v2885 = vmul.f32 %v2807, %v2876
        %v2886 = vmul.f32 %v2833, %v2877
        %v2887 = vmul.f32 %v2784, %v2878
        %v2888 = vmul.f32 %v2810, %v2879
        %v2889 = vmul.f32 %v2836, %v2880
        %2890 = vmatpush.msra.mxu0 %v1045
        %2891 = vmatpush.msra.mxu0 %v1044
        %2892 = vmatpush.msra.mxu0 %v1043
        %2893 = vmatpush.msra.mxu0 %v1042
        %2894 = vmatpush.msra.mxu0 %v1041
        %2895 = vmatpush.msra.mxu0 %v1040
        %2896 = vmatpush.msra.mxu0 %v1039
        %2897 = vmatpush.msra.mxu0 %v1038
        %2898 = vmatpush.msra.mxu0 %v1037
        %2899 = vmatpush.msra.mxu0 %v1036
        %2900 = vmatpush.msra.mxu0 %v1035
        %2901 = vmatpush.msra.mxu0 %v1034
        %2902 = vmatpush.msra.mxu0 %v1033
        %2903 = vmatpush.msra.mxu0 %v1032
        %2904 = vmatpush.msra.mxu0 %v1031
        %2905 = vmatpush.msra.mxu0 %v1030
        %2906 = vmatmul.f32.gmra.mxu0 %v2881
        %v2907 = vpop.f32.mrf.mxu0
        %v2908 = vadd.f32 0.0, %v2907
        %2909 = vmatmul.f32.gmra.mxu0 %v2884
        %v2910 = vpop.f32.mrf.mxu0
        %v2911 = vadd.f32 0.0, %v2910
        %2912 = vmatmul.f32.gmra.mxu0 %v2887
        %v2913 = vpop.f32.mrf.mxu0
        %v2914 = vadd.f32 0.0, %v2913
        %2915 = vdwg.mxu0
        %2916 = vmatpush.msra.mxu0 %v1061
        %2917 = vmatpush.msra.mxu0 %v1060
        %2918 = vmatpush.msra.mxu0 %v1059
        %2919 = vmatpush.msra.mxu0 %v1058
        %2920 = vmatpush.msra.mxu0 %v1057
        %2921 = vmatpush.msra.mxu0 %v1056
        %2922 = vmatpush.msra.mxu0 %v1055
        %2923 = vmatpush.msra.mxu0 %v1054
        %2924 = vmatpush.msra.mxu0 %v1053
        %2925 = vmatpush.msra.mxu0 %v1052
        %2926 = vmatpush.msra.mxu0 %v1051
        %2927 = vmatpush.msra.mxu0 %v1050
        %2928 = vmatpush.msra.mxu0 %v1049
        %2929 = vmatpush.msra.mxu0 %v1048
        %2930 = vmatpush.msra.mxu0 %v1047
        %2931 = vmatpush.msra.mxu0 %v1046
        %2932 = vmatmul.f32.gmra.mxu0 %v2882
        %v2933 = vpop.f32.mrf.mxu0
        %v2934 = vadd.f32 %v2908, %v2933
        %2935 = vmatmul.f32.gmra.mxu0 %v2885
        %v2936 = vpop.f32.mrf.mxu0
        %v2937 = vadd.f32 %v2911, %v2936
        %2938 = vmatmul.f32.gmra.mxu0 %v2888
        %v2939 = vpop.f32.mrf.mxu0
        %v2940 = vadd.f32 %v2914, %v2939
        %2941 = vdwg.mxu0
        %2942 = vmatpush.msra.mxu0 %v1077
        %2943 = vmatpush.msra.mxu0 %v1076
        %2944 = vmatpush.msra.mxu0 %v1075
        %2945 = vmatpush.msra.mxu0 %v1074
        %2946 = vmatpush.msra.mxu0 %v1073
        %2947 = vmatpush.msra.mxu0 %v1072
        %2948 = vmatpush.msra.mxu0 %v1071
        %2949 = vmatpush.msra.mxu0 %v1070
        %2950 = vmatpush.msra.mxu0 %v1069
        %2951 = vmatpush.msra.mxu0 %v1068
        %2952 = vmatpush.msra.mxu0 %v1067
        %2953 = vmatpush.msra.mxu0 %v1066
        %2954 = vmatpush.msra.mxu0 %v1065
        %2955 = vmatpush.msra.mxu0 %v1064
        %2956 = vmatpush.msra.mxu0 %v1063
        %2957 = vmatpush.msra.mxu0 %v1062
        %2958 = vmatmul.f32.gmra.mxu0 %v2883
        %v2959 = vpop.f32.mrf.mxu0
        %v2960 = vadd.f32 %v2934, %v2959
        %2961 = vmatmul.f32.gmra.mxu0 %v2886
        %v2962 = vpop.f32.mrf.mxu0
        %v2963 = vadd.f32 %v2937, %v2962
        %2964 = vmatmul.f32.gmra.mxu0 %v2889
        %v2965 = vpop.f32.mrf.mxu0
        %v2966 = vadd.f32 %v2940, %v2965
        %2967 = vdwg.mxu0
        %v2968 = vld [vmem:[%s14] sm:$0xff]
        %v2969 = vld [vmem:[%s14 + $0x8] sm:$0xff]
        %v2970 = vld [vmem:[%s14 + $0x10] sm:$0xff]
        %v2971 = vld [vmem:[%s14 + $0x18] sm:$0xff]
        %v2972 = vld [vmem:[%s15] sm:$0x1]
        %v2974 = vperm.slane %v2972, 0
        %v2977 = vsel %vm1108, %v933, 0
        %v2980 = vsel %vm1108, %v934, 0
        %v2983 = vsel %vm1108, %v935, 0
        %2985 = vmatpush.msra.mxu0 0.0
        %2986 = vmatpush.msra.mxu0 0.0
        %2987 = vmatpush.msra.mxu0 0.0
        %2988 = vmatpush.msra.mxu0 0.0
        %2989 = vmatpush.msra.mxu0 0.0
        %2990 = vmatpush.msra.mxu0 0.0
        %2991 = vmatpush.msra.mxu0 0.0
        %2992 = vmatpush.msra.mxu0 0.0
        %2993 = vmatpush.msra.mxu0 0.0
        %2994 = vmatpush.msra.mxu0 0.0
        %2995 = vmatpush.msra.mxu0 0.0
        %2996 = vmatpush.msra.mxu0 0.0
        %2997 = vmatpush.msra.mxu0 %v2971
        %2998 = vmatpush.msra.mxu0 %v2970
        %2999 = vmatpush.msra.mxu0 %v2969
        %3000 = vmatpush.msra.mxu0 %v2968
        %3001 = vmatmul.f32.gmra.mxu0 %v2977
        %v3002 = vpop.f32.mrf.mxu0
        %v3003 = vadd.f32 %v2974, %v3002
        %3004 = vmatmul.f32.gmra.mxu0 %v2980
        %v3005 = vpop.f32.mrf.mxu0
        %v3006 = vadd.f32 %v2974, %v3005
        %3007 = vmatmul.f32.gmra.mxu0 %v2983
        %v3008 = vpop.f32.mrf.mxu0
        %v3009 = vadd.f32 %v2974, %v3008
        %3010 = vdwg.mxu0
        %v3011 = vmul.f32 %v3003, %v1078
        %v3012 = vmul.f32 %v3006, %v1079
        %v3013 = vmul.f32 %v3009, %v1080
        %v3014 = vmul.f32 %v3003, %v1081
        %v3015 = vmul.f32 %v3006, %v1082
        %v3016 = vmul.f32 %v3009, %v1083
        %v3017 = vmul.f32 %v3003, %v1084
        %v3018 = vmul.f32 %v3006, %v1085
        %v3019 = vmul.f32 %v3009, %v1086
        %v3020 = vmul.f32 %v3003, %v1087
        %v3021 = vmul.f32 %v3006, %v1088
        %v3022 = vmul.f32 %v3009, %v1089
        %vm3023 = vcmask 785408
        %v3025 = vsel %vm3023, %v2960, 0
        %v3028 = vsel %vm3023, %v2963, 0
        %v3031 = vsel %vm3023, %v2966, 0
        %3033 = vmatpush.msra.mxu0 0.0
        %3034 = vmatpush.msra.mxu0 0.0
        %3035 = vmatpush.msra.mxu0 0.0
        %3036 = vmatpush.msra.mxu0 0.0
        %3037 = vmatpush.msra.mxu0 %v3022
        %3038 = vmatpush.msra.mxu0 %v3021
        %3039 = vmatpush.msra.mxu0 %v3020
        %3040 = vmatpush.msra.mxu0 %v3019
        %3041 = vmatpush.msra.mxu0 %v3018
        %3042 = vmatpush.msra.mxu0 %v3017
        %3043 = vmatpush.msra.mxu0 %v3016
        %3044 = vmatpush.msra.mxu0 %v3015
        %3045 = vmatpush.msra.mxu0 %v3014
        %3046 = vmatpush.msra.mxu0 %v3013
        %3047 = vmatpush.msra.mxu0 %v3012
        %3048 = vmatpush.msra.mxu0 %v3011
        %3049 = vmatmul.f32.gmra.mxu0 %v3025
        %v3050 = vpop.f32.mrf.mxu0
        %v3051 = vadd.f32 0.0, %v3050
        %3052 = vmatmul.f32.gmra.mxu0 %v3028
        %v3053 = vpop.f32.mrf.mxu0
        %v3054 = vadd.f32 0.0, %v3053
        %3055 = vmatmul.f32.gmra.mxu0 %v3031
        %v3056 = vpop.f32.mrf.mxu0
        %v3057 = vadd.f32 0.0, %v3056
        %3058 = vdwg.mxu0
        %v3059 = vld [vmem:[%s16] sm:$0xff]
        %v3060 = vld [vmem:[%s16 + $0x8] sm:$0xff]
        %v3061 = vld [vmem:[%s16 + $0x10] sm:$0xff]
        %v3062 = vld [vmem:[%s16 + $0x18] sm:$0xff]
        %v3063 = vld [vmem:[%s17] sm:$0x1]
        %v3065 = vperm.slane %v3063, 0
        %v3068 = vsel %vm1108, %v3051, 0
        %v3071 = vsel %vm1108, %v3054, 0
        %v3074 = vsel %vm1108, %v3057, 0
        %3076 = vmatpush.msra.mxu0 0.0
        %3077 = vmatpush.msra.mxu0 0.0
        %3078 = vmatpush.msra.mxu0 0.0
        %3079 = vmatpush.msra.mxu0 0.0
        %3080 = vmatpush.msra.mxu0 0.0
        %3081 = vmatpush.msra.mxu0 0.0
        %3082 = vmatpush.msra.mxu0 0.0
        %3083 = vmatpush.msra.mxu0 0.0
        %3084 = vmatpush.msra.mxu0 0.0
        %3085 = vmatpush.msra.mxu0 0.0
        %3086 = vmatpush.msra.mxu0 0.0
        %3087 = vmatpush.msra.mxu0 0.0
        %3088 = vmatpush.msra.mxu0 %v3062
        %3089 = vmatpush.msra.mxu0 %v3061
        %3090 = vmatpush.msra.mxu0 %v3060
        %3091 = vmatpush.msra.mxu0 %v3059
        %3092 = vmatmul.f32.gmra.mxu0 %v3068
        %v3093 = vpop.f32.mrf.mxu0
        %v3094 = vadd.f32 %v3065, %v3093
        %3095 = vmatmul.f32.gmra.mxu0 %v3071
        %v3096 = vpop.f32.mrf.mxu0
        %v3097 = vadd.f32 %v3065, %v3096
        %3098 = vmatmul.f32.gmra.mxu0 %v3074
        %v3099 = vpop.f32.mrf.mxu0
        %v3100 = vadd.f32 %v3065, %v3099
        %3101 = vdwg.mxu0
        %v3102 = vadd.f32 %v930, %v3094
        %v3103 = vadd.f32 %v931, %v3097
        %v3104 = vadd.f32 %v932, %v3100
        %v3105 = vld [vmem:[%s18] sm:$0x1]
        %v3106 = vld [vmem:[%s19] sm:$0x1]
        %v3107 = vsel %vm1108, %v3102, 0.0
        %3108 = vadd.xlane.f32.xlu0 %v3107
        %v3109 = vpop.xlane.xlu0 %3108
        %v3110 = vsel %vm1108, %v3103, 0.0
        %3111 = vadd.xlane.f32.xlu0 %v3110
        %v3112 = vpop.xlane.xlu0 %3111
        %v3113 = vsel %vm1108, %v3104, 0.0
        %3114 = vadd.xlane.f32.xlu0 %v3113
        %v3115 = vpop.xlane.xlu0 %3114
        %v3116 = vrcp.pop 32.0
        %v3117 = vmul.f32 32.0, %v3116
        %v3118 = vsub.f32 1.0, %v3117
        %v3119 = vmul.f32 %v3116, %v3118
        %v3120 = vadd.f32 %v3116, %v3119
        %vm3121 = vweird.f32 %v3116
        %v3122 = vsel %vm3121, %v3116, %v3120
        %v3123 = vmul.f32 %v3109, %v3122
        %v3124 = vmul.f32 %v3112, %v3122
        %v3125 = vmul.f32 %v3115, %v3122
        %v3126 = vsub.f32 %v3102, %v3123
        %v3127 = vsub.f32 %v3103, %v3124
        %v3128 = vsub.f32 %v3104, %v3125
        %v3129 = vmul.f32 %v3126, %v3126
        %v3130 = vmul.f32 %v3127, %v3127
        %v3131 = vmul.f32 %v3128, %v3128
        %v3132 = vsel %vm1108, %v3129, 0.0
        %3133 = vadd.xlane.f32.xlu0 %v3132
        %v3134 = vpop.xlane.xlu0 %3133
        %v3135 = vsel %vm1108, %v3130, 0.0
        %3136 = vadd.xlane.f32.xlu0 %v3135
        %v3137 = vpop.xlane.xlu0 %3136
        %v3138 = vsel %vm1108, %v3131, 0.0
        %3139 = vadd.xlane.f32.xlu0 %v3138
        %v3140 = vpop.xlane.xlu0 %3139
        %v3141 = vmul.f32 %v3134, %v3122
        %v3142 = vmul.f32 %v3137, %v3122
        %v3143 = vmul.f32 %v3140, %v3122
        %v3144 = vadd.f32 %v3141, 1e-05
        %v3145 = vadd.f32 %v3142, 1e-05
        %v3146 = vadd.f32 %v3143, 1e-05
        %v3147 = vrsqrt.pop %v3144
        %v3148 = vmul.f32 %v3147, %v3144
        %v3149 = vmul.f32 %v3148, %v3147
        %v3150 = vmul.f32 0.5, %v3149
        %v3151 = vsub.f32 1.5, %v3150
        %v3152 = vmul.f32 %v3147, %v3151
        %vm3153 = vweird.f32 %v3144
        %vm3154 = vweird.f32 %v3147
        %vm3155 = vmor %vm3153, %vm3154
        %v3156 = vsel %vm3155, %v3147, %v3152
        %v3157 = vrsqrt.pop %v3145
        %v3158 = vmul.f32 %v3157, %v3145
        %v3159 = vmul.f32 %v3158, %v3157
        %v3160 = vmul.f32 0.5, %v3159
        %v3161 = vsub.f32 1.5, %v3160
        %v3162 = vmul.f32 %v3157, %v3161
        %vm3163 = vweird.f32 %v3145
        %vm3164 = vweird.f32 %v3157
        %vm3165 = vmor %vm3163, %vm3164
        %v3166 = vsel %vm3165, %v3157, %v3162
        %v3167 = vrsqrt.pop %v3146
        %v3168 = vmul.f32 %v3167, %v3146
        %v3169 = vmul.f32 %v3168, %v3167
        %v3170 = vmul.f32 0.5, %v3169
        %v3171 = vsub.f32 1.5, %v3170
        %v3172 = vmul.f32 %v3167, %v3171
        %vm3173 = vweird.f32 %v3146
        %vm3174 = vweird.f32 %v3167
        %vm3175 = vmor %vm3173, %vm3174
        %v3176 = vsel %vm3175, %v3167, %v3172
        %v3177 = vmul.f32 %v3126, %v3156
        %v3178 = vmul.f32 %v3127, %v3166
        %v3179 = vmul.f32 %v3128, %v3176
        %v3181 = vperm.slane %v3105, 0
        %v3183 = vmul.f32 %v3177, %v3181
        %v3184 = vmul.f32 %v3178, %v3181
        %v3185 = vmul.f32 %v3179, %v3181
        %v3187 = vperm.slane %v3106, 0
        %v3189 = vadd.f32 %v3183, %v3187
        %v3190 = vadd.f32 %v3184, %v3187
        %v3191 = vadd.f32 %v3185, %v3187
        %v3192 = vld [vmem:[%s20] sm:$0xff]
        %v3193 = vld [vmem:[%s20 + $0x8] sm:$0xff]
        %v3194 = vld [vmem:[%s20 + $0x10] sm:$0xff]
        %v3195 = vld [vmem:[%s20 + $0x18] sm:$0xff]
        %v3196 = vld [vmem:[%s21] sm:$0x1]
        %v3198 = vperm.slane %v3196, 0
        %v3201 = vsel %vm1108, %v3189, 0
        %v3204 = vsel %vm1108, %v3190, 0
        %v3207 = vsel %vm1108, %v3191, 0
        %3209 = vmatpush.msra.mxu0 0.0
        %3210 = vmatpush.msra.mxu0 0.0
        %3211 = vmatpush.msra.mxu0 0.0
        %3212 = vmatpush.msra.mxu0 0.0
        %3213 = vmatpush.msra.mxu0 0.0
        %3214 = vmatpush.msra.mxu0 0.0
        %3215 = vmatpush.msra.mxu0 0.0
        %3216 = vmatpush.msra.mxu0 0.0
        %3217 = vmatpush.msra.mxu0 0.0
        %3218 = vmatpush.msra.mxu0 0.0
        %3219 = vmatpush.msra.mxu0 0.0
        %3220 = vmatpush.msra.mxu0 0.0
        %3221 = vmatpush.msra.mxu0 %v3195
        %3222 = vmatpush.msra.mxu0 %v3194
        %3223 = vmatpush.msra.mxu0 %v3193
        %3224 = vmatpush.msra.mxu0 %v3192
        %3225 = vmatmul.f32.gmra.mxu0 %v3201
        %v3226 = vpop.f32.mrf.mxu0
        %v3227 = vadd.f32 %v3198, %v3226
        %3228 = vmatmul.f32.gmra.mxu0 %v3204
        %v3229 = vpop.f32.mrf.mxu0
        %v3230 = vadd.f32 %v3198, %v3229
        %3231 = vmatmul.f32.gmra.mxu0 %v3207
        %v3232 = vpop.f32.mrf.mxu0
        %v3233 = vadd.f32 %v3198, %v3232
        %3234 = vdwg.mxu0
        %v3235 = vmax.f32 %v3227, 0.0
        %v3236 = vmax.f32 %v3230, 0.0
        %v3237 = vmax.f32 %v3233, 0.0
        %v3238 = vld [vmem:[%s22] sm:$0xff]
        %v3239 = vld [vmem:[%s22 + $0x8] sm:$0xff]
        %v3240 = vld [vmem:[%s22 + $0x10] sm:$0xff]
        %v3241 = vld [vmem:[%s22 + $0x18] sm:$0xff]
        %v3242 = vld [vmem:[%s22 + $0x20] sm:$0xff]
        %v3243 = vld [vmem:[%s22 + $0x28] sm:$0xff]
        %v3244 = vld [vmem:[%s22 + $0x30] sm:$0xff]
        %v3245 = vld [vmem:[%s22 + $0x38] sm:$0xff]
        %v3247 = vsel %vm1124, %v3235, 0
        %v3250 = vsel %vm1124, %v3236, 0
        %v3253 = vsel %vm1124, %v3237, 0
        %3255 = vmatpush.msra.mxu0 0.0
        %3256 = vmatpush.msra.mxu0 0.0
        %3257 = vmatpush.msra.mxu0 0.0
        %3258 = vmatpush.msra.mxu0 0.0
        %3259 = vmatpush.msra.mxu0 0.0
        %3260 = vmatpush.msra.mxu0 0.0
        %3261 = vmatpush.msra.mxu0 0.0
        %3262 = vmatpush.msra.mxu0 0.0
        %3263 = vmatpush.msra.mxu0 %v3245
        %3264 = vmatpush.msra.mxu0 %v3244
        %3265 = vmatpush.msra.mxu0 %v3243
        %3266 = vmatpush.msra.mxu0 %v3242
        %3267 = vmatpush.msra.mxu0 %v3241
        %3268 = vmatpush.msra.mxu0 %v3240
        %3269 = vmatpush.msra.mxu0 %v3239
        %3270 = vmatpush.msra.mxu0 %v3238
        %3271 = vmatmul.f32.gmra.mxu0 %v3247
        %v3272 = vpop.f32.mrf.mxu0
        %v3273 = vadd.f32 0.0, %v3272
        %3274 = vmatmul.f32.gmra.mxu0 %v3250
        %v3275 = vpop.f32.mrf.mxu0
        %v3276 = vadd.f32 0.0, %v3275
        %3277 = vmatmul.f32.gmra.mxu0 %v3253
        %v3278 = vpop.f32.mrf.mxu0
        %v3279 = vadd.f32 0.0, %v3278
        %3280 = vdwg.mxu0
        %v3281 = vadd.f32 %v3189, %v3273
        %v3282 = vadd.f32 %v3190, %v3276
        %v3283 = vadd.f32 %v3191, %v3279
        %v3284 = vld [vmem:[%s23] sm:$0x1]
        %v3286 = vperm.slane %v3284, 0
        %v3288 = vadd.f32 %v3281, %v3286
        %v3289 = vadd.f32 %v3282, %v3286
        %v3290 = vadd.f32 %v3283, %v3286
        %v3291 = vld [vmem:[%s24] sm:$0x1]
        %v3292 = vld [vmem:[%s25] sm:$0x1]
        %v3293 = vsel %vm1108, %v3288, 0.0
        %3294 = vadd.xlane.f32.xlu0 %v3293
        %v3295 = vpop.xlane.xlu0 %3294
        %v3296 = vsel %vm1108, %v3289, 0.0
        %3297 = vadd.xlane.f32.xlu0 %v3296
        %v3298 = vpop.xlane.xlu0 %3297
        %v3299 = vsel %vm1108, %v3290, 0.0
        %3300 = vadd.xlane.f32.xlu0 %v3299
        %v3301 = vpop.xlane.xlu0 %3300
        %v3302 = vmul.f32 %v3295, %v3122
        %v3303 = vmul.f32 %v3298, %v3122
        %v3304 = vmul.f32 %v3301, %v3122
        %v3305 = vsub.f32 %v3288, %v3302
        %v3306 = vsub.f32 %v3289, %v3303
        %v3307 = vsub.f32 %v3290, %v3304
        %v3308 = vmul.f32 %v3305, %v3305
        %v3309 = vmul.f32 %v3306, %v3306
        %v3310 = vmul.f32 %v3307, %v3307
        %v3311 = vsel %vm1108, %v3308, 0.0
        %3312 = vadd.xlane.f32.xlu0 %v3311
        %v3313 = vpop.xlane.xlu0 %3312
        %v3314 = vsel %vm1108, %v3309, 0.0
        %3315 = vadd.xlane.f32.xlu0 %v3314
        %v3316 = vpop.xlane.xlu0 %3315
        %v3317 = vsel %vm1108, %v3310, 0.0
        %3318 = vadd.xlane.f32.xlu0 %v3317
        %v3319 = vpop.xlane.xlu0 %3318
        %v3320 = vmul.f32 %v3313, %v3122
        %v3321 = vmul.f32 %v3316, %v3122
        %v3322 = vmul.f32 %v3319, %v3122
        %v3323 = vadd.f32 %v3320, 1e-05
        %v3324 = vadd.f32 %v3321, 1e-05
        %v3325 = vadd.f32 %v3322, 1e-05
        %v3326 = vrsqrt.pop %v3323
        %v3327 = vmul.f32 %v3326, %v3323
        %v3328 = vmul.f32 %v3327, %v3326
        %v3329 = vmul.f32 0.5, %v3328
        %v3330 = vsub.f32 1.5, %v3329
        %v3331 = vmul.f32 %v3326, %v3330
        %vm3332 = vweird.f32 %v3323
        %vm3333 = vweird.f32 %v3326
        %vm3334 = vmor %vm3332, %vm3333
        %v3335 = vsel %vm3334, %v3326, %v3331
        %v3336 = vrsqrt.pop %v3324
        %v3337 = vmul.f32 %v3336, %v3324
        %v3338 = vmul.f32 %v3337, %v3336
        %v3339 = vmul.f32 0.5, %v3338
        %v3340 = vsub.f32 1.5, %v3339
        %v3341 = vmul.f32 %v3336, %v3340
        %vm3342 = vweird.f32 %v3324
        %vm3343 = vweird.f32 %v3336
        %vm3344 = vmor %vm3342, %vm3343
        %v3345 = vsel %vm3344, %v3336, %v3341
        %v3346 = vrsqrt.pop %v3325
        %v3347 = vmul.f32 %v3346, %v3325
        %v3348 = vmul.f32 %v3347, %v3346
        %v3349 = vmul.f32 0.5, %v3348
        %v3350 = vsub.f32 1.5, %v3349
        %v3351 = vmul.f32 %v3346, %v3350
        %vm3352 = vweird.f32 %v3325
        %vm3353 = vweird.f32 %v3346
        %vm3354 = vmor %vm3352, %vm3353
        %v3355 = vsel %vm3354, %v3346, %v3351
        %v3356 = vmul.f32 %v3305, %v3335
        %v3357 = vmul.f32 %v3306, %v3345
        %v3358 = vmul.f32 %v3307, %v3355
        %v3360 = vperm.slane %v3291, 0
        %v3362 = vmul.f32 %v3356, %v3360
        %v3363 = vmul.f32 %v3357, %v3360
        %v3364 = vmul.f32 %v3358, %v3360
        %v3366 = vperm.slane %v3292, 0
        %v3368 = vadd.f32 %v3362, %v3366
        %v3369 = vadd.f32 %v3363, %v3366
        %v3370 = vadd.f32 %v3364, %v3366
        %v3371 = vadd.f32 %v3368, %v936
        %v3372 = vadd.f32 %v3369, %v937
        %v3373 = vadd.f32 %v3370, %v938
        %v3374 = vadd.f32 %v3368, %v939
        %v3375 = vadd.f32 %v3369, %v940
        %v3376 = vadd.f32 %v3370, %v941
        %3380 = vrot.lane.b32.xlu0 %v3374, 32
        %v3381 = vpop.permute.xlu0 %3380
        %3382 = vrot.lane.b32.xlu0 %v3375, 32
        %v3383 = vpop.permute.xlu0 %3382
        %3384 = vrot.lane.b32.xlu0 %v3376, 32
        %v3385 = vpop.permute.xlu0 %3384
        %v3389 = vsel %vm1108, %v3371, %v3381
        %v3390 = vsel %vm1108, %v3372, %v3383
        %v3391 = vsel %vm1108, %v3373, %v3385
        %s3392 = scalar_lea.vmem %s12, 64
        %v3393 = vld [vmem:[%s3392] sm:$0xff]
        %v3394 = vld [vmem:[%s3392 + $0x8] sm:$0xff]
        %v3395 = vld [vmem:[%s3392 + $0x10] sm:$0xff]
        %v3396 = vld [vmem:[%s3392 + $0x18] sm:$0xff]
        %v3397 = vld [vmem:[%s3392 + $0x20] sm:$0xff]
        %v3398 = vld [vmem:[%s3392 + $0x28] sm:$0xff]
        %v3399 = vld [vmem:[%s3392 + $0x30] sm:$0xff]
        %v3400 = vld [vmem:[%s3392 + $0x38] sm:$0xff]
        %s3401 = scalar_lea.vmem %s13, 1
        %v3402 = vld [vmem:[%s3401] sm:$0x1]
        %v3404 = vperm.slane %v3402, 0
        %v3407 = vsel %vm1124, %v3389, 0
        %v3410 = vsel %vm1124, %v3390, 0
        %v3413 = vsel %vm1124, %v3391, 0
        %3415 = vmatpush.msra.mxu0 0.0
        %3416 = vmatpush.msra.mxu0 0.0
        %3417 = vmatpush.msra.mxu0 0.0
        %3418 = vmatpush.msra.mxu0 0.0
        %3419 = vmatpush.msra.mxu0 0.0
        %3420 = vmatpush.msra.mxu0 0.0
        %3421 = vmatpush.msra.mxu0 0.0
        %3422 = vmatpush.msra.mxu0 0.0
        %3423 = vmatpush.msra.mxu0 %v3400
        %3424 = vmatpush.msra.mxu0 %v3399
        %3425 = vmatpush.msra.mxu0 %v3398
        %3426 = vmatpush.msra.mxu0 %v3397
        %3427 = vmatpush.msra.mxu0 %v3396
        %3428 = vmatpush.msra.mxu0 %v3395
        %3429 = vmatpush.msra.mxu0 %v3394
        %3430 = vmatpush.msra.mxu0 %v3393
        %3431 = vmatmul.f32.gmra.mxu0 %v3407
        %v3432 = vpop.f32.mrf.mxu0
        %v3433 = vadd.f32 %v3404, %v3432
        %3434 = vmatmul.f32.gmra.mxu0 %v3410
        %v3435 = vpop.f32.mrf.mxu0
        %v3436 = vadd.f32 %v3404, %v3435
        %3437 = vmatmul.f32.gmra.mxu0 %v3413
        %v3438 = vpop.f32.mrf.mxu0
        %v3439 = vadd.f32 %v3404, %v3438
        %3440 = vdwg.mxu0
        %v3441 = vadd.f32 %v3433, %v997
        %v3442 = vadd.f32 %v3436, %v1000
        %v3443 = vadd.f32 %v3439, %v1003
        %3447 = vrot.lane.b32.xlu0 %v3433, 120
        %v3448 = vpop.permute.xlu0 %3447
        %3449 = vrot.lane.b32.xlu0 %v3436, 120
        %v3450 = vpop.permute.xlu0 %3449
        %3451 = vrot.lane.b32.xlu0 %v3439, 120
        %v3452 = vpop.permute.xlu0 %3451
        %3453 = vrot.lane.b32.xlu0 %v3433, 112
        %v3454 = vpop.permute.xlu0 %3453
        %3455 = vrot.lane.b32.xlu0 %v3436, 112
        %v3456 = vpop.permute.xlu0 %3455
        %3457 = vrot.lane.b32.xlu0 %v3439, 112
        %v3458 = vpop.permute.xlu0 %3457
        %3459 = vrot.lane.b32.xlu0 %v3433, 104
        %v3460 = vpop.permute.xlu0 %3459
        %3461 = vrot.lane.b32.xlu0 %v3436, 104
        %v3462 = vpop.permute.xlu0 %3461
        %3463 = vrot.lane.b32.xlu0 %v3439, 104
        %v3464 = vpop.permute.xlu0 %3463
        %3465 = vrot.lane.b32.xlu0 %v3433, 96
        %v3466 = vpop.permute.xlu0 %3465
        %3467 = vrot.lane.b32.xlu0 %v3436, 96
        %v3468 = vpop.permute.xlu0 %3467
        %3469 = vrot.lane.b32.xlu0 %v3439, 96
        %v3470 = vpop.permute.xlu0 %3469
        %3471 = vrot.lane.b32.xlu0 %v3433, 88
        %v3472 = vpop.permute.xlu0 %3471
        %3473 = vrot.lane.b32.xlu0 %v3436, 88
        %v3474 = vpop.permute.xlu0 %3473
        %3475 = vrot.lane.b32.xlu0 %v3439, 88
        %v3476 = vpop.permute.xlu0 %3475
        %3477 = vrot.lane.b32.xlu0 %v3433, 80
        %v3478 = vpop.permute.xlu0 %3477
        %3479 = vrot.lane.b32.xlu0 %v3436, 80
        %v3480 = vpop.permute.xlu0 %3479
        %3481 = vrot.lane.b32.xlu0 %v3439, 80
        %v3482 = vpop.permute.xlu0 %3481
        %3483 = vrot.lane.b32.xlu0 %v3433, 72
        %v3484 = vpop.permute.xlu0 %3483
        %3485 = vrot.lane.b32.xlu0 %v3436, 72
        %v3486 = vpop.permute.xlu0 %3485
        %3487 = vrot.lane.b32.xlu0 %v3439, 72
        %v3488 = vpop.permute.xlu0 %3487
        %3489 = vrot.lane.b32.xlu0 %v3433, 64
        %v3490 = vpop.permute.xlu0 %3489
        %3491 = vrot.lane.b32.xlu0 %v3436, 64
        %v3492 = vpop.permute.xlu0 %3491
        %3493 = vrot.lane.b32.xlu0 %v3439, 64
        %v3494 = vpop.permute.xlu0 %3493
        %3495 = vrot.lane.b32.xlu0 %v3448, 64
        %v3496 = vpop.permute.xlu0 %3495
        %3497 = vrot.lane.b32.xlu0 %v3450, 64
        %v3498 = vpop.permute.xlu0 %3497
        %3499 = vrot.lane.b32.xlu0 %v3452, 64
        %v3500 = vpop.permute.xlu0 %3499
        %3501 = vrot.lane.b32.xlu0 %v3454, 64
        %v3502 = vpop.permute.xlu0 %3501
        %3503 = vrot.lane.b32.xlu0 %v3456, 64
        %v3504 = vpop.permute.xlu0 %3503
        %3505 = vrot.lane.b32.xlu0 %v3458, 64
        %v3506 = vpop.permute.xlu0 %3505
        %3507 = vrot.lane.b32.xlu0 %v3460, 64
        %v3508 = vpop.permute.xlu0 %3507
        %3509 = vrot.lane.b32.xlu0 %v3462, 64
        %v3510 = vpop.permute.xlu0 %3509
        %3511 = vrot.lane.b32.xlu0 %v3464, 64
        %v3512 = vpop.permute.xlu0 %3511
        %3513 = vrot.lane.b32.xlu0 %v3466, 64
        %v3514 = vpop.permute.xlu0 %3513
        %3515 = vrot.lane.b32.xlu0 %v3468, 64
        %v3516 = vpop.permute.xlu0 %3515
        %3517 = vrot.lane.b32.xlu0 %v3470, 64
        %v3518 = vpop.permute.xlu0 %3517
        %3519 = vrot.lane.b32.xlu0 %v3472, 64
        %v3520 = vpop.permute.xlu0 %3519
        %3521 = vrot.lane.b32.xlu0 %v3474, 64
        %v3522 = vpop.permute.xlu0 %3521
        %3523 = vrot.lane.b32.xlu0 %v3476, 64
        %v3524 = vpop.permute.xlu0 %3523
        %3525 = vrot.lane.b32.xlu0 %v3478, 64
        %v3526 = vpop.permute.xlu0 %3525
        %3527 = vrot.lane.b32.xlu0 %v3480, 64
        %v3528 = vpop.permute.xlu0 %3527
        %3529 = vrot.lane.b32.xlu0 %v3482, 64
        %v3530 = vpop.permute.xlu0 %3529
        %3531 = vrot.lane.b32.xlu0 %v3484, 64
        %v3532 = vpop.permute.xlu0 %3531
        %3533 = vrot.lane.b32.xlu0 %v3486, 64
        %v3534 = vpop.permute.xlu0 %3533
        %3535 = vrot.lane.b32.xlu0 %v3488, 64
        %v3536 = vpop.permute.xlu0 %3535
        %v3561 = vrot.slane %v3502, 4
        %v3562 = vsel %vm1281, %v3561, %v3490
        %v3563 = vrot.slane %v3490, 4
        %v3564 = vsel %vm1281, %v3502, %v3563
        %v3566 = vunpack.c.l.s4 1983009808
        %v3567 = vunpack.c.0.s8 %v3566
        %v3568 = vperm.slane %v3562, %v3567
        %v3570 = vunpack.c.l.s4 1983009808
        %v3571 = vunpack.c.0.s8 %v3570
        %v3572 = vperm.slane %v3564, %v3571
        %v3573 = vrot.slane %v3508, 4
        %v3574 = vsel %vm1281, %v3573, %v3496
        %v3575 = vrot.slane %v3496, 4
        %v3576 = vsel %vm1281, %v3508, %v3575
        %v3578 = vunpack.c.l.s4 1983009808
        %v3579 = vunpack.c.0.s8 %v3578
        %v3580 = vperm.slane %v3574, %v3579
        %v3582 = vunpack.c.l.s4 1983009808
        %v3583 = vunpack.c.0.s8 %v3582
        %v3584 = vperm.slane %v3576, %v3583
        %v3585 = vrot.slane %v3526, 4
        %v3586 = vsel %vm1281, %v3585, %v3514
        %v3587 = vrot.slane %v3514, 4
        %v3588 = vsel %vm1281, %v3526, %v3587
        %v3590 = vunpack.c.l.s4 1983009808
        %v3591 = vunpack.c.0.s8 %v3590
        %v3592 = vperm.slane %v3586, %v3591
        %v3594 = vunpack.c.l.s4 1983009808
        %v3595 = vunpack.c.0.s8 %v3594
        %v3596 = vperm.slane %v3588, %v3595
        %v3597 = vrot.slane %v3532, 4
        %v3598 = vsel %vm1281, %v3597, %v3520
        %v3599 = vrot.slane %v3520, 4
        %v3600 = vsel %vm1281, %v3532, %v3599
        %v3602 = vunpack.c.l.s4 1983009808
        %v3603 = vunpack.c.0.s8 %v3602
        %v3604 = vperm.slane %v3598, %v3603
        %v3606 = vunpack.c.l.s4 1983009808
        %v3607 = vunpack.c.0.s8 %v3606
        %v3608 = vperm.slane %v3600, %v3607
        %v3609 = vrot.slane %v3580, 4
        %v3610 = vsel %vm1281, %v3609, %v3568
        %v3611 = vrot.slane %v3568, 4
        %v3612 = vsel %vm1281, %v3580, %v3611
        %v3614 = vunpack.c.l.s4 1934713408
        %v3615 = vunpack.c.0.s8 %v3614
        %v3616 = vperm.slane %v3610, %v3615
        %v3618 = vunpack.c.l.s4 1934713408
        %v3619 = vunpack.c.0.s8 %v3618
        %v3620 = vperm.slane %v3612, %v3619
        %v3621 = vrot.slane %v3584, 4
        %v3622 = vsel %vm1281, %v3621, %v3572
        %v3623 = vrot.slane %v3572, 4
        %v3624 = vsel %vm1281, %v3584, %v3623
        %v3626 = vunpack.c.l.s4 1934713408
        %v3627 = vunpack.c.0.s8 %v3626
        %v3628 = vperm.slane %v3622, %v3627
        %v3630 = vunpack.c.l.s4 1934713408
        %v3631 = vunpack.c.0.s8 %v3630
        %v3632 = vperm.slane %v3624, %v3631
        %v3633 = vrot.slane %v3604, 4
        %v3634 = vsel %vm1281, %v3633, %v3592
        %v3635 = vrot.slane %v3592, 4
        %v3636 = vsel %vm1281, %v3604, %v3635
        %v3638 = vunpack.c.l.s4 1934713408
        %v3639 = vunpack.c.0.s8 %v3638
        %v3640 = vperm.slane %v3634, %v3639
        %v3642 = vunpack.c.l.s4 1934713408
        %v3643 = vunpack.c.0.s8 %v3642
        %v3644 = vperm.slane %v3636, %v3643
        %v3645 = vrot.slane %v3608, 4
        %v3646 = vsel %vm1281, %v3645, %v3596
        %v3647 = vrot.slane %v3596, 4
        %v3648 = vsel %vm1281, %v3608, %v3647
        %v3650 = vunpack.c.l.s4 1934713408
        %v3651 = vunpack.c.0.s8 %v3650
        %v3652 = vperm.slane %v3646, %v3651
        %v3654 = vunpack.c.l.s4 1934713408
        %v3655 = vunpack.c.0.s8 %v3654
        %v3656 = vperm.slane %v3648, %v3655
        %v3657 = vrot.slane %v3640, 4
        %v3658 = vsel %vm1281, %v3657, %v3616
        %v3659 = vrot.slane %v3616, 4
        %v3660 = vsel %vm1281, %v3640, %v3659
        %v3661 = vrot.slane %v3644, 4
        %v3662 = vsel %vm1281, %v3661, %v3620
        %v3663 = vrot.slane %v3620, 4
        %v3664 = vsel %vm1281, %v3644, %v3663
        %v3665 = vrot.slane %v3652, 4
        %v3666 = vsel %vm1281, %v3665, %v3628
        %v3667 = vrot.slane %v3628, 4
        %v3668 = vsel %vm1281, %v3652, %v3667
        %v3669 = vrot.slane %v3656, 4
        %v3670 = vsel %vm1281, %v3669, %v3632
        %v3671 = vrot.slane %v3632, 4
        %v3672 = vsel %vm1281, %v3656, %v3671
        %v3673 = vrot.slane %v3504, 4
        %v3674 = vsel %vm1281, %v3673, %v3492
        %v3675 = vrot.slane %v3492, 4
        %v3676 = vsel %vm1281, %v3504, %v3675
        %v3678 = vunpack.c.l.s4 1983009808
        %v3679 = vunpack.c.0.s8 %v3678
        %v3680 = vperm.slane %v3674, %v3679
        %v3682 = vunpack.c.l.s4 1983009808
        %v3683 = vunpack.c.0.s8 %v3682
        %v3684 = vperm.slane %v3676, %v3683
        %v3685 = vrot.slane %v3510, 4
        %v3686 = vsel %vm1281, %v3685, %v3498
        %v3687 = vrot.slane %v3498, 4
        %v3688 = vsel %vm1281, %v3510, %v3687
        %v3690 = vunpack.c.l.s4 1983009808
        %v3691 = vunpack.c.0.s8 %v3690
        %v3692 = vperm.slane %v3686, %v3691
        %v3694 = vunpack.c.l.s4 1983009808
        %v3695 = vunpack.c.0.s8 %v3694
        %v3696 = vperm.slane %v3688, %v3695
        %v3697 = vrot.slane %v3528, 4
        %v3698 = vsel %vm1281, %v3697, %v3516
        %v3699 = vrot.slane %v3516, 4
        %v3700 = vsel %vm1281, %v3528, %v3699
        %v3702 = vunpack.c.l.s4 1983009808
        %v3703 = vunpack.c.0.s8 %v3702
        %v3704 = vperm.slane %v3698, %v3703
        %v3706 = vunpack.c.l.s4 1983009808
        %v3707 = vunpack.c.0.s8 %v3706
        %v3708 = vperm.slane %v3700, %v3707
        %v3709 = vrot.slane %v3534, 4
        %v3710 = vsel %vm1281, %v3709, %v3522
        %v3711 = vrot.slane %v3522, 4
        %v3712 = vsel %vm1281, %v3534, %v3711
        %v3714 = vunpack.c.l.s4 1983009808
        %v3715 = vunpack.c.0.s8 %v3714
        %v3716 = vperm.slane %v3710, %v3715
        %v3718 = vunpack.c.l.s4 1983009808
        %v3719 = vunpack.c.0.s8 %v3718
        %v3720 = vperm.slane %v3712, %v3719
        %v3721 = vrot.slane %v3692, 4
        %v3722 = vsel %vm1281, %v3721, %v3680
        %v3723 = vrot.slane %v3680, 4
        %v3724 = vsel %vm1281, %v3692, %v3723
        %v3726 = vunpack.c.l.s4 1934713408
        %v3727 = vunpack.c.0.s8 %v3726
        %v3728 = vperm.slane %v3722, %v3727
        %v3730 = vunpack.c.l.s4 1934713408
        %v3731 = vunpack.c.0.s8 %v3730
        %v3732 = vperm.slane %v3724, %v3731
        %v3733 = vrot.slane %v3696, 4
        %v3734 = vsel %vm1281, %v3733, %v3684
        %v3735 = vrot.slane %v3684, 4
        %v3736 = vsel %vm1281, %v3696, %v3735
        %v3738 = vunpack.c.l.s4 1934713408
        %v3739 = vunpack.c.0.s8 %v3738
        %v3740 = vperm.slane %v3734, %v3739
        %v3742 = vunpack.c.l.s4 1934713408
        %v3743 = vunpack.c.0.s8 %v3742
        %v3744 = vperm.slane %v3736, %v3743
        %v3745 = vrot.slane %v3716, 4
        %v3746 = vsel %vm1281, %v3745, %v3704
        %v3747 = vrot.slane %v3704, 4
        %v3748 = vsel %vm1281, %v3716, %v3747
        %v3750 = vunpack.c.l.s4 1934713408
        %v3751 = vunpack.c.0.s8 %v3750
        %v3752 = vperm.slane %v3746, %v3751
        %v3754 = vunpack.c.l.s4 1934713408
        %v3755 = vunpack.c.0.s8 %v3754
        %v3756 = vperm.slane %v3748, %v3755
        %v3757 = vrot.slane %v3720, 4
        %v3758 = vsel %vm1281, %v3757, %v3708
        %v3759 = vrot.slane %v3708, 4
        %v3760 = vsel %vm1281, %v3720, %v3759
        %v3762 = vunpack.c.l.s4 1934713408
        %v3763 = vunpack.c.0.s8 %v3762
        %v3764 = vperm.slane %v3758, %v3763
        %v3766 = vunpack.c.l.s4 1934713408
        %v3767 = vunpack.c.0.s8 %v3766
        %v3768 = vperm.slane %v3760, %v3767
        %v3769 = vrot.slane %v3752, 4
        %v3770 = vsel %vm1281, %v3769, %v3728
        %v3771 = vrot.slane %v3728, 4
        %v3772 = vsel %vm1281, %v3752, %v3771
        %v3773 = vrot.slane %v3756, 4
        %v3774 = vsel %vm1281, %v3773, %v3732
        %v3775 = vrot.slane %v3732, 4
        %v3776 = vsel %vm1281, %v3756, %v3775
        %v3777 = vrot.slane %v3764, 4
        %v3778 = vsel %vm1281, %v3777, %v3740
        %v3779 = vrot.slane %v3740, 4
        %v3780 = vsel %vm1281, %v3764, %v3779
        %v3781 = vrot.slane %v3768, 4
        %v3782 = vsel %vm1281, %v3781, %v3744
        %v3783 = vrot.slane %v3744, 4
        %v3784 = vsel %vm1281, %v3768, %v3783
        %v3785 = vrot.slane %v3506, 4
        %v3786 = vsel %vm1281, %v3785, %v3494
        %v3787 = vrot.slane %v3494, 4
        %v3788 = vsel %vm1281, %v3506, %v3787
        %v3790 = vunpack.c.l.s4 1983009808
        %v3791 = vunpack.c.0.s8 %v3790
        %v3792 = vperm.slane %v3786, %v3791
        %v3794 = vunpack.c.l.s4 1983009808
        %v3795 = vunpack.c.0.s8 %v3794
        %v3796 = vperm.slane %v3788, %v3795
        %v3797 = vrot.slane %v3512, 4
        %v3798 = vsel %vm1281, %v3797, %v3500
        %v3799 = vrot.slane %v3500, 4
        %v3800 = vsel %vm1281, %v3512, %v3799
        %v3802 = vunpack.c.l.s4 1983009808
        %v3803 = vunpack.c.0.s8 %v3802
        %v3804 = vperm.slane %v3798, %v3803
        %v3806 = vunpack.c.l.s4 1983009808
        %v3807 = vunpack.c.0.s8 %v3806
        %v3808 = vperm.slane %v3800, %v3807
        %v3809 = vrot.slane %v3530, 4
        %v3810 = vsel %vm1281, %v3809, %v3518
        %v3811 = vrot.slane %v3518, 4
        %v3812 = vsel %vm1281, %v3530, %v3811
        %v3814 = vunpack.c.l.s4 1983009808
        %v3815 = vunpack.c.0.s8 %v3814
        %v3816 = vperm.slane %v3810, %v3815
        %v3818 = vunpack.c.l.s4 1983009808
        %v3819 = vunpack.c.0.s8 %v3818
        %v3820 = vperm.slane %v3812, %v3819
        %v3821 = vrot.slane %v3536, 4
        %v3822 = vsel %vm1281, %v3821, %v3524
        %v3823 = vrot.slane %v3524, 4
        %v3824 = vsel %vm1281, %v3536, %v3823
        %v3826 = vunpack.c.l.s4 1983009808
        %v3827 = vunpack.c.0.s8 %v3826
        %v3828 = vperm.slane %v3822, %v3827
        %v3830 = vunpack.c.l.s4 1983009808
        %v3831 = vunpack.c.0.s8 %v3830
        %v3832 = vperm.slane %v3824, %v3831
        %v3833 = vrot.slane %v3804, 4
        %v3834 = vsel %vm1281, %v3833, %v3792
        %v3835 = vrot.slane %v3792, 4
        %v3836 = vsel %vm1281, %v3804, %v3835
        %v3838 = vunpack.c.l.s4 1934713408
        %v3839 = vunpack.c.0.s8 %v3838
        %v3840 = vperm.slane %v3834, %v3839
        %v3842 = vunpack.c.l.s4 1934713408
        %v3843 = vunpack.c.0.s8 %v3842
        %v3844 = vperm.slane %v3836, %v3843
        %v3845 = vrot.slane %v3808, 4
        %v3846 = vsel %vm1281, %v3845, %v3796
        %v3847 = vrot.slane %v3796, 4
        %v3848 = vsel %vm1281, %v3808, %v3847
        %v3850 = vunpack.c.l.s4 1934713408
        %v3851 = vunpack.c.0.s8 %v3850
        %v3852 = vperm.slane %v3846, %v3851
        %v3854 = vunpack.c.l.s4 1934713408
        %v3855 = vunpack.c.0.s8 %v3854
        %v3856 = vperm.slane %v3848, %v3855
        %v3857 = vrot.slane %v3828, 4
        %v3858 = vsel %vm1281, %v3857, %v3816
        %v3859 = vrot.slane %v3816, 4
        %v3860 = vsel %vm1281, %v3828, %v3859
        %v3862 = vunpack.c.l.s4 1934713408
        %v3863 = vunpack.c.0.s8 %v3862
        %v3864 = vperm.slane %v3858, %v3863
        %v3866 = vunpack.c.l.s4 1934713408
        %v3867 = vunpack.c.0.s8 %v3866
        %v3868 = vperm.slane %v3860, %v3867
        %v3869 = vrot.slane %v3832, 4
        %v3870 = vsel %vm1281, %v3869, %v3820
        %v3871 = vrot.slane %v3820, 4
        %v3872 = vsel %vm1281, %v3832, %v3871
        %v3874 = vunpack.c.l.s4 1934713408
        %v3875 = vunpack.c.0.s8 %v3874
        %v3876 = vperm.slane %v3870, %v3875
        %v3878 = vunpack.c.l.s4 1934713408
        %v3879 = vunpack.c.0.s8 %v3878
        %v3880 = vperm.slane %v3872, %v3879
        %v3881 = vrot.slane %v3864, 4
        %v3882 = vsel %vm1281, %v3881, %v3840
        %v3883 = vrot.slane %v3840, 4
        %v3884 = vsel %vm1281, %v3864, %v3883
        %v3885 = vrot.slane %v3868, 4
        %v3886 = vsel %vm1281, %v3885, %v3844
        %v3887 = vrot.slane %v3844, 4
        %v3888 = vsel %vm1281, %v3868, %v3887
        %v3889 = vrot.slane %v3876, 4
        %v3890 = vsel %vm1281, %v3889, %v3852
        %v3891 = vrot.slane %v3852, 4
        %v3892 = vsel %vm1281, %v3876, %v3891
        %v3893 = vrot.slane %v3880, 4
        %v3894 = vsel %vm1281, %v3893, %v3856
        %v3895 = vrot.slane %v3856, 4
        %v3896 = vsel %vm1281, %v3880, %v3895
        %v3897 = vsel %vm1617, %v3658, -inf
        %3898 = vmax.xlane.f32.xlu0 %v3897
        %v3899 = vpop.xlane.xlu0 %3898
        %v3900 = vsel %vm1617, %v3660, -inf
        %3901 = vmax.xlane.f32.xlu0 %v3900
        %v3902 = vpop.xlane.xlu0 %3901
        %v3903 = vsel %vm1617, %v3662, -inf
        %3904 = vmax.xlane.f32.xlu0 %v3903
        %v3905 = vpop.xlane.xlu0 %3904
        %v3906 = vsel %vm1617, %v3664, -inf
        %3907 = vmax.xlane.f32.xlu0 %v3906
        %v3908 = vpop.xlane.xlu0 %3907
        %v3909 = vsel %vm1617, %v3666, -inf
        %3910 = vmax.xlane.f32.xlu0 %v3909
        %v3911 = vpop.xlane.xlu0 %3910
        %v3912 = vsel %vm1617, %v3668, -inf
        %3913 = vmax.xlane.f32.xlu0 %v3912
        %v3914 = vpop.xlane.xlu0 %3913
        %v3915 = vsel %vm1617, %v3670, -inf
        %3916 = vmax.xlane.f32.xlu0 %v3915
        %v3917 = vpop.xlane.xlu0 %3916
        %v3918 = vsel %vm1617, %v3672, -inf
        %3919 = vmax.xlane.f32.xlu0 %v3918
        %v3920 = vpop.xlane.xlu0 %3919
        %v3921 = vsel %vm1617, %v3770, -inf
        %3922 = vmax.xlane.f32.xlu0 %v3921
        %v3923 = vpop.xlane.xlu0 %3922
        %v3924 = vsel %vm1617, %v3772, -inf
        %3925 = vmax.xlane.f32.xlu0 %v3924
        %v3926 = vpop.xlane.xlu0 %3925
        %v3927 = vsel %vm1617, %v3774, -inf
        %3928 = vmax.xlane.f32.xlu0 %v3927
        %v3929 = vpop.xlane.xlu0 %3928
        %v3930 = vsel %vm1617, %v3776, -inf
        %3931 = vmax.xlane.f32.xlu0 %v3930
        %v3932 = vpop.xlane.xlu0 %3931
        %v3933 = vsel %vm1617, %v3778, -inf
        %3934 = vmax.xlane.f32.xlu0 %v3933
        %v3935 = vpop.xlane.xlu0 %3934
        %v3936 = vsel %vm1617, %v3780, -inf
        %3937 = vmax.xlane.f32.xlu0 %v3936
        %v3938 = vpop.xlane.xlu0 %3937
        %v3939 = vsel %vm1617, %v3782, -inf
        %3940 = vmax.xlane.f32.xlu0 %v3939
        %v3941 = vpop.xlane.xlu0 %3940
        %v3942 = vsel %vm1617, %v3784, -inf
        %3943 = vmax.xlane.f32.xlu0 %v3942
        %v3944 = vpop.xlane.xlu0 %3943
        %v3945 = vsel %vm1617, %v3882, -inf
        %3946 = vmax.xlane.f32.xlu0 %v3945
        %v3947 = vpop.xlane.xlu0 %3946
        %v3948 = vsel %vm1617, %v3884, -inf
        %3949 = vmax.xlane.f32.xlu0 %v3948
        %v3950 = vpop.xlane.xlu0 %3949
        %v3951 = vsel %vm1617, %v3886, -inf
        %3952 = vmax.xlane.f32.xlu0 %v3951
        %v3953 = vpop.xlane.xlu0 %3952
        %v3954 = vsel %vm1617, %v3888, -inf
        %3955 = vmax.xlane.f32.xlu0 %v3954
        %v3956 = vpop.xlane.xlu0 %3955
        %v3957 = vsel %vm1617, %v3890, -inf
        %3958 = vmax.xlane.f32.xlu0 %v3957
        %v3959 = vpop.xlane.xlu0 %3958
        %v3960 = vsel %vm1617, %v3892, -inf
        %3961 = vmax.xlane.f32.xlu0 %v3960
        %v3962 = vpop.xlane.xlu0 %3961
        %v3963 = vsel %vm1617, %v3894, -inf
        %3964 = vmax.xlane.f32.xlu0 %v3963
        %v3965 = vpop.xlane.xlu0 %3964
        %v3966 = vsel %vm1617, %v3896, -inf
        %3967 = vmax.xlane.f32.xlu0 %v3966
        %v3968 = vpop.xlane.xlu0 %3967
        %v3969 = vsub.f32 %v3658, %v3899
        %v3970 = vsub.f32 %v3660, %v3902
        %v3971 = vsub.f32 %v3662, %v3905
        %v3972 = vsub.f32 %v3664, %v3908
        %v3973 = vsub.f32 %v3666, %v3911
        %v3974 = vsub.f32 %v3668, %v3914
        %v3975 = vsub.f32 %v3670, %v3917
        %v3976 = vsub.f32 %v3672, %v3920
        %v3977 = vsub.f32 %v3770, %v3923
        %v3978 = vsub.f32 %v3772, %v3926
        %v3979 = vsub.f32 %v3774, %v3929
        %v3980 = vsub.f32 %v3776, %v3932
        %v3981 = vsub.f32 %v3778, %v3935
        %v3982 = vsub.f32 %v3780, %v3938
        %v3983 = vsub.f32 %v3782, %v3941
        %v3984 = vsub.f32 %v3784, %v3944
        %v3985 = vsub.f32 %v3882, %v3947
        %v3986 = vsub.f32 %v3884, %v3950
        %v3987 = vsub.f32 %v3886, %v3953
        %v3988 = vsub.f32 %v3888, %v3956
        %v3989 = vsub.f32 %v3890, %v3959
        %v3990 = vsub.f32 %v3892, %v3962
        %v3991 = vsub.f32 %v3894, %v3965
        %v3992 = vsub.f32 %v3896, %v3968
        %v3993 = vmul.f32 %v3969, 1.442695
        %v3994 = vpow.pop %v3993
        %v3995 = vmul.f32 %v3970, 1.442695
        %v3996 = vpow.pop %v3995
        %v3997 = vmul.f32 %v3971, 1.442695
        %v3998 = vpow.pop %v3997
        %v3999 = vmul.f32 %v3972, 1.442695
        %v4000 = vpow.pop %v3999
        %v4001 = vmul.f32 %v3973, 1.442695
        %v4002 = vpow.pop %v4001
        %v4003 = vmul.f32 %v3974, 1.442695
        %v4004 = vpow.pop %v4003
        %v4005 = vmul.f32 %v3975, 1.442695
        %v4006 = vpow.pop %v4005
        %v4007 = vmul.f32 %v3976, 1.442695
        %v4008 = vpow.pop %v4007
        %v4009 = vmul.f32 %v3977, 1.442695
        %v4010 = vpow.pop %v4009
        %v4011 = vmul.f32 %v3978, 1.442695
        %v4012 = vpow.pop %v4011
        %v4013 = vmul.f32 %v3979, 1.442695
        %v4014 = vpow.pop %v4013
        %v4015 = vmul.f32 %v3980, 1.442695
        %v4016 = vpow.pop %v4015
        %v4017 = vmul.f32 %v3981, 1.442695
        %v4018 = vpow.pop %v4017
        %v4019 = vmul.f32 %v3982, 1.442695
        %v4020 = vpow.pop %v4019
        %v4021 = vmul.f32 %v3983, 1.442695
        %v4022 = vpow.pop %v4021
        %v4023 = vmul.f32 %v3984, 1.442695
        %v4024 = vpow.pop %v4023
        %v4025 = vmul.f32 %v3985, 1.442695
        %v4026 = vpow.pop %v4025
        %v4027 = vmul.f32 %v3986, 1.442695
        %v4028 = vpow.pop %v4027
        %v4029 = vmul.f32 %v3987, 1.442695
        %v4030 = vpow.pop %v4029
        %v4031 = vmul.f32 %v3988, 1.442695
        %v4032 = vpow.pop %v4031
        %v4033 = vmul.f32 %v3989, 1.442695
        %v4034 = vpow.pop %v4033
        %v4035 = vmul.f32 %v3990, 1.442695
        %v4036 = vpow.pop %v4035
        %v4037 = vmul.f32 %v3991, 1.442695
        %v4038 = vpow.pop %v4037
        %v4039 = vmul.f32 %v3992, 1.442695
        %v4040 = vpow.pop %v4039
        %v4041 = vsel %vm1617, %v3994, 0.0
        %4042 = vadd.xlane.f32.xlu0 %v4041
        %v4043 = vpop.xlane.xlu0 %4042
        %v4044 = vsel %vm1617, %v3996, 0.0
        %4045 = vadd.xlane.f32.xlu0 %v4044
        %v4046 = vpop.xlane.xlu0 %4045
        %v4047 = vsel %vm1617, %v3998, 0.0
        %4048 = vadd.xlane.f32.xlu0 %v4047
        %v4049 = vpop.xlane.xlu0 %4048
        %v4050 = vsel %vm1617, %v4000, 0.0
        %4051 = vadd.xlane.f32.xlu0 %v4050
        %v4052 = vpop.xlane.xlu0 %4051
        %v4053 = vsel %vm1617, %v4002, 0.0
        %4054 = vadd.xlane.f32.xlu0 %v4053
        %v4055 = vpop.xlane.xlu0 %4054
        %v4056 = vsel %vm1617, %v4004, 0.0
        %4057 = vadd.xlane.f32.xlu0 %v4056
        %v4058 = vpop.xlane.xlu0 %4057
        %v4059 = vsel %vm1617, %v4006, 0.0
        %4060 = vadd.xlane.f32.xlu0 %v4059
        %v4061 = vpop.xlane.xlu0 %4060
        %v4062 = vsel %vm1617, %v4008, 0.0
        %4063 = vadd.xlane.f32.xlu0 %v4062
        %v4064 = vpop.xlane.xlu0 %4063
        %v4065 = vsel %vm1617, %v4010, 0.0
        %4066 = vadd.xlane.f32.xlu0 %v4065
        %v4067 = vpop.xlane.xlu0 %4066
        %v4068 = vsel %vm1617, %v4012, 0.0
        %4069 = vadd.xlane.f32.xlu0 %v4068
        %v4070 = vpop.xlane.xlu0 %4069
        %v4071 = vsel %vm1617, %v4014, 0.0
        %4072 = vadd.xlane.f32.xlu0 %v4071
        %v4073 = vpop.xlane.xlu0 %4072
        %v4074 = vsel %vm1617, %v4016, 0.0
        %4075 = vadd.xlane.f32.xlu0 %v4074
        %v4076 = vpop.xlane.xlu0 %4075
        %v4077 = vsel %vm1617, %v4018, 0.0
        %4078 = vadd.xlane.f32.xlu0 %v4077
        %v4079 = vpop.xlane.xlu0 %4078
        %v4080 = vsel %vm1617, %v4020, 0.0
        %4081 = vadd.xlane.f32.xlu0 %v4080
        %v4082 = vpop.xlane.xlu0 %4081
        %v4083 = vsel %vm1617, %v4022, 0.0
        %4084 = vadd.xlane.f32.xlu0 %v4083
        %v4085 = vpop.xlane.xlu0 %4084
        %v4086 = vsel %vm1617, %v4024, 0.0
        %4087 = vadd.xlane.f32.xlu0 %v4086
        %v4088 = vpop.xlane.xlu0 %4087
        %v4089 = vsel %vm1617, %v4026, 0.0
        %4090 = vadd.xlane.f32.xlu0 %v4089
        %v4091 = vpop.xlane.xlu0 %4090
        %v4092 = vsel %vm1617, %v4028, 0.0
        %4093 = vadd.xlane.f32.xlu0 %v4092
        %v4094 = vpop.xlane.xlu0 %4093
        %v4095 = vsel %vm1617, %v4030, 0.0
        %4096 = vadd.xlane.f32.xlu0 %v4095
        %v4097 = vpop.xlane.xlu0 %4096
        %v4098 = vsel %vm1617, %v4032, 0.0
        %4099 = vadd.xlane.f32.xlu0 %v4098
        %v4100 = vpop.xlane.xlu0 %4099
        %v4101 = vsel %vm1617, %v4034, 0.0
        %4102 = vadd.xlane.f32.xlu0 %v4101
        %v4103 = vpop.xlane.xlu0 %4102
        %v4104 = vsel %vm1617, %v4036, 0.0
        %4105 = vadd.xlane.f32.xlu0 %v4104
        %v4106 = vpop.xlane.xlu0 %4105
        %v4107 = vsel %vm1617, %v4038, 0.0
        %4108 = vadd.xlane.f32.xlu0 %v4107
        %v4109 = vpop.xlane.xlu0 %4108
        %v4110 = vsel %vm1617, %v4040, 0.0
        %4111 = vadd.xlane.f32.xlu0 %v4110
        %v4112 = vpop.xlane.xlu0 %4111
        %v4113 = vrcp.pop %v4043
        %v4114 = vmul.f32 %v4043, %v4113
        %v4115 = vsub.f32 1.0, %v4114
        %v4116 = vmul.f32 %v4113, %v4115
        %v4117 = vadd.f32 %v4113, %v4116
        %vm4118 = vweird.f32 %v4043
        %vm4119 = vweird.f32 %v4113
        %vm4120 = vmor %vm4118, %vm4119
        %v4121 = vsel %vm4120, %v4113, %v4117
        %v4122 = vand.u32 2147483647, %v4043
        %vm4123 = vcmp.eq.f32.partialorder %v4122, 8.507059e+37
        %v4124 = vand.u32 %v4043, 2147483648
        %v4125 = vor.u32 1.1754944e-38, %v4124
        %v4126 = vsel %vm4123, %v4125, %v4121
        %v4127 = vmul.f32 %v3994, %v4126
        %v4128 = vrcp.pop %v4046
        %v4129 = vmul.f32 %v4046, %v4128
        %v4130 = vsub.f32 1.0, %v4129
        %v4131 = vmul.f32 %v4128, %v4130
        %v4132 = vadd.f32 %v4128, %v4131
        %vm4133 = vweird.f32 %v4046
        %vm4134 = vweird.f32 %v4128
        %vm4135 = vmor %vm4133, %vm4134
        %v4136 = vsel %vm4135, %v4128, %v4132
        %v4137 = vand.u32 2147483647, %v4046
        %vm4138 = vcmp.eq.f32.partialorder %v4137, 8.507059e+37
        %v4139 = vand.u32 %v4046, 2147483648
        %v4140 = vor.u32 1.1754944e-38, %v4139
        %v4141 = vsel %vm4138, %v4140, %v4136
        %v4142 = vmul.f32 %v3996, %v4141
        %v4143 = vrcp.pop %v4049
        %v4144 = vmul.f32 %v4049, %v4143
        %v4145 = vsub.f32 1.0, %v4144
        %v4146 = vmul.f32 %v4143, %v4145
        %v4147 = vadd.f32 %v4143, %v4146
        %vm4148 = vweird.f32 %v4049
        %vm4149 = vweird.f32 %v4143
        %vm4150 = vmor %vm4148, %vm4149
        %v4151 = vsel %vm4150, %v4143, %v4147
        %v4152 = vand.u32 2147483647, %v4049
        %vm4153 = vcmp.eq.f32.partialorder %v4152, 8.507059e+37
        %v4154 = vand.u32 %v4049, 2147483648
        %v4155 = vor.u32 1.1754944e-38, %v4154
        %v4156 = vsel %vm4153, %v4155, %v4151
        %v4157 = vmul.f32 %v3998, %v4156
        %v4158 = vrcp.pop %v4052
        %v4159 = vmul.f32 %v4052, %v4158
        %v4160 = vsub.f32 1.0, %v4159
        %v4161 = vmul.f32 %v4158, %v4160
        %v4162 = vadd.f32 %v4158, %v4161
        %vm4163 = vweird.f32 %v4052
        %vm4164 = vweird.f32 %v4158
        %vm4165 = vmor %vm4163, %vm4164
        %v4166 = vsel %vm4165, %v4158, %v4162
        %v4167 = vand.u32 2147483647, %v4052
        %vm4168 = vcmp.eq.f32.partialorder %v4167, 8.507059e+37
        %v4169 = vand.u32 %v4052, 2147483648
        %v4170 = vor.u32 1.1754944e-38, %v4169
        %v4171 = vsel %vm4168, %v4170, %v4166
        %v4172 = vmul.f32 %v4000, %v4171
        %v4173 = vrcp.pop %v4055
        %v4174 = vmul.f32 %v4055, %v4173
        %v4175 = vsub.f32 1.0, %v4174
        %v4176 = vmul.f32 %v4173, %v4175
        %v4177 = vadd.f32 %v4173, %v4176
        %vm4178 = vweird.f32 %v4055
        %vm4179 = vweird.f32 %v4173
        %vm4180 = vmor %vm4178, %vm4179
        %v4181 = vsel %vm4180, %v4173, %v4177
        %v4182 = vand.u32 2147483647, %v4055
        %vm4183 = vcmp.eq.f32.partialorder %v4182, 8.507059e+37
        %v4184 = vand.u32 %v4055, 2147483648
        %v4185 = vor.u32 1.1754944e-38, %v4184
        %v4186 = vsel %vm4183, %v4185, %v4181
        %v4187 = vmul.f32 %v4002, %v4186
        %v4188 = vrcp.pop %v4058
        %v4189 = vmul.f32 %v4058, %v4188
        %v4190 = vsub.f32 1.0, %v4189
        %v4191 = vmul.f32 %v4188, %v4190
        %v4192 = vadd.f32 %v4188, %v4191
        %vm4193 = vweird.f32 %v4058
        %vm4194 = vweird.f32 %v4188
        %vm4195 = vmor %vm4193, %vm4194
        %v4196 = vsel %vm4195, %v4188, %v4192
        %v4197 = vand.u32 2147483647, %v4058
        %vm4198 = vcmp.eq.f32.partialorder %v4197, 8.507059e+37
        %v4199 = vand.u32 %v4058, 2147483648
        %v4200 = vor.u32 1.1754944e-38, %v4199
        %v4201 = vsel %vm4198, %v4200, %v4196
        %v4202 = vmul.f32 %v4004, %v4201
        %v4203 = vrcp.pop %v4061
        %v4204 = vmul.f32 %v4061, %v4203
        %v4205 = vsub.f32 1.0, %v4204
        %v4206 = vmul.f32 %v4203, %v4205
        %v4207 = vadd.f32 %v4203, %v4206
        %vm4208 = vweird.f32 %v4061
        %vm4209 = vweird.f32 %v4203
        %vm4210 = vmor %vm4208, %vm4209
        %v4211 = vsel %vm4210, %v4203, %v4207
        %v4212 = vand.u32 2147483647, %v4061
        %vm4213 = vcmp.eq.f32.partialorder %v4212, 8.507059e+37
        %v4214 = vand.u32 %v4061, 2147483648
        %v4215 = vor.u32 1.1754944e-38, %v4214
        %v4216 = vsel %vm4213, %v4215, %v4211
        %v4217 = vmul.f32 %v4006, %v4216
        %v4218 = vrcp.pop %v4064
        %v4219 = vmul.f32 %v4064, %v4218
        %v4220 = vsub.f32 1.0, %v4219
        %v4221 = vmul.f32 %v4218, %v4220
        %v4222 = vadd.f32 %v4218, %v4221
        %vm4223 = vweird.f32 %v4064
        %vm4224 = vweird.f32 %v4218
        %vm4225 = vmor %vm4223, %vm4224
        %v4226 = vsel %vm4225, %v4218, %v4222
        %v4227 = vand.u32 2147483647, %v4064
        %vm4228 = vcmp.eq.f32.partialorder %v4227, 8.507059e+37
        %v4229 = vand.u32 %v4064, 2147483648
        %v4230 = vor.u32 1.1754944e-38, %v4229
        %v4231 = vsel %vm4228, %v4230, %v4226
        %v4232 = vmul.f32 %v4008, %v4231
        %v4233 = vrcp.pop %v4067
        %v4234 = vmul.f32 %v4067, %v4233
        %v4235 = vsub.f32 1.0, %v4234
        %v4236 = vmul.f32 %v4233, %v4235
        %v4237 = vadd.f32 %v4233, %v4236
        %vm4238 = vweird.f32 %v4067
        %vm4239 = vweird.f32 %v4233
        %vm4240 = vmor %vm4238, %vm4239
        %v4241 = vsel %vm4240, %v4233, %v4237
        %v4242 = vand.u32 2147483647, %v4067
        %vm4243 = vcmp.eq.f32.partialorder %v4242, 8.507059e+37
        %v4244 = vand.u32 %v4067, 2147483648
        %v4245 = vor.u32 1.1754944e-38, %v4244
        %v4246 = vsel %vm4243, %v4245, %v4241
        %v4247 = vmul.f32 %v4010, %v4246
        %v4248 = vrcp.pop %v4070
        %v4249 = vmul.f32 %v4070, %v4248
        %v4250 = vsub.f32 1.0, %v4249
        %v4251 = vmul.f32 %v4248, %v4250
        %v4252 = vadd.f32 %v4248, %v4251
        %vm4253 = vweird.f32 %v4070
        %vm4254 = vweird.f32 %v4248
        %vm4255 = vmor %vm4253, %vm4254
        %v4256 = vsel %vm4255, %v4248, %v4252
        %v4257 = vand.u32 2147483647, %v4070
        %vm4258 = vcmp.eq.f32.partialorder %v4257, 8.507059e+37
        %v4259 = vand.u32 %v4070, 2147483648
        %v4260 = vor.u32 1.1754944e-38, %v4259
        %v4261 = vsel %vm4258, %v4260, %v4256
        %v4262 = vmul.f32 %v4012, %v4261
        %v4263 = vrcp.pop %v4073
        %v4264 = vmul.f32 %v4073, %v4263
        %v4265 = vsub.f32 1.0, %v4264
        %v4266 = vmul.f32 %v4263, %v4265
        %v4267 = vadd.f32 %v4263, %v4266
        %vm4268 = vweird.f32 %v4073
        %vm4269 = vweird.f32 %v4263
        %vm4270 = vmor %vm4268, %vm4269
        %v4271 = vsel %vm4270, %v4263, %v4267
        %v4272 = vand.u32 2147483647, %v4073
        %vm4273 = vcmp.eq.f32.partialorder %v4272, 8.507059e+37
        %v4274 = vand.u32 %v4073, 2147483648
        %v4275 = vor.u32 1.1754944e-38, %v4274
        %v4276 = vsel %vm4273, %v4275, %v4271
        %v4277 = vmul.f32 %v4014, %v4276
        %v4278 = vrcp.pop %v4076
        %v4279 = vmul.f32 %v4076, %v4278
        %v4280 = vsub.f32 1.0, %v4279
        %v4281 = vmul.f32 %v4278, %v4280
        %v4282 = vadd.f32 %v4278, %v4281
        %vm4283 = vweird.f32 %v4076
        %vm4284 = vweird.f32 %v4278
        %vm4285 = vmor %vm4283, %vm4284
        %v4286 = vsel %vm4285, %v4278, %v4282
        %v4287 = vand.u32 2147483647, %v4076
        %vm4288 = vcmp.eq.f32.partialorder %v4287, 8.507059e+37
        %v4289 = vand.u32 %v4076, 2147483648
        %v4290 = vor.u32 1.1754944e-38, %v4289
        %v4291 = vsel %vm4288, %v4290, %v4286
        %v4292 = vmul.f32 %v4016, %v4291
        %v4293 = vrcp.pop %v4079
        %v4294 = vmul.f32 %v4079, %v4293
        %v4295 = vsub.f32 1.0, %v4294
        %v4296 = vmul.f32 %v4293, %v4295
        %v4297 = vadd.f32 %v4293, %v4296
        %vm4298 = vweird.f32 %v4079
        %vm4299 = vweird.f32 %v4293
        %vm4300 = vmor %vm4298, %vm4299
        %v4301 = vsel %vm4300, %v4293, %v4297
        %v4302 = vand.u32 2147483647, %v4079
        %vm4303 = vcmp.eq.f32.partialorder %v4302, 8.507059e+37
        %v4304 = vand.u32 %v4079, 2147483648
        %v4305 = vor.u32 1.1754944e-38, %v4304
        %v4306 = vsel %vm4303, %v4305, %v4301
        %v4307 = vmul.f32 %v4018, %v4306
        %v4308 = vrcp.pop %v4082
        %v4309 = vmul.f32 %v4082, %v4308
        %v4310 = vsub.f32 1.0, %v4309
        %v4311 = vmul.f32 %v4308, %v4310
        %v4312 = vadd.f32 %v4308, %v4311
        %vm4313 = vweird.f32 %v4082
        %vm4314 = vweird.f32 %v4308
        %vm4315 = vmor %vm4313, %vm4314
        %v4316 = vsel %vm4315, %v4308, %v4312
        %v4317 = vand.u32 2147483647, %v4082
        %vm4318 = vcmp.eq.f32.partialorder %v4317, 8.507059e+37
        %v4319 = vand.u32 %v4082, 2147483648
        %v4320 = vor.u32 1.1754944e-38, %v4319
        %v4321 = vsel %vm4318, %v4320, %v4316
        %v4322 = vmul.f32 %v4020, %v4321
        %v4323 = vrcp.pop %v4085
        %v4324 = vmul.f32 %v4085, %v4323
        %v4325 = vsub.f32 1.0, %v4324
        %v4326 = vmul.f32 %v4323, %v4325
        %v4327 = vadd.f32 %v4323, %v4326
        %vm4328 = vweird.f32 %v4085
        %vm4329 = vweird.f32 %v4323
        %vm4330 = vmor %vm4328, %vm4329
        %v4331 = vsel %vm4330, %v4323, %v4327
        %v4332 = vand.u32 2147483647, %v4085
        %vm4333 = vcmp.eq.f32.partialorder %v4332, 8.507059e+37
        %v4334 = vand.u32 %v4085, 2147483648
        %v4335 = vor.u32 1.1754944e-38, %v4334
        %v4336 = vsel %vm4333, %v4335, %v4331
        %v4337 = vmul.f32 %v4022, %v4336
        %v4338 = vrcp.pop %v4088
        %v4339 = vmul.f32 %v4088, %v4338
        %v4340 = vsub.f32 1.0, %v4339
        %v4341 = vmul.f32 %v4338, %v4340
        %v4342 = vadd.f32 %v4338, %v4341
        %vm4343 = vweird.f32 %v4088
        %vm4344 = vweird.f32 %v4338
        %vm4345 = vmor %vm4343, %vm4344
        %v4346 = vsel %vm4345, %v4338, %v4342
        %v4347 = vand.u32 2147483647, %v4088
        %vm4348 = vcmp.eq.f32.partialorder %v4347, 8.507059e+37
        %v4349 = vand.u32 %v4088, 2147483648
        %v4350 = vor.u32 1.1754944e-38, %v4349
        %v4351 = vsel %vm4348, %v4350, %v4346
        %v4352 = vmul.f32 %v4024, %v4351
        %v4353 = vrcp.pop %v4091
        %v4354 = vmul.f32 %v4091, %v4353
        %v4355 = vsub.f32 1.0, %v4354
        %v4356 = vmul.f32 %v4353, %v4355
        %v4357 = vadd.f32 %v4353, %v4356
        %vm4358 = vweird.f32 %v4091
        %vm4359 = vweird.f32 %v4353
        %vm4360 = vmor %vm4358, %vm4359
        %v4361 = vsel %vm4360, %v4353, %v4357
        %v4362 = vand.u32 2147483647, %v4091
        %vm4363 = vcmp.eq.f32.partialorder %v4362, 8.507059e+37
        %v4364 = vand.u32 %v4091, 2147483648
        %v4365 = vor.u32 1.1754944e-38, %v4364
        %v4366 = vsel %vm4363, %v4365, %v4361
        %v4367 = vmul.f32 %v4026, %v4366
        %v4368 = vrcp.pop %v4094
        %v4369 = vmul.f32 %v4094, %v4368
        %v4370 = vsub.f32 1.0, %v4369
        %v4371 = vmul.f32 %v4368, %v4370
        %v4372 = vadd.f32 %v4368, %v4371
        %vm4373 = vweird.f32 %v4094
        %vm4374 = vweird.f32 %v4368
        %vm4375 = vmor %vm4373, %vm4374
        %v4376 = vsel %vm4375, %v4368, %v4372
        %v4377 = vand.u32 2147483647, %v4094
        %vm4378 = vcmp.eq.f32.partialorder %v4377, 8.507059e+37
        %v4379 = vand.u32 %v4094, 2147483648
        %v4380 = vor.u32 1.1754944e-38, %v4379
        %v4381 = vsel %vm4378, %v4380, %v4376
        %v4382 = vmul.f32 %v4028, %v4381
        %v4383 = vrcp.pop %v4097
        %v4384 = vmul.f32 %v4097, %v4383
        %v4385 = vsub.f32 1.0, %v4384
        %v4386 = vmul.f32 %v4383, %v4385
        %v4387 = vadd.f32 %v4383, %v4386
        %vm4388 = vweird.f32 %v4097
        %vm4389 = vweird.f32 %v4383
        %vm4390 = vmor %vm4388, %vm4389
        %v4391 = vsel %vm4390, %v4383, %v4387
        %v4392 = vand.u32 2147483647, %v4097
        %vm4393 = vcmp.eq.f32.partialorder %v4392, 8.507059e+37
        %v4394 = vand.u32 %v4097, 2147483648
        %v4395 = vor.u32 1.1754944e-38, %v4394
        %v4396 = vsel %vm4393, %v4395, %v4391
        %v4397 = vmul.f32 %v4030, %v4396
        %v4398 = vrcp.pop %v4100
        %v4399 = vmul.f32 %v4100, %v4398
        %v4400 = vsub.f32 1.0, %v4399
        %v4401 = vmul.f32 %v4398, %v4400
        %v4402 = vadd.f32 %v4398, %v4401
        %vm4403 = vweird.f32 %v4100
        %vm4404 = vweird.f32 %v4398
        %vm4405 = vmor %vm4403, %vm4404
        %v4406 = vsel %vm4405, %v4398, %v4402
        %v4407 = vand.u32 2147483647, %v4100
        %vm4408 = vcmp.eq.f32.partialorder %v4407, 8.507059e+37
        %v4409 = vand.u32 %v4100, 2147483648
        %v4410 = vor.u32 1.1754944e-38, %v4409
        %v4411 = vsel %vm4408, %v4410, %v4406
        %v4412 = vmul.f32 %v4032, %v4411
        %v4413 = vrcp.pop %v4103
        %v4414 = vmul.f32 %v4103, %v4413
        %v4415 = vsub.f32 1.0, %v4414
        %v4416 = vmul.f32 %v4413, %v4415
        %v4417 = vadd.f32 %v4413, %v4416
        %vm4418 = vweird.f32 %v4103
        %vm4419 = vweird.f32 %v4413
        %vm4420 = vmor %vm4418, %vm4419
        %v4421 = vsel %vm4420, %v4413, %v4417
        %v4422 = vand.u32 2147483647, %v4103
        %vm4423 = vcmp.eq.f32.partialorder %v4422, 8.507059e+37
        %v4424 = vand.u32 %v4103, 2147483648
        %v4425 = vor.u32 1.1754944e-38, %v4424
        %v4426 = vsel %vm4423, %v4425, %v4421
        %v4427 = vmul.f32 %v4034, %v4426
        %v4428 = vrcp.pop %v4106
        %v4429 = vmul.f32 %v4106, %v4428
        %v4430 = vsub.f32 1.0, %v4429
        %v4431 = vmul.f32 %v4428, %v4430
        %v4432 = vadd.f32 %v4428, %v4431
        %vm4433 = vweird.f32 %v4106
        %vm4434 = vweird.f32 %v4428
        %vm4435 = vmor %vm4433, %vm4434
        %v4436 = vsel %vm4435, %v4428, %v4432
        %v4437 = vand.u32 2147483647, %v4106
        %vm4438 = vcmp.eq.f32.partialorder %v4437, 8.507059e+37
        %v4439 = vand.u32 %v4106, 2147483648
        %v4440 = vor.u32 1.1754944e-38, %v4439
        %v4441 = vsel %vm4438, %v4440, %v4436
        %v4442 = vmul.f32 %v4036, %v4441
        %v4443 = vrcp.pop %v4109
        %v4444 = vmul.f32 %v4109, %v4443
        %v4445 = vsub.f32 1.0, %v4444
        %v4446 = vmul.f32 %v4443, %v4445
        %v4447 = vadd.f32 %v4443, %v4446
        %vm4448 = vweird.f32 %v4109
        %vm4449 = vweird.f32 %v4443
        %vm4450 = vmor %vm4448, %vm4449
        %v4451 = vsel %vm4450, %v4443, %v4447
        %v4452 = vand.u32 2147483647, %v4109
        %vm4453 = vcmp.eq.f32.partialorder %v4452, 8.507059e+37
        %v4454 = vand.u32 %v4109, 2147483648
        %v4455 = vor.u32 1.1754944e-38, %v4454
        %v4456 = vsel %vm4453, %v4455, %v4451
        %v4457 = vmul.f32 %v4038, %v4456
        %v4458 = vrcp.pop %v4112
        %v4459 = vmul.f32 %v4112, %v4458
        %v4460 = vsub.f32 1.0, %v4459
        %v4461 = vmul.f32 %v4458, %v4460
        %v4462 = vadd.f32 %v4458, %v4461
        %vm4463 = vweird.f32 %v4112
        %vm4464 = vweird.f32 %v4458
        %vm4465 = vmor %vm4463, %vm4464
        %v4466 = vsel %vm4465, %v4458, %v4462
        %v4467 = vand.u32 2147483647, %v4112
        %vm4468 = vcmp.eq.f32.partialorder %v4467, 8.507059e+37
        %v4469 = vand.u32 %v4112, 2147483648
        %v4470 = vor.u32 1.1754944e-38, %v4469
        %v4471 = vsel %vm4468, %v4470, %v4466
        %v4472 = vmul.f32 %v4040, %v4471
        %v4473 = vrot.slane %v4157, 4
        %v4474 = vsel %vm1281, %v4473, %v4127
        %v4475 = vrot.slane %v4127, 4
        %v4476 = vsel %vm1281, %v4157, %v4475
        %v4478 = vunpack.c.l.s4 1983009808
        %v4479 = vunpack.c.0.s8 %v4478
        %v4480 = vperm.slane %v4474, %v4479
        %v4482 = vunpack.c.l.s4 1983009808
        %v4483 = vunpack.c.0.s8 %v4482
        %v4484 = vperm.slane %v4476, %v4483
        %v4485 = vrot.slane %v4172, 4
        %v4486 = vsel %vm1281, %v4485, %v4142
        %v4487 = vrot.slane %v4142, 4
        %v4488 = vsel %vm1281, %v4172, %v4487
        %v4490 = vunpack.c.l.s4 1983009808
        %v4491 = vunpack.c.0.s8 %v4490
        %v4492 = vperm.slane %v4486, %v4491
        %v4494 = vunpack.c.l.s4 1983009808
        %v4495 = vunpack.c.0.s8 %v4494
        %v4496 = vperm.slane %v4488, %v4495
        %v4497 = vrot.slane %v4217, 4
        %v4498 = vsel %vm1281, %v4497, %v4187
        %v4499 = vrot.slane %v4187, 4
        %v4500 = vsel %vm1281, %v4217, %v4499
        %v4502 = vunpack.c.l.s4 1983009808
        %v4503 = vunpack.c.0.s8 %v4502
        %v4504 = vperm.slane %v4498, %v4503
        %v4506 = vunpack.c.l.s4 1983009808
        %v4507 = vunpack.c.0.s8 %v4506
        %v4508 = vperm.slane %v4500, %v4507
        %v4509 = vrot.slane %v4232, 4
        %v4510 = vsel %vm1281, %v4509, %v4202
        %v4511 = vrot.slane %v4202, 4
        %v4512 = vsel %vm1281, %v4232, %v4511
        %v4514 = vunpack.c.l.s4 1983009808
        %v4515 = vunpack.c.0.s8 %v4514
        %v4516 = vperm.slane %v4510, %v4515
        %v4518 = vunpack.c.l.s4 1983009808
        %v4519 = vunpack.c.0.s8 %v4518
        %v4520 = vperm.slane %v4512, %v4519
        %v4521 = vrot.slane %v4492, 4
        %v4522 = vsel %vm1281, %v4521, %v4480
        %v4523 = vrot.slane %v4480, 4
        %v4524 = vsel %vm1281, %v4492, %v4523
        %v4526 = vunpack.c.l.s4 1934713408
        %v4527 = vunpack.c.0.s8 %v4526
        %v4528 = vperm.slane %v4522, %v4527
        %v4530 = vunpack.c.l.s4 1934713408
        %v4531 = vunpack.c.0.s8 %v4530
        %v4532 = vperm.slane %v4524, %v4531
        %v4533 = vrot.slane %v4496, 4
        %v4534 = vsel %vm1281, %v4533, %v4484
        %v4535 = vrot.slane %v4484, 4
        %v4536 = vsel %vm1281, %v4496, %v4535
        %v4538 = vunpack.c.l.s4 1934713408
        %v4539 = vunpack.c.0.s8 %v4538
        %v4540 = vperm.slane %v4534, %v4539
        %v4542 = vunpack.c.l.s4 1934713408
        %v4543 = vunpack.c.0.s8 %v4542
        %v4544 = vperm.slane %v4536, %v4543
        %v4545 = vrot.slane %v4516, 4
        %v4546 = vsel %vm1281, %v4545, %v4504
        %v4547 = vrot.slane %v4504, 4
        %v4548 = vsel %vm1281, %v4516, %v4547
        %v4550 = vunpack.c.l.s4 1934713408
        %v4551 = vunpack.c.0.s8 %v4550
        %v4552 = vperm.slane %v4546, %v4551
        %v4554 = vunpack.c.l.s4 1934713408
        %v4555 = vunpack.c.0.s8 %v4554
        %v4556 = vperm.slane %v4548, %v4555
        %v4557 = vrot.slane %v4520, 4
        %v4558 = vsel %vm1281, %v4557, %v4508
        %v4559 = vrot.slane %v4508, 4
        %v4560 = vsel %vm1281, %v4520, %v4559
        %v4562 = vunpack.c.l.s4 1934713408
        %v4563 = vunpack.c.0.s8 %v4562
        %v4564 = vperm.slane %v4558, %v4563
        %v4566 = vunpack.c.l.s4 1934713408
        %v4567 = vunpack.c.0.s8 %v4566
        %v4568 = vperm.slane %v4560, %v4567
        %v4569 = vrot.slane %v4552, 4
        %v4570 = vsel %vm1281, %v4569, %v4528
        %v4571 = vrot.slane %v4528, 4
        %v4572 = vsel %vm1281, %v4552, %v4571
        %v4573 = vrot.slane %v4556, 4
        %v4574 = vsel %vm1281, %v4573, %v4532
        %v4575 = vrot.slane %v4532, 4
        %v4576 = vsel %vm1281, %v4556, %v4575
        %v4577 = vrot.slane %v4564, 4
        %v4578 = vsel %vm1281, %v4577, %v4540
        %v4579 = vrot.slane %v4540, 4
        %v4580 = vsel %vm1281, %v4564, %v4579
        %v4581 = vrot.slane %v4568, 4
        %v4582 = vsel %vm1281, %v4581, %v4544
        %v4583 = vrot.slane %v4544, 4
        %v4584 = vsel %vm1281, %v4568, %v4583
        %v4585 = vrot.slane %v4277, 4
        %v4586 = vsel %vm1281, %v4585, %v4247
        %v4587 = vrot.slane %v4247, 4
        %v4588 = vsel %vm1281, %v4277, %v4587
        %v4590 = vunpack.c.l.s4 1983009808
        %v4591 = vunpack.c.0.s8 %v4590
        %v4592 = vperm.slane %v4586, %v4591
        %v4594 = vunpack.c.l.s4 1983009808
        %v4595 = vunpack.c.0.s8 %v4594
        %v4596 = vperm.slane %v4588, %v4595
        %v4597 = vrot.slane %v4292, 4
        %v4598 = vsel %vm1281, %v4597, %v4262
        %v4599 = vrot.slane %v4262, 4
        %v4600 = vsel %vm1281, %v4292, %v4599
        %v4602 = vunpack.c.l.s4 1983009808
        %v4603 = vunpack.c.0.s8 %v4602
        %v4604 = vperm.slane %v4598, %v4603
        %v4606 = vunpack.c.l.s4 1983009808
        %v4607 = vunpack.c.0.s8 %v4606
        %v4608 = vperm.slane %v4600, %v4607
        %v4609 = vrot.slane %v4337, 4
        %v4610 = vsel %vm1281, %v4609, %v4307
        %v4611 = vrot.slane %v4307, 4
        %v4612 = vsel %vm1281, %v4337, %v4611
        %v4614 = vunpack.c.l.s4 1983009808
        %v4615 = vunpack.c.0.s8 %v4614
        %v4616 = vperm.slane %v4610, %v4615
        %v4618 = vunpack.c.l.s4 1983009808
        %v4619 = vunpack.c.0.s8 %v4618
        %v4620 = vperm.slane %v4612, %v4619
        %v4621 = vrot.slane %v4352, 4
        %v4622 = vsel %vm1281, %v4621, %v4322
        %v4623 = vrot.slane %v4322, 4
        %v4624 = vsel %vm1281, %v4352, %v4623
        %v4626 = vunpack.c.l.s4 1983009808
        %v4627 = vunpack.c.0.s8 %v4626
        %v4628 = vperm.slane %v4622, %v4627
        %v4630 = vunpack.c.l.s4 1983009808
        %v4631 = vunpack.c.0.s8 %v4630
        %v4632 = vperm.slane %v4624, %v4631
        %v4633 = vrot.slane %v4604, 4
        %v4634 = vsel %vm1281, %v4633, %v4592
        %v4635 = vrot.slane %v4592, 4
        %v4636 = vsel %vm1281, %v4604, %v4635
        %v4638 = vunpack.c.l.s4 1934713408
        %v4639 = vunpack.c.0.s8 %v4638
        %v4640 = vperm.slane %v4634, %v4639
        %v4642 = vunpack.c.l.s4 1934713408
        %v4643 = vunpack.c.0.s8 %v4642
        %v4644 = vperm.slane %v4636, %v4643
        %v4645 = vrot.slane %v4608, 4
        %v4646 = vsel %vm1281, %v4645, %v4596
        %v4647 = vrot.slane %v4596, 4
        %v4648 = vsel %vm1281, %v4608, %v4647
        %v4650 = vunpack.c.l.s4 1934713408
        %v4651 = vunpack.c.0.s8 %v4650
        %v4652 = vperm.slane %v4646, %v4651
        %v4654 = vunpack.c.l.s4 1934713408
        %v4655 = vunpack.c.0.s8 %v4654
        %v4656 = vperm.slane %v4648, %v4655
        %v4657 = vrot.slane %v4628, 4
        %v4658 = vsel %vm1281, %v4657, %v4616
        %v4659 = vrot.slane %v4616, 4
        %v4660 = vsel %vm1281, %v4628, %v4659
        %v4662 = vunpack.c.l.s4 1934713408
        %v4663 = vunpack.c.0.s8 %v4662
        %v4664 = vperm.slane %v4658, %v4663
        %v4666 = vunpack.c.l.s4 1934713408
        %v4667 = vunpack.c.0.s8 %v4666
        %v4668 = vperm.slane %v4660, %v4667
        %v4669 = vrot.slane %v4632, 4
        %v4670 = vsel %vm1281, %v4669, %v4620
        %v4671 = vrot.slane %v4620, 4
        %v4672 = vsel %vm1281, %v4632, %v4671
        %v4674 = vunpack.c.l.s4 1934713408
        %v4675 = vunpack.c.0.s8 %v4674
        %v4676 = vperm.slane %v4670, %v4675
        %v4678 = vunpack.c.l.s4 1934713408
        %v4679 = vunpack.c.0.s8 %v4678
        %v4680 = vperm.slane %v4672, %v4679
        %v4681 = vrot.slane %v4664, 4
        %v4682 = vsel %vm1281, %v4681, %v4640
        %v4683 = vrot.slane %v4640, 4
        %v4684 = vsel %vm1281, %v4664, %v4683
        %v4685 = vrot.slane %v4668, 4
        %v4686 = vsel %vm1281, %v4685, %v4644
        %v4687 = vrot.slane %v4644, 4
        %v4688 = vsel %vm1281, %v4668, %v4687
        %v4689 = vrot.slane %v4676, 4
        %v4690 = vsel %vm1281, %v4689, %v4652
        %v4691 = vrot.slane %v4652, 4
        %v4692 = vsel %vm1281, %v4676, %v4691
        %v4693 = vrot.slane %v4680, 4
        %v4694 = vsel %vm1281, %v4693, %v4656
        %v4695 = vrot.slane %v4656, 4
        %v4696 = vsel %vm1281, %v4680, %v4695
        %v4697 = vrot.slane %v4397, 4
        %v4698 = vsel %vm1281, %v4697, %v4367
        %v4699 = vrot.slane %v4367, 4
        %v4700 = vsel %vm1281, %v4397, %v4699
        %v4702 = vunpack.c.l.s4 1983009808
        %v4703 = vunpack.c.0.s8 %v4702
        %v4704 = vperm.slane %v4698, %v4703
        %v4706 = vunpack.c.l.s4 1983009808
        %v4707 = vunpack.c.0.s8 %v4706
        %v4708 = vperm.slane %v4700, %v4707
        %v4709 = vrot.slane %v4412, 4
        %v4710 = vsel %vm1281, %v4709, %v4382
        %v4711 = vrot.slane %v4382, 4
        %v4712 = vsel %vm1281, %v4412, %v4711
        %v4714 = vunpack.c.l.s4 1983009808
        %v4715 = vunpack.c.0.s8 %v4714
        %v4716 = vperm.slane %v4710, %v4715
        %v4718 = vunpack.c.l.s4 1983009808
        %v4719 = vunpack.c.0.s8 %v4718
        %v4720 = vperm.slane %v4712, %v4719
        %v4721 = vrot.slane %v4457, 4
        %v4722 = vsel %vm1281, %v4721, %v4427
        %v4723 = vrot.slane %v4427, 4
        %v4724 = vsel %vm1281, %v4457, %v4723
        %v4726 = vunpack.c.l.s4 1983009808
        %v4727 = vunpack.c.0.s8 %v4726
        %v4728 = vperm.slane %v4722, %v4727
        %v4730 = vunpack.c.l.s4 1983009808
        %v4731 = vunpack.c.0.s8 %v4730
        %v4732 = vperm.slane %v4724, %v4731
        %v4733 = vrot.slane %v4472, 4
        %v4734 = vsel %vm1281, %v4733, %v4442
        %v4735 = vrot.slane %v4442, 4
        %v4736 = vsel %vm1281, %v4472, %v4735
        %v4738 = vunpack.c.l.s4 1983009808
        %v4739 = vunpack.c.0.s8 %v4738
        %v4740 = vperm.slane %v4734, %v4739
        %v4742 = vunpack.c.l.s4 1983009808
        %v4743 = vunpack.c.0.s8 %v4742
        %v4744 = vperm.slane %v4736, %v4743
        %v4745 = vrot.slane %v4716, 4
        %v4746 = vsel %vm1281, %v4745, %v4704
        %v4747 = vrot.slane %v4704, 4
        %v4748 = vsel %vm1281, %v4716, %v4747
        %v4750 = vunpack.c.l.s4 1934713408
        %v4751 = vunpack.c.0.s8 %v4750
        %v4752 = vperm.slane %v4746, %v4751
        %v4754 = vunpack.c.l.s4 1934713408
        %v4755 = vunpack.c.0.s8 %v4754
        %v4756 = vperm.slane %v4748, %v4755
        %v4757 = vrot.slane %v4720, 4
        %v4758 = vsel %vm1281, %v4757, %v4708
        %v4759 = vrot.slane %v4708, 4
        %v4760 = vsel %vm1281, %v4720, %v4759
        %v4762 = vunpack.c.l.s4 1934713408
        %v4763 = vunpack.c.0.s8 %v4762
        %v4764 = vperm.slane %v4758, %v4763
        %v4766 = vunpack.c.l.s4 1934713408
        %v4767 = vunpack.c.0.s8 %v4766
        %v4768 = vperm.slane %v4760, %v4767
        %v4769 = vrot.slane %v4740, 4
        %v4770 = vsel %vm1281, %v4769, %v4728
        %v4771 = vrot.slane %v4728, 4
        %v4772 = vsel %vm1281, %v4740, %v4771
        %v4774 = vunpack.c.l.s4 1934713408
        %v4775 = vunpack.c.0.s8 %v4774
        %v4776 = vperm.slane %v4770, %v4775
        %v4778 = vunpack.c.l.s4 1934713408
        %v4779 = vunpack.c.0.s8 %v4778
        %v4780 = vperm.slane %v4772, %v4779
        %v4781 = vrot.slane %v4744, 4
        %v4782 = vsel %vm1281, %v4781, %v4732
        %v4783 = vrot.slane %v4732, 4
        %v4784 = vsel %vm1281, %v4744, %v4783
        %v4786 = vunpack.c.l.s4 1934713408
        %v4787 = vunpack.c.0.s8 %v4786
        %v4788 = vperm.slane %v4782, %v4787
        %v4790 = vunpack.c.l.s4 1934713408
        %v4791 = vunpack.c.0.s8 %v4790
        %v4792 = vperm.slane %v4784, %v4791
        %v4793 = vrot.slane %v4776, 4
        %v4794 = vsel %vm1281, %v4793, %v4752
        %v4795 = vrot.slane %v4752, 4
        %v4796 = vsel %vm1281, %v4776, %v4795
        %v4797 = vrot.slane %v4780, 4
        %v4798 = vsel %vm1281, %v4797, %v4756
        %v4799 = vrot.slane %v4756, 4
        %v4800 = vsel %vm1281, %v4780, %v4799
        %v4801 = vrot.slane %v4788, 4
        %v4802 = vsel %vm1281, %v4801, %v4764
        %v4803 = vrot.slane %v4764, 4
        %v4804 = vsel %vm1281, %v4788, %v4803
        %v4805 = vrot.slane %v4792, 4
        %v4806 = vsel %vm1281, %v4805, %v4768
        %v4807 = vrot.slane %v4768, 4
        %v4808 = vsel %vm1281, %v4792, %v4807
        %4812 = vrot.lane.b32.xlu0 %v4572, 8
        %v4813 = vpop.permute.xlu0 %4812
        %4814 = vrot.lane.b32.xlu0 %v4684, 8
        %v4815 = vpop.permute.xlu0 %4814
        %4816 = vrot.lane.b32.xlu0 %v4796, 8
        %v4817 = vpop.permute.xlu0 %4816
        %4824 = vrot.lane.b32.xlu0 %v4574, 16
        %v4825 = vpop.permute.xlu0 %4824
        %4826 = vrot.lane.b32.xlu0 %v4686, 16
        %v4827 = vpop.permute.xlu0 %4826
        %4828 = vrot.lane.b32.xlu0 %v4798, 16
        %v4829 = vpop.permute.xlu0 %4828
        %4836 = vrot.lane.b32.xlu0 %v4576, 24
        %v4837 = vpop.permute.xlu0 %4836
        %4838 = vrot.lane.b32.xlu0 %v4688, 24
        %v4839 = vpop.permute.xlu0 %4838
        %4840 = vrot.lane.b32.xlu0 %v4800, 24
        %v4841 = vpop.permute.xlu0 %4840
        %4848 = vrot.lane.b32.xlu0 %v4578, 32
        %v4849 = vpop.permute.xlu0 %4848
        %4850 = vrot.lane.b32.xlu0 %v4690, 32
        %v4851 = vpop.permute.xlu0 %4850
        %4852 = vrot.lane.b32.xlu0 %v4802, 32
        %v4853 = vpop.permute.xlu0 %4852
        %4860 = vrot.lane.b32.xlu0 %v4580, 40
        %v4861 = vpop.permute.xlu0 %4860
        %4862 = vrot.lane.b32.xlu0 %v4692, 40
        %v4863 = vpop.permute.xlu0 %4862
        %4864 = vrot.lane.b32.xlu0 %v4804, 40
        %v4865 = vpop.permute.xlu0 %4864
        %4872 = vrot.lane.b32.xlu0 %v4582, 48
        %v4873 = vpop.permute.xlu0 %4872
        %4874 = vrot.lane.b32.xlu0 %v4694, 48
        %v4875 = vpop.permute.xlu0 %4874
        %4876 = vrot.lane.b32.xlu0 %v4806, 48
        %v4877 = vpop.permute.xlu0 %4876
        %4884 = vrot.lane.b32.xlu0 %v4584, 56
        %v4885 = vpop.permute.xlu0 %4884
        %4886 = vrot.lane.b32.xlu0 %v4696, 56
        %v4887 = vpop.permute.xlu0 %4886
        %4888 = vrot.lane.b32.xlu0 %v4808, 56
        %v4889 = vpop.permute.xlu0 %4888
        %v4893 = vsel %vm1617, %v4570, %v4813
        %v4894 = vsel %vm1617, %v4682, %v4815
        %v4895 = vsel %vm1617, %v4794, %v4817
        %v4896 = vsel %vm2617, %v4893, %v4825
        %v4897 = vsel %vm2617, %v4894, %v4827
        %v4898 = vsel %vm2617, %v4895, %v4829
        %v4899 = vsel %vm2621, %v4896, %v4837
        %v4900 = vsel %vm2621, %v4897, %v4839
        %v4901 = vsel %vm2621, %v4898, %v4841
        %v4902 = vsel %vm1108, %v4899, %v4849
        %v4903 = vsel %vm1108, %v4900, %v4851
        %v4904 = vsel %vm1108, %v4901, %v4853
        %v4905 = vsel %vm2628, %v4902, %v4861
        %v4906 = vsel %vm2628, %v4903, %v4863
        %v4907 = vsel %vm2628, %v4904, %v4865
        %v4908 = vsel %vm2632, %v4905, %v4873
        %v4909 = vsel %vm2632, %v4906, %v4875
        %v4910 = vsel %vm2632, %v4907, %v4877
        %v4911 = vsel %vm2636, %v4908, %v4885
        %v4912 = vsel %vm2636, %v4909, %v4887
        %v4913 = vsel %vm2636, %v4910, %v4889
        %4917 = vrot.lane.b32.xlu0 %v4911, 64
        %v4918 = vpop.permute.xlu0 %4917
        %4919 = vrot.lane.b32.xlu0 %v4912, 64
        %v4920 = vpop.permute.xlu0 %4919
        %4921 = vrot.lane.b32.xlu0 %v4913, 64
        %v4922 = vpop.permute.xlu0 %4921
        %v4926 = vsel %vm1124, %v3441, %v4918
        %v4927 = vsel %vm1124, %v3442, %v4920
        %v4928 = vsel %vm1124, %v3443, %v4922
        %s4929 = scalar_lea.vmem %s929, 24
        %4930 = vst [vmem:[%s4929] sm:$0xff] %v4926
        %4931 = vst [vmem:[%s4929 + $0x8] sm:$0xff] %v4927
        %4932 = vst [vmem:[%s4929 + $0x10] sm:$0xff] %v4928
        %v4934 = vsel %vm1108, %v3441, 0
        %v4937 = vsel %vm1108, %v3442, 0
        %v4940 = vsel %vm1108, %v3443, 0
        %4942 = vmatpush.msra.mxu0 0.0
        %4943 = vmatpush.msra.mxu0 0.0
        %4944 = vmatpush.msra.mxu0 0.0
        %4945 = vmatpush.msra.mxu0 0.0
        %4946 = vmatpush.msra.mxu0 0.0
        %4947 = vmatpush.msra.mxu0 0.0
        %4948 = vmatpush.msra.mxu0 0.0
        %4949 = vmatpush.msra.mxu0 0.0
        %4950 = vmatpush.msra.mxu0 0.0
        %4951 = vmatpush.msra.mxu0 0.0
        %4952 = vmatpush.msra.mxu0 0.0
        %4953 = vmatpush.msra.mxu0 0.0
        %4954 = vmatpush.msra.mxu0 %v1014
        %4955 = vmatpush.msra.mxu0 %v1011
        %4956 = vmatpush.msra.mxu0 %v1008
        %4957 = vmatpush.msra.mxu0 %v1005
        %4958 = vmatmul.f32.gmra.mxu0 %v4934
        %v4959 = vpop.f32.mrf.mxu0
        %v4960 = vadd.f32 0.0, %v4959
        %4961 = vmatmul.f32.gmra.mxu0 %v4937
        %v4962 = vpop.f32.mrf.mxu0
        %v4963 = vadd.f32 0.0, %v4962
        %4964 = vmatmul.f32.gmra.mxu0 %v4940
        %v4965 = vpop.f32.mrf.mxu0
        %v4966 = vadd.f32 0.0, %v4965
        %4967 = vdwg.mxu0
        %4968 = vmatpush.msra.mxu0 0.0
        %4969 = vmatpush.msra.mxu0 0.0
        %4970 = vmatpush.msra.mxu0 0.0
        %4971 = vmatpush.msra.mxu0 0.0
        %4972 = vmatpush.msra.mxu0 0.0
        %4973 = vmatpush.msra.mxu0 0.0
        %4974 = vmatpush.msra.mxu0 0.0
        %4975 = vmatpush.msra.mxu0 0.0
        %4976 = vmatpush.msra.mxu0 0.0
        %4977 = vmatpush.msra.mxu0 0.0
        %4978 = vmatpush.msra.mxu0 0.0
        %4979 = vmatpush.msra.mxu0 0.0
        %4980 = vmatpush.msra.mxu0 %v1015
        %4981 = vmatpush.msra.mxu0 %v1012
        %4982 = vmatpush.msra.mxu0 %v1009
        %4983 = vmatpush.msra.mxu0 %v1006
        %4984 = vmatmul.f32.gmra.mxu0 %v4934
        %v4985 = vpop.f32.mrf.mxu0
        %v4986 = vadd.f32 0.0, %v4985
        %4987 = vmatmul.f32.gmra.mxu0 %v4937
        %v4988 = vpop.f32.mrf.mxu0
        %v4989 = vadd.f32 0.0, %v4988
        %4990 = vmatmul.f32.gmra.mxu0 %v4940
        %v4991 = vpop.f32.mrf.mxu0
        %v4992 = vadd.f32 0.0, %v4991
        %4993 = vdwg.mxu0
        %4994 = vmatpush.msra.mxu0 0.0
        %4995 = vmatpush.msra.mxu0 0.0
        %4996 = vmatpush.msra.mxu0 0.0
        %4997 = vmatpush.msra.mxu0 0.0
        %4998 = vmatpush.msra.mxu0 0.0
        %4999 = vmatpush.msra.mxu0 0.0
        %5000 = vmatpush.msra.mxu0 0.0
        %5001 = vmatpush.msra.mxu0 0.0
        %5002 = vmatpush.msra.mxu0 0.0
        %5003 = vmatpush.msra.mxu0 0.0
        %5004 = vmatpush.msra.mxu0 0.0
        %5005 = vmatpush.msra.mxu0 0.0
        %5006 = vmatpush.msra.mxu0 %v1016
        %5007 = vmatpush.msra.mxu0 %v1013
        %5008 = vmatpush.msra.mxu0 %v1010
        %5009 = vmatpush.msra.mxu0 %v1007
        %5010 = vmatmul.f32.gmra.mxu0 %v4934
        %v5011 = vpop.f32.mrf.mxu0
        %v5012 = vadd.f32 0.0, %v5011
        %5013 = vmatmul.f32.gmra.mxu0 %v4937
        %v5014 = vpop.f32.mrf.mxu0
        %v5015 = vadd.f32 0.0, %v5014
        %5016 = vmatmul.f32.gmra.mxu0 %v4940
        %v5017 = vpop.f32.mrf.mxu0
        %v5018 = vadd.f32 0.0, %v5017
        %5019 = vdwg.mxu0
        %v5020 = vsub.f32 %v4960, 0.5
        %v5021 = vsub.f32 %v4986, 0.5
        %v5022 = vsub.f32 %v5012, 0.5
        %v5023 = vsub.f32 %v4963, 0.5
        %v5024 = vsub.f32 %v4989, 0.5
        %v5025 = vsub.f32 %v5015, 0.5
        %v5026 = vsub.f32 %v4966, 0.5
        %v5027 = vsub.f32 %v4992, 0.5
        %v5028 = vsub.f32 %v5018, 0.5
        %v5029 = vsel %vm1108, %v4911, 0
        %v5031 = vsel %vm1108, %v4912, 0
        %v5033 = vsel %vm1108, %v4913, 0
        %5035 = vmatpush.msra.mxu0 0.0
        %5036 = vmatpush.msra.mxu0 0.0
        %5037 = vmatpush.msra.mxu0 0.0
        %5038 = vmatpush.msra.mxu0 0.0
        %5039 = vmatpush.msra.mxu0 0.0
        %5040 = vmatpush.msra.mxu0 0.0
        %5041 = vmatpush.msra.mxu0 0.0
        %5042 = vmatpush.msra.mxu0 0.0
        %5043 = vmatpush.msra.mxu0 0.0
        %5044 = vmatpush.msra.mxu0 0.0
        %5045 = vmatpush.msra.mxu0 0.0
        %5046 = vmatpush.msra.mxu0 0.0
        %5047 = vmatpush.msra.mxu0 %v1026
        %5048 = vmatpush.msra.mxu0 %v1023
        %5049 = vmatpush.msra.mxu0 %v1020
        %5050 = vmatpush.msra.mxu0 %v1017
        %5051 = vmatmul.f32.gmra.mxu0 %v5029
        %v5052 = vpop.f32.mrf.mxu0
        %v5053 = vadd.f32 0.0, %v5052
        %5054 = vmatmul.f32.gmra.mxu0 %v5031
        %v5055 = vpop.f32.mrf.mxu0
        %v5056 = vadd.f32 0.0, %v5055
        %5057 = vmatmul.f32.gmra.mxu0 %v5033
        %v5058 = vpop.f32.mrf.mxu0
        %v5059 = vadd.f32 0.0, %v5058
        %5060 = vdwg.mxu0
        %5061 = vmatpush.msra.mxu0 0.0
        %5062 = vmatpush.msra.mxu0 0.0
        %5063 = vmatpush.msra.mxu0 0.0
        %5064 = vmatpush.msra.mxu0 0.0
        %5065 = vmatpush.msra.mxu0 0.0
        %5066 = vmatpush.msra.mxu0 0.0
        %5067 = vmatpush.msra.mxu0 0.0
        %5068 = vmatpush.msra.mxu0 0.0
        %5069 = vmatpush.msra.mxu0 0.0
        %5070 = vmatpush.msra.mxu0 0.0
        %5071 = vmatpush.msra.mxu0 0.0
        %5072 = vmatpush.msra.mxu0 0.0
        %5073 = vmatpush.msra.mxu0 %v1027
        %5074 = vmatpush.msra.mxu0 %v1024
        %5075 = vmatpush.msra.mxu0 %v1021
        %5076 = vmatpush.msra.mxu0 %v1018
        %5077 = vmatmul.f32.gmra.mxu0 %v5029
        %v5078 = vpop.f32.mrf.mxu0
        %v5079 = vadd.f32 0.0, %v5078
        %5080 = vmatmul.f32.gmra.mxu0 %v5031
        %v5081 = vpop.f32.mrf.mxu0
        %v5082 = vadd.f32 0.0, %v5081
        %5083 = vmatmul.f32.gmra.mxu0 %v5033
        %v5084 = vpop.f32.mrf.mxu0
        %v5085 = vadd.f32 0.0, %v5084
        %5086 = vdwg.mxu0
        %5087 = vmatpush.msra.mxu0 0.0
        %5088 = vmatpush.msra.mxu0 0.0
        %5089 = vmatpush.msra.mxu0 0.0
        %5090 = vmatpush.msra.mxu0 0.0
        %5091 = vmatpush.msra.mxu0 0.0
        %5092 = vmatpush.msra.mxu0 0.0
        %5093 = vmatpush.msra.mxu0 0.0
        %5094 = vmatpush.msra.mxu0 0.0
        %5095 = vmatpush.msra.mxu0 0.0
        %5096 = vmatpush.msra.mxu0 0.0
        %5097 = vmatpush.msra.mxu0 0.0
        %5098 = vmatpush.msra.mxu0 0.0
        %5099 = vmatpush.msra.mxu0 %v1028
        %5100 = vmatpush.msra.mxu0 %v1025
        %5101 = vmatpush.msra.mxu0 %v1022
        %5102 = vmatpush.msra.mxu0 %v1019
        %5103 = vmatmul.f32.gmra.mxu0 %v5029
        %v5104 = vpop.f32.mrf.mxu0
        %v5105 = vadd.f32 0.0, %v5104
        %5106 = vmatmul.f32.gmra.mxu0 %v5031
        %v5107 = vpop.f32.mrf.mxu0
        %v5108 = vadd.f32 0.0, %v5107
        %5109 = vmatmul.f32.gmra.mxu0 %v5033
        %v5110 = vpop.f32.mrf.mxu0
        %v5111 = vadd.f32 0.0, %v5110
        %5112 = vdwg.mxu0
        %v5113 = vsub.f32 %v5020, %v2839
        %v5114 = vsub.f32 %v5021, %v2840
        %v5115 = vsub.f32 %v5022, %v2841
        %v5116 = vsub.f32 %v5023, %v2839
        %v5117 = vsub.f32 %v5024, %v2840
        %v5118 = vsub.f32 %v5025, %v2841
        %v5119 = vsub.f32 %v5026, %v2839
        %v5120 = vsub.f32 %v5027, %v2840
        %v5121 = vsub.f32 %v5028, %v2841
        %v5122 = vand.u32 2147483647, %v5113
        %v5123 = vand.u32 2147483647, %v5114
        %v5124 = vand.u32 2147483647, %v5115
        %v5125 = vand.u32 2147483647, %v5116
        %v5126 = vand.u32 2147483647, %v5117
        %v5127 = vand.u32 2147483647, %v5118
        %v5128 = vand.u32 2147483647, %v5119
        %v5129 = vand.u32 2147483647, %v5120
        %v5130 = vand.u32 2147483647, %v5121
        %v5131 = vsub.f32 1.0, %v5122
        %v5132 = vsub.f32 1.0, %v5123
        %v5133 = vsub.f32 1.0, %v5124
        %v5134 = vsub.f32 1.0, %v5125
        %v5135 = vsub.f32 1.0, %v5126
        %v5136 = vsub.f32 1.0, %v5127
        %v5137 = vsub.f32 1.0, %v5128
        %v5138 = vsub.f32 1.0, %v5129
        %v5139 = vsub.f32 1.0, %v5130
        %v5140 = vmax.f32 %v5131, 0.0
        %v5141 = vmax.f32 %v5132, 0.0
        %v5142 = vmax.f32 %v5133, 0.0
        %v5143 = vmax.f32 %v5134, 0.0
        %v5144 = vmax.f32 %v5135, 0.0
        %v5145 = vmax.f32 %v5136, 0.0
        %v5146 = vmax.f32 %v5137, 0.0
        %v5147 = vmax.f32 %v5138, 0.0
        %v5148 = vmax.f32 %v5139, 0.0
        %v5149 = vmul.f32 %v5053, %v5140
        %v5150 = vmul.f32 %v5079, %v5141
        %v5151 = vmul.f32 %v5105, %v5142
        %v5152 = vmul.f32 %v5056, %v5143
        %v5153 = vmul.f32 %v5082, %v5144
        %v5154 = vmul.f32 %v5108, %v5145
        %v5155 = vmul.f32 %v5059, %v5146
        %v5156 = vmul.f32 %v5085, %v5147
        %v5157 = vmul.f32 %v5111, %v5148
        %5158 = vmatpush.msra.mxu0 %v1045
        %5159 = vmatpush.msra.mxu0 %v1044
        %5160 = vmatpush.msra.mxu0 %v1043
        %5161 = vmatpush.msra.mxu0 %v1042
        %5162 = vmatpush.msra.mxu0 %v1041
        %5163 = vmatpush.msra.mxu0 %v1040
        %5164 = vmatpush.msra.mxu0 %v1039
        %5165 = vmatpush.msra.mxu0 %v1038
        %5166 = vmatpush.msra.mxu0 %v1037
        %5167 = vmatpush.msra.mxu0 %v1036
        %5168 = vmatpush.msra.mxu0 %v1035
        %5169 = vmatpush.msra.mxu0 %v1034
        %5170 = vmatpush.msra.mxu0 %v1033
        %5171 = vmatpush.msra.mxu0 %v1032
        %5172 = vmatpush.msra.mxu0 %v1031
        %5173 = vmatpush.msra.mxu0 %v1030
        %5174 = vmatmul.f32.gmra.mxu0 %v5149
        %v5175 = vpop.f32.mrf.mxu0
        %v5176 = vadd.f32 0.0, %v5175
        %5177 = vmatmul.f32.gmra.mxu0 %v5152
        %v5178 = vpop.f32.mrf.mxu0
        %v5179 = vadd.f32 0.0, %v5178
        %5180 = vmatmul.f32.gmra.mxu0 %v5155
        %v5181 = vpop.f32.mrf.mxu0
        %v5182 = vadd.f32 0.0, %v5181
        %5183 = vdwg.mxu0
        %5184 = vmatpush.msra.mxu0 %v1061
        %5185 = vmatpush.msra.mxu0 %v1060
        %5186 = vmatpush.msra.mxu0 %v1059
        %5187 = vmatpush.msra.mxu0 %v1058
        %5188 = vmatpush.msra.mxu0 %v1057
        %5189 = vmatpush.msra.mxu0 %v1056
        %5190 = vmatpush.msra.mxu0 %v1055
        %5191 = vmatpush.msra.mxu0 %v1054
        %5192 = vmatpush.msra.mxu0 %v1053
        %5193 = vmatpush.msra.mxu0 %v1052
        %5194 = vmatpush.msra.mxu0 %v1051
        %5195 = vmatpush.msra.mxu0 %v1050
        %5196 = vmatpush.msra.mxu0 %v1049
        %5197 = vmatpush.msra.mxu0 %v1048
        %5198 = vmatpush.msra.mxu0 %v1047
        %5199 = vmatpush.msra.mxu0 %v1046
        %5200 = vmatmul.f32.gmra.mxu0 %v5150
        %v5201 = vpop.f32.mrf.mxu0
        %v5202 = vadd.f32 %v5176, %v5201
        %5203 = vmatmul.f32.gmra.mxu0 %v5153
        %v5204 = vpop.f32.mrf.mxu0
        %v5205 = vadd.f32 %v5179, %v5204
        %5206 = vmatmul.f32.gmra.mxu0 %v5156
        %v5207 = vpop.f32.mrf.mxu0
        %v5208 = vadd.f32 %v5182, %v5207
        %5209 = vdwg.mxu0
        %5210 = vmatpush.msra.mxu0 %v1077
        %5211 = vmatpush.msra.mxu0 %v1076
        %5212 = vmatpush.msra.mxu0 %v1075
        %5213 = vmatpush.msra.mxu0 %v1074
        %5214 = vmatpush.msra.mxu0 %v1073
        %5215 = vmatpush.msra.mxu0 %v1072
        %5216 = vmatpush.msra.mxu0 %v1071
        %5217 = vmatpush.msra.mxu0 %v1070
        %5218 = vmatpush.msra.mxu0 %v1069
        %5219 = vmatpush.msra.mxu0 %v1068
        %5220 = vmatpush.msra.mxu0 %v1067
        %5221 = vmatpush.msra.mxu0 %v1066
        %5222 = vmatpush.msra.mxu0 %v1065
        %5223 = vmatpush.msra.mxu0 %v1064
        %5224 = vmatpush.msra.mxu0 %v1063
        %5225 = vmatpush.msra.mxu0 %v1062
        %5226 = vmatmul.f32.gmra.mxu0 %v5151
        %v5227 = vpop.f32.mrf.mxu0
        %v5228 = vadd.f32 %v5202, %v5227
        %5229 = vmatmul.f32.gmra.mxu0 %v5154
        %v5230 = vpop.f32.mrf.mxu0
        %v5231 = vadd.f32 %v5205, %v5230
        %5232 = vmatmul.f32.gmra.mxu0 %v5157
        %v5233 = vpop.f32.mrf.mxu0
        %v5234 = vadd.f32 %v5208, %v5233
        %5235 = vdwg.mxu0
        %s5236 = scalar_lea.vmem %s14, 32
        %v5237 = vld [vmem:[%s5236] sm:$0xff]
        %v5238 = vld [vmem:[%s5236 + $0x8] sm:$0xff]
        %v5239 = vld [vmem:[%s5236 + $0x10] sm:$0xff]
        %v5240 = vld [vmem:[%s5236 + $0x18] sm:$0xff]
        %s5241 = scalar_lea.vmem %s15, 1
        %v5242 = vld [vmem:[%s5241] sm:$0x1]
        %v5244 = vperm.slane %v5242, 0
        %v5247 = vsel %vm1108, %v3368, 0
        %v5250 = vsel %vm1108, %v3369, 0
        %v5253 = vsel %vm1108, %v3370, 0
        %5255 = vmatpush.msra.mxu0 0.0
        %5256 = vmatpush.msra.mxu0 0.0
        %5257 = vmatpush.msra.mxu0 0.0
        %5258 = vmatpush.msra.mxu0 0.0
        %5259 = vmatpush.msra.mxu0 0.0
        %5260 = vmatpush.msra.mxu0 0.0
        %5261 = vmatpush.msra.mxu0 0.0
        %5262 = vmatpush.msra.mxu0 0.0
        %5263 = vmatpush.msra.mxu0 0.0
        %5264 = vmatpush.msra.mxu0 0.0
        %5265 = vmatpush.msra.mxu0 0.0
        %5266 = vmatpush.msra.mxu0 0.0
        %5267 = vmatpush.msra.mxu0 %v5240
        %5268 = vmatpush.msra.mxu0 %v5239
        %5269 = vmatpush.msra.mxu0 %v5238
        %5270 = vmatpush.msra.mxu0 %v5237
        %5271 = vmatmul.f32.gmra.mxu0 %v5247
        %v5272 = vpop.f32.mrf.mxu0
        %v5273 = vadd.f32 %v5244, %v5272
        %5274 = vmatmul.f32.gmra.mxu0 %v5250
        %v5275 = vpop.f32.mrf.mxu0
        %v5276 = vadd.f32 %v5244, %v5275
        %5277 = vmatmul.f32.gmra.mxu0 %v5253
        %v5278 = vpop.f32.mrf.mxu0
        %v5279 = vadd.f32 %v5244, %v5278
        %5280 = vdwg.mxu0
        %v5281 = vmul.f32 %v5273, %v1078
        %v5282 = vmul.f32 %v5276, %v1079
        %v5283 = vmul.f32 %v5279, %v1080
        %v5284 = vmul.f32 %v5273, %v1081
        %v5285 = vmul.f32 %v5276, %v1082
        %v5286 = vmul.f32 %v5279, %v1083
        %v5287 = vmul.f32 %v5273, %v1084
        %v5288 = vmul.f32 %v5276, %v1085
        %v5289 = vmul.f32 %v5279, %v1086
        %v5290 = vmul.f32 %v5273, %v1087
        %v5291 = vmul.f32 %v5276, %v1088
        %v5292 = vmul.f32 %v5279, %v1089
        %v5294 = vsel %vm3023, %v5228, 0
        %v5297 = vsel %vm3023, %v5231, 0
        %v5300 = vsel %vm3023, %v5234, 0
        %5302 = vmatpush.msra.mxu0 0.0
        %5303 = vmatpush.msra.mxu0 0.0
        %5304 = vmatpush.msra.mxu0 0.0
        %5305 = vmatpush.msra.mxu0 0.0
        %5306 = vmatpush.msra.mxu0 %v5292
        %5307 = vmatpush.msra.mxu0 %v5291
        %5308 = vmatpush.msra.mxu0 %v5290
        %5309 = vmatpush.msra.mxu0 %v5289
        %5310 = vmatpush.msra.mxu0 %v5288
        %5311 = vmatpush.msra.mxu0 %v5287
        %5312 = vmatpush.msra.mxu0 %v5286
        %5313 = vmatpush.msra.mxu0 %v5285
        %5314 = vmatpush.msra.mxu0 %v5284
        %5315 = vmatpush.msra.mxu0 %v5283
        %5316 = vmatpush.msra.mxu0 %v5282
        %5317 = vmatpush.msra.mxu0 %v5281
        %5318 = vmatmul.f32.gmra.mxu0 %v5294
        %v5319 = vpop.f32.mrf.mxu0
        %v5320 = vadd.f32 0.0, %v5319
        %5321 = vmatmul.f32.gmra.mxu0 %v5297
        %v5322 = vpop.f32.mrf.mxu0
        %v5323 = vadd.f32 0.0, %v5322
        %5324 = vmatmul.f32.gmra.mxu0 %v5300
        %v5325 = vpop.f32.mrf.mxu0
        %v5326 = vadd.f32 0.0, %v5325
        %5327 = vdwg.mxu0
        %s5328 = scalar_lea.vmem %s16, 32
        %v5329 = vld [vmem:[%s5328] sm:$0xff]
        %v5330 = vld [vmem:[%s5328 + $0x8] sm:$0xff]
        %v5331 = vld [vmem:[%s5328 + $0x10] sm:$0xff]
        %v5332 = vld [vmem:[%s5328 + $0x18] sm:$0xff]
        %s5333 = scalar_lea.vmem %s17, 1
        %v5334 = vld [vmem:[%s5333] sm:$0x1]
        %v5336 = vperm.slane %v5334, 0
        %v5339 = vsel %vm1108, %v5320, 0
        %v5342 = vsel %vm1108, %v5323, 0
        %v5345 = vsel %vm1108, %v5326, 0
        %5347 = vmatpush.msra.mxu0 0.0
        %5348 = vmatpush.msra.mxu0 0.0
        %5349 = vmatpush.msra.mxu0 0.0
        %5350 = vmatpush.msra.mxu0 0.0
        %5351 = vmatpush.msra.mxu0 0.0
        %5352 = vmatpush.msra.mxu0 0.0
        %5353 = vmatpush.msra.mxu0 0.0
        %5354 = vmatpush.msra.mxu0 0.0
        %5355 = vmatpush.msra.mxu0 0.0
        %5356 = vmatpush.msra.mxu0 0.0
        %5357 = vmatpush.msra.mxu0 0.0
        %5358 = vmatpush.msra.mxu0 0.0
        %5359 = vmatpush.msra.mxu0 %v5332
        %5360 = vmatpush.msra.mxu0 %v5331
        %5361 = vmatpush.msra.mxu0 %v5330
        %5362 = vmatpush.msra.mxu0 %v5329
        %5363 = vmatmul.f32.gmra.mxu0 %v5339
        %v5364 = vpop.f32.mrf.mxu0
        %v5365 = vadd.f32 %v5336, %v5364
        %5366 = vmatmul.f32.gmra.mxu0 %v5342
        %v5367 = vpop.f32.mrf.mxu0
        %v5368 = vadd.f32 %v5336, %v5367
        %5369 = vmatmul.f32.gmra.mxu0 %v5345
        %v5370 = vpop.f32.mrf.mxu0
        %v5371 = vadd.f32 %v5336, %v5370
        %5372 = vdwg.mxu0
        %v5373 = vadd.f32 %v3368, %v5365
        %v5374 = vadd.f32 %v3369, %v5368
        %v5375 = vadd.f32 %v3370, %v5371
        %s5376 = scalar_lea.vmem %s18, 1
        %v5377 = vld [vmem:[%s5376] sm:$0x1]
        %s5378 = scalar_lea.vmem %s19, 1
        %v5379 = vld [vmem:[%s5378] sm:$0x1]
        %v5380 = vsel %vm1108, %v5373, 0.0
        %5381 = vadd.xlane.f32.xlu0 %v5380
        %v5382 = vpop.xlane.xlu0 %5381
        %v5383 = vsel %vm1108, %v5374, 0.0
        %5384 = vadd.xlane.f32.xlu0 %v5383
        %v5385 = vpop.xlane.xlu0 %5384
        %v5386 = vsel %vm1108, %v5375, 0.0
        %5387 = vadd.xlane.f32.xlu0 %v5386
        %v5388 = vpop.xlane.xlu0 %5387
        %v5389 = vmul.f32 %v5382, %v3122
        %v5390 = vmul.f32 %v5385, %v3122
        %v5391 = vmul.f32 %v5388, %v3122
        %v5392 = vsub.f32 %v5373, %v5389
        %v5393 = vsub.f32 %v5374, %v5390
        %v5394 = vsub.f32 %v5375, %v5391
        %v5395 = vmul.f32 %v5392, %v5392
        %v5396 = vmul.f32 %v5393, %v5393
        %v5397 = vmul.f32 %v5394, %v5394
        %v5398 = vsel %vm1108, %v5395, 0.0
        %5399 = vadd.xlane.f32.xlu0 %v5398
        %v5400 = vpop.xlane.xlu0 %5399
        %v5401 = vsel %vm1108, %v5396, 0.0
        %5402 = vadd.xlane.f32.xlu0 %v5401
        %v5403 = vpop.xlane.xlu0 %5402
        %v5404 = vsel %vm1108, %v5397, 0.0
        %5405 = vadd.xlane.f32.xlu0 %v5404
        %v5406 = vpop.xlane.xlu0 %5405
        %v5407 = vmul.f32 %v5400, %v3122
        %v5408 = vmul.f32 %v5403, %v3122
        %v5409 = vmul.f32 %v5406, %v3122
        %v5410 = vadd.f32 %v5407, 1e-05
        %v5411 = vadd.f32 %v5408, 1e-05
        %v5412 = vadd.f32 %v5409, 1e-05
        %v5413 = vrsqrt.pop %v5410
        %v5414 = vmul.f32 %v5413, %v5410
        %v5415 = vmul.f32 %v5414, %v5413
        %v5416 = vmul.f32 0.5, %v5415
        %v5417 = vsub.f32 1.5, %v5416
        %v5418 = vmul.f32 %v5413, %v5417
        %vm5419 = vweird.f32 %v5410
        %vm5420 = vweird.f32 %v5413
        %vm5421 = vmor %vm5419, %vm5420
        %v5422 = vsel %vm5421, %v5413, %v5418
        %v5423 = vrsqrt.pop %v5411
        %v5424 = vmul.f32 %v5423, %v5411
        %v5425 = vmul.f32 %v5424, %v5423
        %v5426 = vmul.f32 0.5, %v5425
        %v5427 = vsub.f32 1.5, %v5426
        %v5428 = vmul.f32 %v5423, %v5427
        %vm5429 = vweird.f32 %v5411
        %vm5430 = vweird.f32 %v5423
        %vm5431 = vmor %vm5429, %vm5430
        %v5432 = vsel %vm5431, %v5423, %v5428
        %v5433 = vrsqrt.pop %v5412
        %v5434 = vmul.f32 %v5433, %v5412
        %v5435 = vmul.f32 %v5434, %v5433
        %v5436 = vmul.f32 0.5, %v5435
        %v5437 = vsub.f32 1.5, %v5436
        %v5438 = vmul.f32 %v5433, %v5437
        %vm5439 = vweird.f32 %v5412
        %vm5440 = vweird.f32 %v5433
        %vm5441 = vmor %vm5439, %vm5440
        %v5442 = vsel %vm5441, %v5433, %v5438
        %v5443 = vmul.f32 %v5392, %v5422
        %v5444 = vmul.f32 %v5393, %v5432
        %v5445 = vmul.f32 %v5394, %v5442
        %v5447 = vperm.slane %v5377, 0
        %v5449 = vmul.f32 %v5443, %v5447
        %v5450 = vmul.f32 %v5444, %v5447
        %v5451 = vmul.f32 %v5445, %v5447
        %v5453 = vperm.slane %v5379, 0
        %v5455 = vadd.f32 %v5449, %v5453
        %v5456 = vadd.f32 %v5450, %v5453
        %v5457 = vadd.f32 %v5451, %v5453
        %s5458 = scalar_lea.vmem %s20, 32
        %v5459 = vld [vmem:[%s5458] sm:$0xff]
        %v5460 = vld [vmem:[%s5458 + $0x8] sm:$0xff]
        %v5461 = vld [vmem:[%s5458 + $0x10] sm:$0xff]
        %v5462 = vld [vmem:[%s5458 + $0x18] sm:$0xff]
        %s5463 = scalar_lea.vmem %s21, 1
        %v5464 = vld [vmem:[%s5463] sm:$0x1]
        %v5466 = vperm.slane %v5464, 0
        %v5469 = vsel %vm1108, %v5455, 0
        %v5472 = vsel %vm1108, %v5456, 0
        %v5475 = vsel %vm1108, %v5457, 0
        %5477 = vmatpush.msra.mxu0 0.0
        %5478 = vmatpush.msra.mxu0 0.0
        %5479 = vmatpush.msra.mxu0 0.0
        %5480 = vmatpush.msra.mxu0 0.0
        %5481 = vmatpush.msra.mxu0 0.0
        %5482 = vmatpush.msra.mxu0 0.0
        %5483 = vmatpush.msra.mxu0 0.0
        %5484 = vmatpush.msra.mxu0 0.0
        %5485 = vmatpush.msra.mxu0 0.0
        %5486 = vmatpush.msra.mxu0 0.0
        %5487 = vmatpush.msra.mxu0 0.0
        %5488 = vmatpush.msra.mxu0 0.0
        %5489 = vmatpush.msra.mxu0 %v5462
        %5490 = vmatpush.msra.mxu0 %v5461
        %5491 = vmatpush.msra.mxu0 %v5460
        %5492 = vmatpush.msra.mxu0 %v5459
        %5493 = vmatmul.f32.gmra.mxu0 %v5469
        %v5494 = vpop.f32.mrf.mxu0
        %v5495 = vadd.f32 %v5466, %v5494
        %5496 = vmatmul.f32.gmra.mxu0 %v5472
        %v5497 = vpop.f32.mrf.mxu0
        %v5498 = vadd.f32 %v5466, %v5497
        %5499 = vmatmul.f32.gmra.mxu0 %v5475
        %v5500 = vpop.f32.mrf.mxu0
        %v5501 = vadd.f32 %v5466, %v5500
        %5502 = vdwg.mxu0
        %v5503 = vmax.f32 %v5495, 0.0
        %v5504 = vmax.f32 %v5498, 0.0
        %v5505 = vmax.f32 %v5501, 0.0
        %s5506 = scalar_lea.vmem %s22, 64
        %v5507 = vld [vmem:[%s5506] sm:$0xff]
        %v5508 = vld [vmem:[%s5506 + $0x8] sm:$0xff]
        %v5509 = vld [vmem:[%s5506 + $0x10] sm:$0xff]
        %v5510 = vld [vmem:[%s5506 + $0x18] sm:$0xff]
        %v5511 = vld [vmem:[%s5506 + $0x20] sm:$0xff]
        %v5512 = vld [vmem:[%s5506 + $0x28] sm:$0xff]
        %v5513 = vld [vmem:[%s5506 + $0x30] sm:$0xff]
        %v5514 = vld [vmem:[%s5506 + $0x38] sm:$0xff]
        %v5516 = vsel %vm1124, %v5503, 0
        %v5519 = vsel %vm1124, %v5504, 0
        %v5522 = vsel %vm1124, %v5505, 0
        %5524 = vmatpush.msra.mxu0 0.0
        %5525 = vmatpush.msra.mxu0 0.0
        %5526 = vmatpush.msra.mxu0 0.0
        %5527 = vmatpush.msra.mxu0 0.0
        %5528 = vmatpush.msra.mxu0 0.0
        %5529 = vmatpush.msra.mxu0 0.0
        %5530 = vmatpush.msra.mxu0 0.0
        %5531 = vmatpush.msra.mxu0 0.0
        %5532 = vmatpush.msra.mxu0 %v5514
        %5533 = vmatpush.msra.mxu0 %v5513
        %5534 = vmatpush.msra.mxu0 %v5512
        %5535 = vmatpush.msra.mxu0 %v5511
        %5536 = vmatpush.msra.mxu0 %v5510
        %5537 = vmatpush.msra.mxu0 %v5509
        %5538 = vmatpush.msra.mxu0 %v5508
        %5539 = vmatpush.msra.mxu0 %v5507
        %5540 = vmatmul.f32.gmra.mxu0 %v5516
        %v5541 = vpop.f32.mrf.mxu0
        %v5542 = vadd.f32 0.0, %v5541
        %5543 = vmatmul.f32.gmra.mxu0 %v5519
        %v5544 = vpop.f32.mrf.mxu0
        %v5545 = vadd.f32 0.0, %v5544
        %5546 = vmatmul.f32.gmra.mxu0 %v5522
        %v5547 = vpop.f32.mrf.mxu0
        %v5548 = vadd.f32 0.0, %v5547
        %5549 = vdwg.mxu0
        %v5550 = vadd.f32 %v5455, %v5542
        %v5551 = vadd.f32 %v5456, %v5545
        %v5552 = vadd.f32 %v5457, %v5548
        %s5553 = scalar_lea.vmem %s23, 1
        %v5554 = vld [vmem:[%s5553] sm:$0x1]
        %v5556 = vperm.slane %v5554, 0
        %v5558 = vadd.f32 %v5550, %v5556
        %v5559 = vadd.f32 %v5551, %v5556
        %v5560 = vadd.f32 %v5552, %v5556
        %s5561 = scalar_lea.vmem %s24, 1
        %v5562 = vld [vmem:[%s5561] sm:$0x1]
        %s5563 = scalar_lea.vmem %s25, 1
        %v5564 = vld [vmem:[%s5563] sm:$0x1]
        %v5565 = vsel %vm1108, %v5558, 0.0
        %5566 = vadd.xlane.f32.xlu0 %v5565
        %v5567 = vpop.xlane.xlu0 %5566
        %v5568 = vsel %vm1108, %v5559, 0.0
        %5569 = vadd.xlane.f32.xlu0 %v5568
        %v5570 = vpop.xlane.xlu0 %5569
        %v5571 = vsel %vm1108, %v5560, 0.0
        %5572 = vadd.xlane.f32.xlu0 %v5571
        %v5573 = vpop.xlane.xlu0 %5572
        %v5574 = vmul.f32 %v5567, %v3122
        %v5575 = vmul.f32 %v5570, %v3122
        %v5576 = vmul.f32 %v5573, %v3122
        %v5577 = vsub.f32 %v5558, %v5574
        %v5578 = vsub.f32 %v5559, %v5575
        %v5579 = vsub.f32 %v5560, %v5576
        %v5580 = vmul.f32 %v5577, %v5577
        %v5581 = vmul.f32 %v5578, %v5578
        %v5582 = vmul.f32 %v5579, %v5579
        %v5583 = vsel %vm1108, %v5580, 0.0
        %5584 = vadd.xlane.f32.xlu0 %v5583
        %v5585 = vpop.xlane.xlu0 %5584
        %v5586 = vsel %vm1108, %v5581, 0.0
        %5587 = vadd.xlane.f32.xlu0 %v5586
        %v5588 = vpop.xlane.xlu0 %5587
        %v5589 = vsel %vm1108, %v5582, 0.0
        %5590 = vadd.xlane.f32.xlu0 %v5589
        %v5591 = vpop.xlane.xlu0 %5590
        %v5592 = vmul.f32 %v5585, %v3122
        %v5593 = vmul.f32 %v5588, %v3122
        %v5594 = vmul.f32 %v5591, %v3122
        %v5595 = vadd.f32 %v5592, 1e-05
        %v5596 = vadd.f32 %v5593, 1e-05
        %v5597 = vadd.f32 %v5594, 1e-05
        %v5598 = vrsqrt.pop %v5595
        %v5599 = vmul.f32 %v5598, %v5595
        %v5600 = vmul.f32 %v5599, %v5598
        %v5601 = vmul.f32 0.5, %v5600
        %v5602 = vsub.f32 1.5, %v5601
        %v5603 = vmul.f32 %v5598, %v5602
        %vm5604 = vweird.f32 %v5595
        %vm5605 = vweird.f32 %v5598
        %vm5606 = vmor %vm5604, %vm5605
        %v5607 = vsel %vm5606, %v5598, %v5603
        %v5608 = vrsqrt.pop %v5596
        %v5609 = vmul.f32 %v5608, %v5596
        %v5610 = vmul.f32 %v5609, %v5608
        %v5611 = vmul.f32 0.5, %v5610
        %v5612 = vsub.f32 1.5, %v5611
        %v5613 = vmul.f32 %v5608, %v5612
        %vm5614 = vweird.f32 %v5596
        %vm5615 = vweird.f32 %v5608
        %vm5616 = vmor %vm5614, %vm5615
        %v5617 = vsel %vm5616, %v5608, %v5613
        %v5618 = vrsqrt.pop %v5597
        %v5619 = vmul.f32 %v5618, %v5597
        %v5620 = vmul.f32 %v5619, %v5618
        %v5621 = vmul.f32 0.5, %v5620
        %v5622 = vsub.f32 1.5, %v5621
        %v5623 = vmul.f32 %v5618, %v5622
        %vm5624 = vweird.f32 %v5597
        %vm5625 = vweird.f32 %v5618
        %vm5626 = vmor %vm5624, %vm5625
        %v5627 = vsel %vm5626, %v5618, %v5623
        %v5628 = vmul.f32 %v5577, %v5607
        %v5629 = vmul.f32 %v5578, %v5617
        %v5630 = vmul.f32 %v5579, %v5627
        %v5632 = vperm.slane %v5562, 0
        %v5634 = vmul.f32 %v5628, %v5632
        %v5635 = vmul.f32 %v5629, %v5632
        %v5636 = vmul.f32 %v5630, %v5632
        %v5638 = vperm.slane %v5564, 0
        %v5640 = vadd.f32 %v5634, %v5638
        %v5641 = vadd.f32 %v5635, %v5638
        %v5642 = vadd.f32 %v5636, %v5638
        %5643 = vst.msk [vmem:[%s887] sm:$0xff] %vm1108, %v5640
        %5644 = vst.msk [vmem:[%s887 + $0x8] sm:$0xff] %vm1108, %v5641
        %5645 = vst.msk [vmem:[%s887 + $0x10] sm:$0xff] %vm1108, %v5642
        %s5646 = sand.u32 %s626, 1
        %s5647 = scalar_lea.sflag [#allocation3], %s5646
        %s5648 = sand.u32 %s626, 1
        %s5649 = smul.addr %s5648, 24
        %s5650 = scalar_lea.vmem [#allocation2], %s5649
        %p5651 = scmp.lt.s32.totalorder %s42, 1
        %s5652 = scalar_select %p5651, %s42, 1
        %s5653 = smul.addr %s5652, 6
        %s5654 = smul.addr %s5653, 8
        %s5655 = scalar_lea.vmem %s27, %s5654
        // Predicated region
        $region125: #{_encoder_forward_fused.1} parent=123 // pred_check
          %p5656 = pneg %p636
        $region126: #{_encoder_forward_fused.1} parent=123 // pred_check_branch
          %5658 = sbr.rel (%p5656) target = $region128
        $region127: #{_encoder_forward_fused.1} parent=123 // pred_region
          %5660 = vsyncadd %s5647, 0
          %s5661 = smul.addr %s42, 3
          %s5662 = smul.addr %s5661, 8
          %s5663 = scalar_lea.hbm %s26, %s5662
          %s5664 = sshll.u32 %s5650, 4
          %s5665 = int_to_ptr.vmem [resolvable:$true] %s5664
          %s5666 = sshll.u32 %s5663, 4
          %s5667 = int_to_ptr.hbm [resolvable:$true] %s5666
          %5672 = dma.vmem_to_hbm [thread:$0]  %s5665, 384, %s5667, %s5647, 128, 128, 8
        $region128: #{_encoder_forward_fused.1} parent=123 // pred_fallthru
          _
        // Predicated region
        $region129: #{_encoder_forward_fused.1} parent=123 // pred_check
          %p5673 = pneg %p662
        $region130: #{_encoder_forward_fused.1} parent=123 // pred_check_branch
          %5675 = sbr.rel (%p5673) target = $region132
        $region131: #{_encoder_forward_fused.1} parent=123 // pred_region
          _
        $region132: #{_encoder_forward_fused.1} parent=123 // pred_fallthru
          _
      $region124: #{_encoder_forward_fused.1} parent=5 // pred_fallthru
        _
      %p5676 = scmp.le.s32.totalorder 2, %s37
      // Predicated region
      $region133: #{_encoder_forward_fused.1} parent=5 // pred_check
        %p5677 = pneg %p5676
      $region134: #{_encoder_forward_fused.1} parent=5 // pred_check_branch
        %5679 = sbr.rel (%p5677) target = $region136
      $region135: #{_encoder_forward_fused.1} parent=5 // pred_region
        %s5680 = ssub.s32 %s37, 2
        // Predicated region
        $region137: #{_encoder_forward_fused.1} parent=135 // pred_check
          %p5681 = pneg %p642
        $region138: #{_encoder_forward_fused.1} parent=135 // pred_check_branch
          %5683 = sbr.rel (%p5681) target = $region140
        $region139: #{_encoder_forward_fused.1} parent=135 // pred_region
          %s5684 = sand.u32 %s627, 1
          %s5685 = scalar_lea.sflag [#allocation3], %s5684
          %s5686 = sand.u32 %s627, 1
          %s5687 = smul.addr %s5686, 24
          %s5688 = scalar_lea.vmem [#allocation2], %s5687
          %5690 = dma.done %s5685, 384
        $region140: #{_encoder_forward_fused.1} parent=135 // pred_fallthru
          _
        // Predicated region
        $region141: #{_encoder_forward_fused.1} parent=135 // pred_check
          %p5691 = pneg %p668
        $region142: #{_encoder_forward_fused.1} parent=135 // pred_check_branch
          %5693 = sbr.rel (%p5691) target = $region144
        $region143: #{_encoder_forward_fused.1} parent=135 // pred_region
          %p5694 = scmp.lt.s32.totalorder %s43, 1
          %s5695 = scalar_select %p5694, %s43, 1
          %s5696 = smul.addr %s5695, 6
          %s5697 = smul.addr %s5696, 8
          %s5698 = scalar_lea.vmem %s27, %s5697
        $region144: #{_encoder_forward_fused.1} parent=135 // pred_fallthru
          _
      $region136: #{_encoder_forward_fused.1} parent=5 // pred_fallthru
        _
    $region6: #{_encoder_forward_fused.1} parent=1 // loop_footer
      %s41 = sadd.s32 1, %s37
    $region7: #{_encoder_forward_fused.1} parent=1 // loop_footer_branch
      %36 = sbr.rel target = $region3
    $region8: #{_encoder_forward_fused.1} parent=1 // loop_exit
      _
    %5699 = vsyncpa [#allocation3], 1
    %s5700 = scalar_lea.sflag [#allocation3], 1
    %5701 = vsyncpa %s5700, 1

</llo_original>
